<compile_context>
chip_gen: v5e
topology: v5e:2x2
jax: 0.10.0
libtpu: 0.0.40
codegen_flags: <defaults>
</compile_context>

<pallas_src>
import functools

import jax
import jax.numpy as jnp
from jax.experimental import pallas as pl
from jax.experimental.pallas import tpu as pltpu

EPS = 1e-5
K_PAD = 896      # 784 padded to 7*128
N_OUT = 10
N_OUT_PAD = 128  # lane-dense logits / output
NEG_BIG = -1e30  # padded-logit bias -> exp() == 0 in f32


def net_f1_kernel(
    x_ref,
    w1_ref, g1_ref, be1_ref,
    w2_ref, g2_ref, be2_ref,
    w3_ref, g3_ref, be3_ref,
    w4_ref, g4_ref, be4_ref,
    w5_ref, g5_ref, be5_ref,
    w6_ref, b6_ref,
    o_ref,
):
    B = x_ref.shape[0]
    inv_b = 1.0 / B

    h = x_ref[...]  # bf16 (B, 896)

    layers = [
        (w1_ref, g1_ref, be1_ref),
        (w2_ref, g2_ref, be2_ref),
        (w3_ref, g3_ref, be3_ref),
        (w4_ref, g4_ref, be4_ref),
        (w5_ref, g5_ref, be5_ref),
    ]
    for w_ref, g_ref, be_ref in layers:
        # bf16 x bf16 -> f32 accumulate on the MXU. The Linear bias is omitted:
        # it is exactly cancelled by the training-mode BatchNorm mean subtraction.
        z = jnp.dot(h, w_ref[...], preferred_element_type=jnp.float32)  # (B, 512) f32

        # Fused BatchNorm1d (training mode, biased variance) + ReLU. Stats in f32.
        mean = jnp.sum(z, axis=0, keepdims=True) * inv_b
        msq = jnp.sum(z * z, axis=0, keepdims=True) * inv_b
        var = msq - mean * mean
        s = g_ref[...] * jax.lax.rsqrt(var + EPS)          # (1, 512)
        shift = be_ref[...] - mean * s                      # (1, 512)
        a = jnp.maximum(z * s + shift, 0.0)

        h = a.astype(jnp.bfloat16)

    # fc6 (lane-padded to 128 outputs) + softmax(dim=1), all in f32.
    logits = jnp.dot(h, w6_ref[...], preferred_element_type=jnp.float32) + b6_ref[...]
    m = jnp.max(logits, axis=1, keepdims=True)
    e = jnp.exp(logits - m)
    denom = jnp.sum(e, axis=1, keepdims=True)
    o_ref[...] = e * pl.reciprocal(denom, approx=False)


def net_f1_forward(x, params):
    """x: (B, 1, 28, 28) float32 NCHW (flattened row-major like x.view(B, -1)).
    Returns softmax probabilities (B, 10) in float32."""
    B = x.shape[0]
    x2d = x.reshape(B, -1)
    assert x2d.shape[1] == 784

    # Pad input features 784 -> 896 with zeros and cast to bf16 for the MXU.
    x_pad = jnp.zeros((B, K_PAD), jnp.bfloat16).at[:, :784].set(x2d.astype(jnp.bfloat16))

    flat_args = [x_pad]

    # fc1: pad K 784 -> 896 (zero rows), bf16 weights; BN params stay f32.
    w1, _b1, g1, be1 = params["fc1"]
    w1_pad = jnp.zeros((K_PAD, 512), jnp.bfloat16).at[:784, :].set(w1.astype(jnp.bfloat16))
    flat_args += [w1_pad, g1, be1]

    # fc2..fc5: bf16 weights, biases dropped (BN-cancelled), BN params f32.
    for i in range(2, 6):
        w, _b, g, be = params[f"fc{i}"]
        flat_args += [w.astype(jnp.bfloat16), g, be]

    # fc6: lane-pad N 10 -> 128. Padded weight columns are zero; padded bias lanes
    # are a huge negative so their softmax contribution is exactly 0.
    w6, b6 = params["fc6"]
    w6_pad = jnp.zeros((512, N_OUT_PAD), jnp.bfloat16).at[:, :N_OUT].set(w6.astype(jnp.bfloat16))
    b6_pad = jnp.full((1, N_OUT_PAD), NEG_BIG, jnp.float32).at[:, :N_OUT].set(b6)
    flat_args += [w6_pad, b6_pad]

    vmem_spec = pl.BlockSpec(memory_space=pltpu.MemorySpace.VMEM)

    flops = 2 * B * (K_PAD * 512 + 4 * 512 * 512 + 512 * N_OUT_PAD)
    bytes_accessed = sum(int(a.size) * a.dtype.itemsize for a in flat_args) + B * N_OUT_PAD * 4
    cost = pl.CostEstimate(
        flops=flops,
        transcendentals=B * N_OUT_PAD + 5 * 512,   # exp + rsqrt
        bytes_accessed=bytes_accessed,
    )

    out = pl.pallas_call(
        net_f1_kernel,
        out_shape=jax.ShapeDtypeStruct((B, N_OUT_PAD), jnp.float32),
        in_specs=[vmem_spec] * len(flat_args),
        out_specs=vmem_spec,
        compiler_params=pltpu.CompilerParams(vmem_limit_bytes=32 << 20),
        cost_estimate=cost,
    )(*flat_args)

    return out[:, :N_OUT]


def init_params(key):
    """Deterministic synthetic parameters with the shapes from Net_F1.__init__."""
    dims = [(784, 512), (512, 512), (512, 512), (512, 512), (512, 512)]
    params = {}
    keys = jax.random.split(key, 32)
    k = 0
    for i, (din, dout) in enumerate(dims, start=1):
        scale = 1.0 / jnp.sqrt(jnp.float32(din))
        w = jax.random.uniform(keys[k], (din, dout), jnp.float32, -scale, scale); k += 1
        b = jax.random.uniform(keys[k], (1, dout), jnp.float32, -scale, scale); k += 1
        gamma = 1.0 + 0.1 * jax.random.normal(keys[k], (1, dout), jnp.float32); k += 1
        beta = 0.1 * jax.random.normal(keys[k], (1, dout), jnp.float32); k += 1
        params[f"fc{i}"] = (w, b, gamma, beta)
    scale = 1.0 / jnp.sqrt(jnp.float32(512))
    w6 = jax.random.uniform(keys[k], (512, 10), jnp.float32, -scale, scale); k += 1
    b6 = jax.random.uniform(keys[k], (1, 10), jnp.float32, -scale, scale); k += 1
    params["fc6"] = (w6, b6)
    return params


def net_f1_reference(x, params):
    """Pure-JAX f32 reference with the exact PyTorch semantics (biases included)."""
    h = x.reshape(x.shape[0], -1)
    for i in range(1, 6):
        w, b, g, be = params[f"fc{i}"]
        h = h @ w + b
        mean = jnp.mean(h, axis=0, keepdims=True)
        var = jnp.mean((h - mean) ** 2, axis=0, keepdims=True)
        h = (h - mean) / jnp.sqrt(var + EPS) * g + be
        h = jnp.maximum(h, 0.0)
    w6, b6 = params["fc6"]
    logits = h @ w6 + b6
    return jax.nn.softmax(logits, axis=1)


if __name__ == "__main__":
    key = jax.random.PRNGKey(0)
    k_x, k_p = jax.random.split(key)

    B = 8
    x = jax.random.normal(k_x, (B, 1, 28, 28), jnp.float32)  # NCHW, flattens to (B, 784)
    params = init_params(k_p)

    fwd = jax.jit(functools.partial(net_f1_forward, params=params))
    out = fwd(x)
    jax.block_until_ready(out)

    ref = net_f1_reference(x, params)
    assert out.shape == (B, 10)
    # exact-reciprocal f32 softmax -> rows sum to 1 tightly
    assert jnp.allclose(jnp.sum(out, axis=1), 1.0, atol=1e-5)
    # bf16 matmul inputs vs f32 reference: loose-but-meaningful tolerance on probabilities
    assert jnp.allclose(out, ref, atol=3e-2)
    assert jnp.all(jnp.argmax(out, axis=1) == jnp.argmax(ref, axis=1))

    print("KERNEL_OK")
</pallas_src>

<mosaic_0001>
module attributes {stable_mosaic.version = 11 : i64} {
  func.func @net_f1_kernel(%arg0: memref<8x896xbf16, #tpu.memory_space<vmem>>, %arg1: memref<896x512xbf16, #tpu.memory_space<vmem>>, %arg2: memref<1x512xf32, #tpu.memory_space<vmem>>, %arg3: memref<1x512xf32, #tpu.memory_space<vmem>>, %arg4: memref<512x512xbf16, #tpu.memory_space<vmem>>, %arg5: memref<1x512xf32, #tpu.memory_space<vmem>>, %arg6: memref<1x512xf32, #tpu.memory_space<vmem>>, %arg7: memref<512x512xbf16, #tpu.memory_space<vmem>>, %arg8: memref<1x512xf32, #tpu.memory_space<vmem>>, %arg9: memref<1x512xf32, #tpu.memory_space<vmem>>, %arg10: memref<512x512xbf16, #tpu.memory_space<vmem>>, %arg11: memref<1x512xf32, #tpu.memory_space<vmem>>, %arg12: memref<1x512xf32, #tpu.memory_space<vmem>>, %arg13: memref<512x512xbf16, #tpu.memory_space<vmem>>, %arg14: memref<1x512xf32, #tpu.memory_space<vmem>>, %arg15: memref<1x512xf32, #tpu.memory_space<vmem>>, %arg16: memref<512x128xbf16, #tpu.memory_space<vmem>>, %arg17: memref<1x128xf32, #tpu.memory_space<vmem>>, %arg18: memref<8x128xf32, #tpu.memory_space<vmem>>) attributes {dimension_semantics = [], scalar_prefetch = 0 : i64, scratch_operands = 0 : i64, tpu.core_type = #tpu.core_type<tc>} {
    %c0 = arith.constant 0 : index
    %c0_0 = arith.constant 0 : index
    %0 = vector.load %arg0[%c0, %c0_0] : memref<8x896xbf16, #tpu.memory_space<vmem>>, vector<8x896xbf16>
    %c0_1 = arith.constant 0 : index
    %c0_2 = arith.constant 0 : index
    %1 = vector.load %arg1[%c0_1, %c0_2] : memref<896x512xbf16, #tpu.memory_space<vmem>>, vector<896x512xbf16>
    %cst = arith.constant dense<0.000000e+00> : vector<8x512xf32>
    %2 = tpu.matmul %0, %1, %cst {dimension_numbers = #tpu.dot_dimension_numbers<[1], [0], [0], [1], [0, 0, 1, 1], [], []>} : vector<8x896xbf16>, vector<896x512xbf16>, vector<8x512xf32> -> vector<8x512xf32>
    %cst_3 = arith.constant dense<0.000000e+00> : vector<512xf32>
    %3 = vector.multi_reduction <add>, %2, %cst_3 [0] : vector<8x512xf32> to vector<512xf32>
    %4 = vector.shape_cast %3 : vector<512xf32> to vector<1x512xf32>
    %cst_4 = arith.constant 1.250000e-01 : f32
    %5 = vector.broadcast %cst_4 : f32 to vector<1x512xf32>
    %6 = arith.mulf %4, %5 : vector<1x512xf32>
    %7 = arith.mulf %2, %2 : vector<8x512xf32>
    %cst_5 = arith.constant dense<0.000000e+00> : vector<512xf32>
    %8 = vector.multi_reduction <add>, %7, %cst_5 [0] : vector<8x512xf32> to vector<512xf32>
    %9 = vector.shape_cast %8 : vector<512xf32> to vector<1x512xf32>
    %cst_6 = arith.constant 1.250000e-01 : f32
    %10 = vector.broadcast %cst_6 : f32 to vector<1x512xf32>
    %11 = arith.mulf %9, %10 : vector<1x512xf32>
    %12 = arith.mulf %6, %6 : vector<1x512xf32>
    %13 = arith.subf %11, %12 : vector<1x512xf32>
    %c0_7 = arith.constant 0 : index
    %c0_8 = arith.constant 0 : index
    %14 = vector.load %arg2[%c0_7, %c0_8] : memref<1x512xf32, #tpu.memory_space<vmem>>, vector<1x512xf32>
    %cst_9 = arith.constant 9.99999974E-6 : f32
    %15 = vector.broadcast %cst_9 : f32 to vector<1x512xf32>
    %16 = arith.addf %13, %15 : vector<1x512xf32>
    %17 = math.rsqrt %16 : vector<1x512xf32>
    %18 = arith.mulf %14, %17 : vector<1x512xf32>
    %c0_10 = arith.constant 0 : index
    %c0_11 = arith.constant 0 : index
    %19 = vector.load %arg3[%c0_10, %c0_11] : memref<1x512xf32, #tpu.memory_space<vmem>>, vector<1x512xf32>
    %20 = arith.mulf %6, %18 : vector<1x512xf32>
    %21 = arith.subf %19, %20 : vector<1x512xf32>
    %22 = vector.broadcast %18 : vector<1x512xf32> to vector<8x512xf32>
    %23 = arith.mulf %2, %22 : vector<8x512xf32>
    %24 = vector.broadcast %21 : vector<1x512xf32> to vector<8x512xf32>
    %25 = arith.addf %23, %24 : vector<8x512xf32>
    %cst_12 = arith.constant 0.000000e+00 : f32
    %26 = vector.broadcast %cst_12 : f32 to vector<8x512xf32>
    %27 = arith.maximumf %25, %26 : vector<8x512xf32>
    %28 = arith.truncf %27 : vector<8x512xf32> to vector<8x512xbf16>
    %c0_13 = arith.constant 0 : index
    %c0_14 = arith.constant 0 : index
    %29 = vector.load %arg4[%c0_13, %c0_14] : memref<512x512xbf16, #tpu.memory_space<vmem>>, vector<512x512xbf16>
    %cst_15 = arith.constant dense<0.000000e+00> : vector<8x512xf32>
    %30 = tpu.matmul %28, %29, %cst_15 {dimension_numbers = #tpu.dot_dimension_numbers<[1], [0], [0], [1], [0, 0, 1, 1], [], []>} : vector<8x512xbf16>, vector<512x512xbf16>, vector<8x512xf32> -> vector<8x512xf32>
    %cst_16 = arith.constant dense<0.000000e+00> : vector<512xf32>
    %31 = vector.multi_reduction <add>, %30, %cst_16 [0] : vector<8x512xf32> to vector<512xf32>
    %32 = vector.shape_cast %31 : vector<512xf32> to vector<1x512xf32>
    %cst_17 = arith.constant 1.250000e-01 : f32
    %33 = vector.broadcast %cst_17 : f32 to vector<1x512xf32>
    %34 = arith.mulf %32, %33 : vector<1x512xf32>
    %35 = arith.mulf %30, %30 : vector<8x512xf32>
    %cst_18 = arith.constant dense<0.000000e+00> : vector<512xf32>
    %36 = vector.multi_reduction <add>, %35, %cst_18 [0] : vector<8x512xf32> to vector<512xf32>
    %37 = vector.shape_cast %36 : vector<512xf32> to vector<1x512xf32>
    %cst_19 = arith.constant 1.250000e-01 : f32
    %38 = vector.broadcast %cst_19 : f32 to vector<1x512xf32>
    %39 = arith.mulf %37, %38 : vector<1x512xf32>
    %40 = arith.mulf %34, %34 : vector<1x512xf32>
    %41 = arith.subf %39, %40 : vector<1x512xf32>
    %c0_20 = arith.constant 0 : index
    %c0_21 = arith.constant 0 : index
    %42 = vector.load %arg5[%c0_20, %c0_21] : memref<1x512xf32, #tpu.memory_space<vmem>>, vector<1x512xf32>
    %cst_22 = arith.constant 9.99999974E-6 : f32
    %43 = vector.broadcast %cst_22 : f32 to vector<1x512xf32>
    %44 = arith.addf %41, %43 : vector<1x512xf32>
    %45 = math.rsqrt %44 : vector<1x512xf32>
    %46 = arith.mulf %42, %45 : vector<1x512xf32>
    %c0_23 = arith.constant 0 : index
    %c0_24 = arith.constant 0 : index
    %47 = vector.load %arg6[%c0_23, %c0_24] : memref<1x512xf32, #tpu.memory_space<vmem>>, vector<1x512xf32>
    %48 = arith.mulf %34, %46 : vector<1x512xf32>
    %49 = arith.subf %47, %48 : vector<1x512xf32>
    %50 = vector.broadcast %46 : vector<1x512xf32> to vector<8x512xf32>
    %51 = arith.mulf %30, %50 : vector<8x512xf32>
    %52 = vector.broadcast %49 : vector<1x512xf32> to vector<8x512xf32>
    %53 = arith.addf %51, %52 : vector<8x512xf32>
    %cst_25 = arith.constant 0.000000e+00 : f32
    %54 = vector.broadcast %cst_25 : f32 to vector<8x512xf32>
    %55 = arith.maximumf %53, %54 : vector<8x512xf32>
    %56 = arith.truncf %55 : vector<8x512xf32> to vector<8x512xbf16>
    %c0_26 = arith.constant 0 : index
    %c0_27 = arith.constant 0 : index
    %57 = vector.load %arg7[%c0_26, %c0_27] : memref<512x512xbf16, #tpu.memory_space<vmem>>, vector<512x512xbf16>
    %cst_28 = arith.constant dense<0.000000e+00> : vector<8x512xf32>
    %58 = tpu.matmul %56, %57, %cst_28 {dimension_numbers = #tpu.dot_dimension_numbers<[1], [0], [0], [1], [0, 0, 1, 1], [], []>} : vector<8x512xbf16>, vector<512x512xbf16>, vector<8x512xf32> -> vector<8x512xf32>
    %cst_29 = arith.constant dense<0.000000e+00> : vector<512xf32>
    %59 = vector.multi_reduction <add>, %58, %cst_29 [0] : vector<8x512xf32> to vector<512xf32>
    %60 = vector.shape_cast %59 : vector<512xf32> to vector<1x512xf32>
    %cst_30 = arith.constant 1.250000e-01 : f32
    %61 = vector.broadcast %cst_30 : f32 to vector<1x512xf32>
    %62 = arith.mulf %60, %61 : vector<1x512xf32>
    %63 = arith.mulf %58, %58 : vector<8x512xf32>
    %cst_31 = arith.constant dense<0.000000e+00> : vector<512xf32>
    %64 = vector.multi_reduction <add>, %63, %cst_31 [0] : vector<8x512xf32> to vector<512xf32>
    %65 = vector.shape_cast %64 : vector<512xf32> to vector<1x512xf32>
    %cst_32 = arith.constant 1.250000e-01 : f32
    %66 = vector.broadcast %cst_32 : f32 to vector<1x512xf32>
    %67 = arith.mulf %65, %66 : vector<1x512xf32>
    %68 = arith.mulf %62, %62 : vector<1x512xf32>
    %69 = arith.subf %67, %68 : vector<1x512xf32>
    %c0_33 = arith.constant 0 : index
    %c0_34 = arith.constant 0 : index
    %70 = vector.load %arg8[%c0_33, %c0_34] : memref<1x512xf32, #tpu.memory_space<vmem>>, vector<1x512xf32>
    %cst_35 = arith.constant 9.99999974E-6 : f32
    %71 = vector.broadcast %cst_35 : f32 to vector<1x512xf32>
    %72 = arith.addf %69, %71 : vector<1x512xf32>
    %73 = math.rsqrt %72 : vector<1x512xf32>
    %74 = arith.mulf %70, %73 : vector<1x512xf32>
    %c0_36 = arith.constant 0 : index
    %c0_37 = arith.constant 0 : index
    %75 = vector.load %arg9[%c0_36, %c0_37] : memref<1x512xf32, #tpu.memory_space<vmem>>, vector<1x512xf32>
    %76 = arith.mulf %62, %74 : vector<1x512xf32>
    %77 = arith.subf %75, %76 : vector<1x512xf32>
    %78 = vector.broadcast %74 : vector<1x512xf32> to vector<8x512xf32>
    %79 = arith.mulf %58, %78 : vector<8x512xf32>
    %80 = vector.broadcast %77 : vector<1x512xf32> to vector<8x512xf32>
    %81 = arith.addf %79, %80 : vector<8x512xf32>
    %cst_38 = arith.constant 0.000000e+00 : f32
    %82 = vector.broadcast %cst_38 : f32 to vector<8x512xf32>
    %83 = arith.maximumf %81, %82 : vector<8x512xf32>
    %84 = arith.truncf %83 : vector<8x512xf32> to vector<8x512xbf16>
    %c0_39 = arith.constant 0 : index
    %c0_40 = arith.constant 0 : index
    %85 = vector.load %arg10[%c0_39, %c0_40] : memref<512x512xbf16, #tpu.memory_space<vmem>>, vector<512x512xbf16>
    %cst_41 = arith.constant dense<0.000000e+00> : vector<8x512xf32>
    %86 = tpu.matmul %84, %85, %cst_41 {dimension_numbers = #tpu.dot_dimension_numbers<[1], [0], [0], [1], [0, 0, 1, 1], [], []>} : vector<8x512xbf16>, vector<512x512xbf16>, vector<8x512xf32> -> vector<8x512xf32>
    %cst_42 = arith.constant dense<0.000000e+00> : vector<512xf32>
    %87 = vector.multi_reduction <add>, %86, %cst_42 [0] : vector<8x512xf32> to vector<512xf32>
    %88 = vector.shape_cast %87 : vector<512xf32> to vector<1x512xf32>
    %cst_43 = arith.constant 1.250000e-01 : f32
    %89 = vector.broadcast %cst_43 : f32 to vector<1x512xf32>
    %90 = arith.mulf %88, %89 : vector<1x512xf32>
    %91 = arith.mulf %86, %86 : vector<8x512xf32>
    %cst_44 = arith.constant dense<0.000000e+00> : vector<512xf32>
    %92 = vector.multi_reduction <add>, %91, %cst_44 [0] : vector<8x512xf32> to vector<512xf32>
    %93 = vector.shape_cast %92 : vector<512xf32> to vector<1x512xf32>
    %cst_45 = arith.constant 1.250000e-01 : f32
    %94 = vector.broadcast %cst_45 : f32 to vector<1x512xf32>
    %95 = arith.mulf %93, %94 : vector<1x512xf32>
    %96 = arith.mulf %90, %90 : vector<1x512xf32>
    %97 = arith.subf %95, %96 : vector<1x512xf32>
    %c0_46 = arith.constant 0 : index
    %c0_47 = arith.constant 0 : index
    %98 = vector.load %arg11[%c0_46, %c0_47] : memref<1x512xf32, #tpu.memory_space<vmem>>, vector<1x512xf32>
    %cst_48 = arith.constant 9.99999974E-6 : f32
    %99 = vector.broadcast %cst_48 : f32 to vector<1x512xf32>
    %100 = arith.addf %97, %99 : vector<1x512xf32>
    %101 = math.rsqrt %100 : vector<1x512xf32>
    %102 = arith.mulf %98, %101 : vector<1x512xf32>
    %c0_49 = arith.constant 0 : index
    %c0_50 = arith.constant 0 : index
    %103 = vector.load %arg12[%c0_49, %c0_50] : memref<1x512xf32, #tpu.memory_space<vmem>>, vector<1x512xf32>
    %104 = arith.mulf %90, %102 : vector<1x512xf32>
    %105 = arith.subf %103, %104 : vector<1x512xf32>
    %106 = vector.broadcast %102 : vector<1x512xf32> to vector<8x512xf32>
    %107 = arith.mulf %86, %106 : vector<8x512xf32>
    %108 = vector.broadcast %105 : vector<1x512xf32> to vector<8x512xf32>
    %109 = arith.addf %107, %108 : vector<8x512xf32>
    %cst_51 = arith.constant 0.000000e+00 : f32
    %110 = vector.broadcast %cst_51 : f32 to vector<8x512xf32>
    %111 = arith.maximumf %109, %110 : vector<8x512xf32>
    %112 = arith.truncf %111 : vector<8x512xf32> to vector<8x512xbf16>
    %c0_52 = arith.constant 0 : index
    %c0_53 = arith.constant 0 : index
    %113 = vector.load %arg13[%c0_52, %c0_53] : memref<512x512xbf16, #tpu.memory_space<vmem>>, vector<512x512xbf16>
    %cst_54 = arith.constant dense<0.000000e+00> : vector<8x512xf32>
    %114 = tpu.matmul %112, %113, %cst_54 {dimension_numbers = #tpu.dot_dimension_numbers<[1], [0], [0], [1], [0, 0, 1, 1], [], []>} : vector<8x512xbf16>, vector<512x512xbf16>, vector<8x512xf32> -> vector<8x512xf32>
    %cst_55 = arith.constant dense<0.000000e+00> : vector<512xf32>
    %115 = vector.multi_reduction <add>, %114, %cst_55 [0] : vector<8x512xf32> to vector<512xf32>
    %116 = vector.shape_cast %115 : vector<512xf32> to vector<1x512xf32>
    %cst_56 = arith.constant 1.250000e-01 : f32
    %117 = vector.broadcast %cst_56 : f32 to vector<1x512xf32>
    %118 = arith.mulf %116, %117 : vector<1x512xf32>
    %119 = arith.mulf %114, %114 : vector<8x512xf32>
    %cst_57 = arith.constant dense<0.000000e+00> : vector<512xf32>
    %120 = vector.multi_reduction <add>, %119, %cst_57 [0] : vector<8x512xf32> to vector<512xf32>
    %121 = vector.shape_cast %120 : vector<512xf32> to vector<1x512xf32>
    %cst_58 = arith.constant 1.250000e-01 : f32
    %122 = vector.broadcast %cst_58 : f32 to vector<1x512xf32>
    %123 = arith.mulf %121, %122 : vector<1x512xf32>
    %124 = arith.mulf %118, %118 : vector<1x512xf32>
    %125 = arith.subf %123, %124 : vector<1x512xf32>
    %c0_59 = arith.constant 0 : index
    %c0_60 = arith.constant 0 : index
    %126 = vector.load %arg14[%c0_59, %c0_60] : memref<1x512xf32, #tpu.memory_space<vmem>>, vector<1x512xf32>
    %cst_61 = arith.constant 9.99999974E-6 : f32
    %127 = vector.broadcast %cst_61 : f32 to vector<1x512xf32>
    %128 = arith.addf %125, %127 : vector<1x512xf32>
    %129 = math.rsqrt %128 : vector<1x512xf32>
    %130 = arith.mulf %126, %129 : vector<1x512xf32>
    %c0_62 = arith.constant 0 : index
    %c0_63 = arith.constant 0 : index
    %131 = vector.load %arg15[%c0_62, %c0_63] : memref<1x512xf32, #tpu.memory_space<vmem>>, vector<1x512xf32>
    %132 = arith.mulf %118, %130 : vector<1x512xf32>
    %133 = arith.subf %131, %132 : vector<1x512xf32>
    %134 = vector.broadcast %130 : vector<1x512xf32> to vector<8x512xf32>
    %135 = arith.mulf %114, %134 : vector<8x512xf32>
    %136 = vector.broadcast %133 : vector<1x512xf32> to vector<8x512xf32>
    %137 = arith.addf %135, %136 : vector<8x512xf32>
    %cst_64 = arith.constant 0.000000e+00 : f32
    %138 = vector.broadcast %cst_64 : f32 to vector<8x512xf32>
    %139 = arith.maximumf %137, %138 : vector<8x512xf32>
    %140 = arith.truncf %139 : vector<8x512xf32> to vector<8x512xbf16>
    %c0_65 = arith.constant 0 : index
    %c0_66 = arith.constant 0 : index
    %141 = vector.load %arg16[%c0_65, %c0_66] : memref<512x128xbf16, #tpu.memory_space<vmem>>, vector<512x128xbf16>
    %cst_67 = arith.constant dense<0.000000e+00> : vector<8x128xf32>
    %142 = tpu.matmul %140, %141, %cst_67 {dimension_numbers = #tpu.dot_dimension_numbers<[1], [0], [0], [1], [0, 0, 1, 1], [], []>} : vector<8x512xbf16>, vector<512x128xbf16>, vector<8x128xf32> -> vector<8x128xf32>
    %c0_68 = arith.constant 0 : index
    %c0_69 = arith.constant 0 : index
    %143 = vector.load %arg17[%c0_68, %c0_69] : memref<1x128xf32, #tpu.memory_space<vmem>>, vector<1x128xf32>
    %144 = vector.broadcast %143 : vector<1x128xf32> to vector<8x128xf32>
    %145 = arith.addf %142, %144 : vector<8x128xf32>
    %cst_70 = arith.constant dense<0xFF800000> : vector<8xf32>
    %146 = vector.multi_reduction <maximumf>, %145, %cst_70 [1] : vector<8x128xf32> to vector<8xf32>
    %147 = vector.shape_cast %146 : vector<8xf32> to vector<8x1xf32>
    %148 = vector.broadcast %147 : vector<8x1xf32> to vector<8x128xf32>
    %149 = arith.subf %145, %148 : vector<8x128xf32>
    %150 = math.exp %149 : vector<8x128xf32>
    %cst_71 = arith.constant dense<0.000000e+00> : vector<8xf32>
    %151 = vector.multi_reduction <add>, %150, %cst_71 [1] : vector<8x128xf32> to vector<8xf32>
    %152 = vector.shape_cast %151 : vector<8xf32> to vector<8x1xf32>
    %153 = tpu.reciprocal %152 : vector<8x1xf32> -> vector<8x1xf32>
    %154 = vector.broadcast %153 : vector<8x1xf32> to vector<8x128xf32>
    %155 = arith.mulf %150, %154 : vector<8x128xf32>
    %c0_72 = arith.constant 0 : index
    %c0_73 = arith.constant 0 : index
    %156 = vector.load %arg18[%c0_72, %c0_73] : memref<8x128xf32, #tpu.memory_space<vmem>>, vector<8x128xf32>
    tpu.vector_store %arg18[%c0_72, %c0_73], %155 {strides = array<i32>} : memref<8x128xf32, #tpu.memory_space<vmem>>, vector<8x128xf32>,
    return
  }
}

</mosaic_0001>

<llo_original>
// kernel: net_f1_forward.1
$region0: #{net_f1_forward.1}
  #allocation0 [shape = 'u32[]', space=smem, size = 0x4, offset = 0x4, fixed_abs, tag = 'smem constant byte address 0x4 - core index']
  #allocation1 [shape = 'u32[72,128]{1,0:T(1,128)}', space=vmem, size = 0x9000, scoped, tag = 'internal scratch']
  %s0 = inlined_call_operand.vmem [shape: bf16[8,896], index: 0, kind: input, shape index: {}]
  %s1 = inlined_call_operand.hbm [shape: bf16[896,512], index: 1, kind: input, shape index: {}]
  %s2 = inlined_call_operand.vmem [shape: f32[1,512], index: 2, kind: input, shape index: {}]
  %s3 = inlined_call_operand.vmem [shape: f32[1,512], index: 3, kind: input, shape index: {}]
  %s4 = inlined_call_operand.vmem [shape: bf16[512,512], index: 4, kind: input, shape index: {}]
  %s5 = inlined_call_operand.vmem [shape: f32[1,512], index: 5, kind: input, shape index: {}]
  %s6 = inlined_call_operand.vmem [shape: f32[1,512], index: 6, kind: input, shape index: {}]
  %s7 = inlined_call_operand.hbm [shape: bf16[512,512], index: 7, kind: input, shape index: {}]
  %s8 = inlined_call_operand.vmem [shape: f32[1,512], index: 8, kind: input, shape index: {}]
  %s9 = inlined_call_operand.vmem [shape: f32[1,512], index: 9, kind: input, shape index: {}]
  %s10 = inlined_call_operand.hbm [shape: bf16[512,512], index: 10, kind: input, shape index: {}]
  %s11 = inlined_call_operand.vmem [shape: f32[1,512], index: 11, kind: input, shape index: {}]
  %s12 = inlined_call_operand.vmem [shape: f32[1,512], index: 12, kind: input, shape index: {}]
  %s13 = inlined_call_operand.hbm [shape: bf16[512,512], index: 13, kind: input, shape index: {}]
  %s14 = inlined_call_operand.vmem [shape: f32[1,512], index: 14, kind: input, shape index: {}]
  %s15 = inlined_call_operand.vmem [shape: f32[1,512], index: 15, kind: input, shape index: {}]
  %s16 = inlined_call_operand.vmem [shape: bf16[512,128], index: 16, kind: input, shape index: {}]
  %s17 = inlined_call_operand.vmem [shape: f32[1,128], index: 17, kind: input, shape index: {}]
  %s18 = inlined_call_operand.hbm [shape: f32[8,128], index: 18, kind: output, shape index: {}]
  %s19 = sld [smem:[#allocation0]]
  $region98: #{net_f1_forward.1} parent=0
    _
  %s21 = ssub.s32 1, %s19
  %s22 = scalar_select 0, %s21, %s19
  $region1: #{net_f1_forward.1} parent=0
    #allocation2 [shape = 'u8[917504]{0}', space=vmem, size = 0xe0000, scoped, tag = 'input window, operand 1, single buffered']
    #allocation3 [shape = 's32[1]{0}', space=sflag, size = 0x4, scoped, tag = 'scoped memory for net_f1_forward.1']
    #allocation4 [shape = 's32[1]{0}', space=sflag, size = 0x4, scoped, tag = 'scoped memory for net_f1_forward.1']
    #allocation5 [shape = 'u8[524288]{0}', space=vmem, size = 0x80000, scoped, tag = 'input window, operand 7, single buffered']
    #allocation6 [shape = 's32[1]{0}', space=sflag, size = 0x4, scoped, tag = 'scoped memory for net_f1_forward.1']
    #allocation7 [shape = 'u8[524288]{0}', space=vmem, size = 0x80000, scoped, tag = 'input window, operand 10, single buffered']
    #allocation8 [shape = 'u8[524288]{0}', space=vmem, size = 0x80000, scoped, tag = 'input window, operand 13, single buffered']
    #allocation9 [shape = 's32[1]{0}', space=sflag, size = 0x4, scoped, tag = 'scoped memory for net_f1_forward.1']
    #allocation10 [shape = 'u8[4096]{0}', space=vmem, size = 0x1000, scoped, tag = 'output window, operand 0, single buffered']
    %23 = vsyncpa [#allocation3], 0
    %24 = vsyncpa [#allocation6], 0
    %25 = vsyncpa [#allocation9], 0
    %26 = vsyncpa [#allocation4], 0
    // Predicated region
    $region2: #{net_f1_forward.1} parent=1 // pred_check
      _
    $region3: #{net_f1_forward.1} parent=1 // pred_check_branch
      %28 = sbr.rel (0) target = $region5
    $region4: #{net_f1_forward.1} parent=1 // pred_region
      _
    $region5: #{net_f1_forward.1} parent=1 // pred_fallthru
      _
    // Predicated region
    $region6: #{net_f1_forward.1} parent=1 // pred_check
      _
    $region7: #{net_f1_forward.1} parent=1 // pred_check_branch
      %30 = sbr.rel (0) target = $region9
    $region8: #{net_f1_forward.1} parent=1 // pred_region
      %32 = vsyncadd [#allocation3], 0
      %s33 = sshll.u32 %s1, 4
      %s34 = int_to_ptr.hbm [resolvable:$true] %s33
      %s35 = sshll.u32 [#allocation2], 4
      %s36 = int_to_ptr.vmem [resolvable:$true] %s35
      %41 = dma.hbm_to_vmem [thread:$0]  %s34, 28672, %s36, [#allocation3], 256, 256, 16
    $region9: #{net_f1_forward.1} parent=1 // pred_fallthru
      _
    // Predicated region
    $region10: #{net_f1_forward.1} parent=1 // pred_check
      _
    $region11: #{net_f1_forward.1} parent=1 // pred_check_branch
      %43 = sbr.rel (0) target = $region13
    $region12: #{net_f1_forward.1} parent=1 // pred_region
      _
    $region13: #{net_f1_forward.1} parent=1 // pred_fallthru
      _
    // Predicated region
    $region14: #{net_f1_forward.1} parent=1 // pred_check
      _
    $region15: #{net_f1_forward.1} parent=1 // pred_check_branch
      %45 = sbr.rel (0) target = $region17
    $region16: #{net_f1_forward.1} parent=1 // pred_region
      _
    $region17: #{net_f1_forward.1} parent=1 // pred_fallthru
      _
    // Predicated region
    $region18: #{net_f1_forward.1} parent=1 // pred_check
      _
    $region19: #{net_f1_forward.1} parent=1 // pred_check_branch
      %47 = sbr.rel (0) target = $region21
    $region20: #{net_f1_forward.1} parent=1 // pred_region
      _
    $region21: #{net_f1_forward.1} parent=1 // pred_fallthru
      _
    // Predicated region
    $region22: #{net_f1_forward.1} parent=1 // pred_check
      _
    $region23: #{net_f1_forward.1} parent=1 // pred_check_branch
      %49 = sbr.rel (0) target = $region25
    $region24: #{net_f1_forward.1} parent=1 // pred_region
      _
    $region25: #{net_f1_forward.1} parent=1 // pred_fallthru
      _
    // Predicated region
    $region26: #{net_f1_forward.1} parent=1 // pred_check
      _
    $region27: #{net_f1_forward.1} parent=1 // pred_check_branch
      %51 = sbr.rel (0) target = $region29
    $region28: #{net_f1_forward.1} parent=1 // pred_region
      _
    $region29: #{net_f1_forward.1} parent=1 // pred_fallthru
      _
    // Predicated region
    $region30: #{net_f1_forward.1} parent=1 // pred_check
      _
    $region31: #{net_f1_forward.1} parent=1 // pred_check_branch
      %53 = sbr.rel (0) target = $region33
    $region32: #{net_f1_forward.1} parent=1 // pred_region
      %55 = vsyncadd [#allocation6], 0
      %s56 = sshll.u32 %s7, 4
      %s57 = int_to_ptr.hbm [resolvable:$true] %s56
      %s58 = sshll.u32 [#allocation5], 4
      %s59 = int_to_ptr.vmem [resolvable:$true] %s58
      %64 = dma.hbm_to_vmem [thread:$0]  %s57, 16384, %s59, [#allocation6], 256, 256, 16
    $region33: #{net_f1_forward.1} parent=1 // pred_fallthru
      _
    // Predicated region
    $region34: #{net_f1_forward.1} parent=1 // pred_check
      _
    $region35: #{net_f1_forward.1} parent=1 // pred_check_branch
      %66 = sbr.rel (0) target = $region37
    $region36: #{net_f1_forward.1} parent=1 // pred_region
      _
    $region37: #{net_f1_forward.1} parent=1 // pred_fallthru
      _
    // Predicated region
    $region38: #{net_f1_forward.1} parent=1 // pred_check
      _
    $region39: #{net_f1_forward.1} parent=1 // pred_check_branch
      %68 = sbr.rel (0) target = $region41
    $region40: #{net_f1_forward.1} parent=1 // pred_region
      _
    $region41: #{net_f1_forward.1} parent=1 // pred_fallthru
      _
    // Predicated region
    $region42: #{net_f1_forward.1} parent=1 // pred_check
      _
    $region43: #{net_f1_forward.1} parent=1 // pred_check_branch
      %70 = sbr.rel (0) target = $region45
    $region44: #{net_f1_forward.1} parent=1 // pred_region
      %72 = vsyncadd [#allocation6], 0
      %s73 = sshll.u32 %s10, 4
      %s74 = int_to_ptr.hbm [resolvable:$true] %s73
      %s75 = sshll.u32 [#allocation7], 4
      %s76 = int_to_ptr.vmem [resolvable:$true] %s75
      %81 = dma.hbm_to_vmem [thread:$0]  %s74, 16384, %s76, [#allocation6], 256, 256, 16
    $region45: #{net_f1_forward.1} parent=1 // pred_fallthru
      _
    // Predicated region
    $region46: #{net_f1_forward.1} parent=1 // pred_check
      _
    $region47: #{net_f1_forward.1} parent=1 // pred_check_branch
      %83 = sbr.rel (0) target = $region49
    $region48: #{net_f1_forward.1} parent=1 // pred_region
      _
    $region49: #{net_f1_forward.1} parent=1 // pred_fallthru
      _
    // Predicated region
    $region50: #{net_f1_forward.1} parent=1 // pred_check
      _
    $region51: #{net_f1_forward.1} parent=1 // pred_check_branch
      %85 = sbr.rel (0) target = $region53
    $region52: #{net_f1_forward.1} parent=1 // pred_region
      _
    $region53: #{net_f1_forward.1} parent=1 // pred_fallthru
      _
    // Predicated region
    $region54: #{net_f1_forward.1} parent=1 // pred_check
      _
    $region55: #{net_f1_forward.1} parent=1 // pred_check_branch
      %87 = sbr.rel (0) target = $region57
    $region56: #{net_f1_forward.1} parent=1 // pred_region
      %89 = vsyncadd [#allocation9], 0
      %s90 = sshll.u32 %s13, 4
      %s91 = int_to_ptr.hbm [resolvable:$true] %s90
      %s92 = sshll.u32 [#allocation8], 4
      %s93 = int_to_ptr.vmem [resolvable:$true] %s92
      %98 = dma.hbm_to_vmem [thread:$0]  %s91, 16384, %s93, [#allocation9], 256, 256, 16
    $region57: #{net_f1_forward.1} parent=1 // pred_fallthru
      _
    // Predicated region
    $region58: #{net_f1_forward.1} parent=1 // pred_check
      _
    $region59: #{net_f1_forward.1} parent=1 // pred_check_branch
      %100 = sbr.rel (0) target = $region61
    $region60: #{net_f1_forward.1} parent=1 // pred_region
      _
    $region61: #{net_f1_forward.1} parent=1 // pred_fallthru
      _
    // Predicated region
    $region62: #{net_f1_forward.1} parent=1 // pred_check
      _
    $region63: #{net_f1_forward.1} parent=1 // pred_check_branch
      %102 = sbr.rel (0) target = $region65
    $region64: #{net_f1_forward.1} parent=1 // pred_region
      _
    $region65: #{net_f1_forward.1} parent=1 // pred_fallthru
      _
    // Predicated region
    $region66: #{net_f1_forward.1} parent=1 // pred_check
      _
    $region67: #{net_f1_forward.1} parent=1 // pred_check_branch
      %104 = sbr.rel (0) target = $region69
    $region68: #{net_f1_forward.1} parent=1 // pred_region
      _
    $region69: #{net_f1_forward.1} parent=1 // pred_fallthru
      _
    // Predicated region
    $region70: #{net_f1_forward.1} parent=1 // pred_check
      _
    $region71: #{net_f1_forward.1} parent=1 // pred_check_branch
      %106 = sbr.rel (0) target = $region73
    $region72: #{net_f1_forward.1} parent=1 // pred_region
      _
    $region73: #{net_f1_forward.1} parent=1 // pred_fallthru
      _
    // Predicated region
    $region74: #{net_f1_forward.1} parent=1 // pred_check
      _
    $region75: #{net_f1_forward.1} parent=1 // pred_check_branch
      %108 = sbr.rel (0) target = $region77
    $region76: #{net_f1_forward.1} parent=1 // pred_region
      %110 = dma.done [#allocation3], 28672
    $region77: #{net_f1_forward.1} parent=1 // pred_fallthru
      _
    // Predicated region
    $region78: #{net_f1_forward.1} parent=1 // pred_check
      _
    $region79: #{net_f1_forward.1} parent=1 // pred_check_branch
      %112 = sbr.rel (0) target = $region81
    $region80: #{net_f1_forward.1} parent=1 // pred_region
      %114 = dma.done [#allocation6], 16384
    $region81: #{net_f1_forward.1} parent=1 // pred_fallthru
      _
    // Predicated region
    $region82: #{net_f1_forward.1} parent=1 // pred_check
      _
    $region83: #{net_f1_forward.1} parent=1 // pred_check_branch
      %116 = sbr.rel (0) target = $region85
    $region84: #{net_f1_forward.1} parent=1 // pred_region
      %118 = dma.done [#allocation6], 16384
    $region85: #{net_f1_forward.1} parent=1 // pred_fallthru
      _
    // Predicated region
    $region86: #{net_f1_forward.1} parent=1 // pred_check
      _
    $region87: #{net_f1_forward.1} parent=1 // pred_check_branch
      %120 = sbr.rel (0) target = $region89
    $region88: #{net_f1_forward.1} parent=1 // pred_region
      %122 = dma.done [#allocation9], 16384
    $region89: #{net_f1_forward.1} parent=1 // pred_fallthru
      _
    %v123 = vld [vmem:[%s0] sm:$0xff]
    %v124 = vld [vmem:[%s0 + $0x8] sm:$0xff]
    %v125 = vld [vmem:[%s0 + $0x10] sm:$0xff]
    %v126 = vld [vmem:[%s0 + $0x18] sm:$0xf]
    %v127 = vld [vmem:[#allocation2] sm:$0xff]
    %v128 = vld [vmem:[#allocation2 + $0x8] sm:$0xff]
    %v129 = vld [vmem:[#allocation2 + $0x10] sm:$0xff]
    %v130 = vld [vmem:[#allocation2 + $0x18] sm:$0xff]
    %v131 = vld [vmem:[#allocation2 + $0x20] sm:$0xff]
    %v132 = vld [vmem:[#allocation2 + $0x28] sm:$0xff]
    %v133 = vld [vmem:[#allocation2 + $0x30] sm:$0xff]
    %v134 = vld [vmem:[#allocation2 + $0x38] sm:$0xff]
    %v135 = vld [vmem:[#allocation2 + $0x40] sm:$0xff]
    %v136 = vld [vmem:[#allocation2 + $0x48] sm:$0xff]
    %v137 = vld [vmem:[#allocation2 + $0x50] sm:$0xff]
    %v138 = vld [vmem:[#allocation2 + $0x58] sm:$0xff]
    %v139 = vld [vmem:[#allocation2 + $0x60] sm:$0xff]
    %v140 = vld [vmem:[#allocation2 + $0x68] sm:$0xff]
    %v141 = vld [vmem:[#allocation2 + $0x70] sm:$0xff]
    %v142 = vld [vmem:[#allocation2 + $0x78] sm:$0xff]
    %v143 = vld [vmem:[#allocation2 + $0x80] sm:$0xff]
    %v144 = vld [vmem:[#allocation2 + $0x88] sm:$0xff]
    %v145 = vld [vmem:[#allocation2 + $0x90] sm:$0xff]
    %v146 = vld [vmem:[#allocation2 + $0x98] sm:$0xff]
    %v147 = vld [vmem:[#allocation2 + $0xa0] sm:$0xff]
    %v148 = vld [vmem:[#allocation2 + $0xa8] sm:$0xff]
    %v149 = vld [vmem:[#allocation2 + $0xb0] sm:$0xff]
    %v150 = vld [vmem:[#allocation2 + $0xb8] sm:$0xff]
    %v151 = vld [vmem:[#allocation2 + $0xc0] sm:$0xff]
    %v152 = vld [vmem:[#allocation2 + $0xc8] sm:$0xff]
    %v153 = vld [vmem:[#allocation2 + $0xd0] sm:$0xff]
    %v154 = vld [vmem:[#allocation2 + $0xd8] sm:$0xff]
    %v155 = vld [vmem:[#allocation2 + $0xe0] sm:$0xff]
    %v156 = vld [vmem:[#allocation2 + $0xe8] sm:$0xff]
    %v157 = vld [vmem:[#allocation2 + $0xf0] sm:$0xff]
    %v158 = vld [vmem:[#allocation2 + $0xf8] sm:$0xff]
    %v159 = vld [vmem:[#allocation2 + $0x100] sm:$0xff]
    %v160 = vld [vmem:[#allocation2 + $0x108] sm:$0xff]
    %v161 = vld [vmem:[#allocation2 + $0x110] sm:$0xff]
    %v162 = vld [vmem:[#allocation2 + $0x118] sm:$0xff]
    %v163 = vld [vmem:[#allocation2 + $0x120] sm:$0xff]
    %v164 = vld [vmem:[#allocation2 + $0x128] sm:$0xff]
    %v165 = vld [vmem:[#allocation2 + $0x130] sm:$0xff]
    %v166 = vld [vmem:[#allocation2 + $0x138] sm:$0xff]
    %v167 = vld [vmem:[#allocation2 + $0x140] sm:$0xff]
    %v168 = vld [vmem:[#allocation2 + $0x148] sm:$0xff]
    %v169 = vld [vmem:[#allocation2 + $0x150] sm:$0xff]
    %v170 = vld [vmem:[#allocation2 + $0x158] sm:$0xff]
    %v171 = vld [vmem:[#allocation2 + $0x160] sm:$0xff]
    %v172 = vld [vmem:[#allocation2 + $0x168] sm:$0xff]
    %v173 = vld [vmem:[#allocation2 + $0x170] sm:$0xff]
    %v174 = vld [vmem:[#allocation2 + $0x178] sm:$0xff]
    %v175 = vld [vmem:[#allocation2 + $0x180] sm:$0xff]
    %v176 = vld [vmem:[#allocation2 + $0x188] sm:$0xff]
    %v177 = vld [vmem:[#allocation2 + $0x190] sm:$0xff]
    %v178 = vld [vmem:[#allocation2 + $0x198] sm:$0xff]
    %v179 = vld [vmem:[#allocation2 + $0x1a0] sm:$0xff]
    %v180 = vld [vmem:[#allocation2 + $0x1a8] sm:$0xff]
    %v181 = vld [vmem:[#allocation2 + $0x1b0] sm:$0xff]
    %v182 = vld [vmem:[#allocation2 + $0x1b8] sm:$0xff]
    %v183 = vld [vmem:[#allocation2 + $0x1c0] sm:$0xff]
    %v184 = vld [vmem:[#allocation2 + $0x1c8] sm:$0xff]
    %v185 = vld [vmem:[#allocation2 + $0x1d0] sm:$0xff]
    %v186 = vld [vmem:[#allocation2 + $0x1d8] sm:$0xff]
    %v187 = vld [vmem:[#allocation2 + $0x1e0] sm:$0xff]
    %v188 = vld [vmem:[#allocation2 + $0x1e8] sm:$0xff]
    %v189 = vld [vmem:[#allocation2 + $0x1f0] sm:$0xff]
    %v190 = vld [vmem:[#allocation2 + $0x1f8] sm:$0xff]
    %v191 = vld [vmem:[#allocation2 + $0x200] sm:$0xff]
    %v192 = vld [vmem:[#allocation2 + $0x208] sm:$0xff]
    %v193 = vld [vmem:[#allocation2 + $0x210] sm:$0xff]
    %v194 = vld [vmem:[#allocation2 + $0x218] sm:$0xff]
    %v195 = vld [vmem:[#allocation2 + $0x220] sm:$0xff]
    %v196 = vld [vmem:[#allocation2 + $0x228] sm:$0xff]
    %v197 = vld [vmem:[#allocation2 + $0x230] sm:$0xff]
    %v198 = vld [vmem:[#allocation2 + $0x238] sm:$0xff]
    %v199 = vld [vmem:[#allocation2 + $0x240] sm:$0xff]
    %v200 = vld [vmem:[#allocation2 + $0x248] sm:$0xff]
    %v201 = vld [vmem:[#allocation2 + $0x250] sm:$0xff]
    %v202 = vld [vmem:[#allocation2 + $0x258] sm:$0xff]
    %v203 = vld [vmem:[#allocation2 + $0x260] sm:$0xff]
    %v204 = vld [vmem:[#allocation2 + $0x268] sm:$0xff]
    %v205 = vld [vmem:[#allocation2 + $0x270] sm:$0xff]
    %v206 = vld [vmem:[#allocation2 + $0x278] sm:$0xff]
    %v207 = vld [vmem:[#allocation2 + $0x280] sm:$0xff]
    %v208 = vld [vmem:[#allocation2 + $0x288] sm:$0xff]
    %v209 = vld [vmem:[#allocation2 + $0x290] sm:$0xff]
    %v210 = vld [vmem:[#allocation2 + $0x298] sm:$0xff]
    %v211 = vld [vmem:[#allocation2 + $0x2a0] sm:$0xff]
    %v212 = vld [vmem:[#allocation2 + $0x2a8] sm:$0xff]
    %v213 = vld [vmem:[#allocation2 + $0x2b0] sm:$0xff]
    %v214 = vld [vmem:[#allocation2 + $0x2b8] sm:$0xff]
    %v215 = vld [vmem:[#allocation2 + $0x2c0] sm:$0xff]
    %v216 = vld [vmem:[#allocation2 + $0x2c8] sm:$0xff]
    %v217 = vld [vmem:[#allocation2 + $0x2d0] sm:$0xff]
    %v218 = vld [vmem:[#allocation2 + $0x2d8] sm:$0xff]
    %v219 = vld [vmem:[#allocation2 + $0x2e0] sm:$0xff]
    %v220 = vld [vmem:[#allocation2 + $0x2e8] sm:$0xff]
    %v221 = vld [vmem:[#allocation2 + $0x2f0] sm:$0xff]
    %v222 = vld [vmem:[#allocation2 + $0x2f8] sm:$0xff]
    %v223 = vld [vmem:[#allocation2 + $0x300] sm:$0xff]
    %v224 = vld [vmem:[#allocation2 + $0x308] sm:$0xff]
    %v225 = vld [vmem:[#allocation2 + $0x310] sm:$0xff]
    %v226 = vld [vmem:[#allocation2 + $0x318] sm:$0xff]
    %v227 = vld [vmem:[#allocation2 + $0x320] sm:$0xff]
    %v228 = vld [vmem:[#allocation2 + $0x328] sm:$0xff]
    %v229 = vld [vmem:[#allocation2 + $0x330] sm:$0xff]
    %v230 = vld [vmem:[#allocation2 + $0x338] sm:$0xff]
    %v231 = vld [vmem:[#allocation2 + $0x340] sm:$0xff]
    %v232 = vld [vmem:[#allocation2 + $0x348] sm:$0xff]
    %v233 = vld [vmem:[#allocation2 + $0x350] sm:$0xff]
    %v234 = vld [vmem:[#allocation2 + $0x358] sm:$0xff]
    %v235 = vld [vmem:[#allocation2 + $0x360] sm:$0xff]
    %v236 = vld [vmem:[#allocation2 + $0x368] sm:$0xff]
    %v237 = vld [vmem:[#allocation2 + $0x370] sm:$0xff]
    %v238 = vld [vmem:[#allocation2 + $0x378] sm:$0xff]
    %v239 = vld [vmem:[#allocation2 + $0x380] sm:$0xff]
    %v240 = vld [vmem:[#allocation2 + $0x388] sm:$0xff]
    %v241 = vld [vmem:[#allocation2 + $0x390] sm:$0xff]
    %v242 = vld [vmem:[#allocation2 + $0x398] sm:$0xff]
    %v243 = vld [vmem:[#allocation2 + $0x3a0] sm:$0xff]
    %v244 = vld [vmem:[#allocation2 + $0x3a8] sm:$0xff]
    %v245 = vld [vmem:[#allocation2 + $0x3b0] sm:$0xff]
    %v246 = vld [vmem:[#allocation2 + $0x3b8] sm:$0xff]
    %v247 = vld [vmem:[#allocation2 + $0x3c0] sm:$0xff]
    %v248 = vld [vmem:[#allocation2 + $0x3c8] sm:$0xff]
    %v249 = vld [vmem:[#allocation2 + $0x3d0] sm:$0xff]
    %v250 = vld [vmem:[#allocation2 + $0x3d8] sm:$0xff]
    %v251 = vld [vmem:[#allocation2 + $0x3e0] sm:$0xff]
    %v252 = vld [vmem:[#allocation2 + $0x3e8] sm:$0xff]
    %v253 = vld [vmem:[#allocation2 + $0x3f0] sm:$0xff]
    %v254 = vld [vmem:[#allocation2 + $0x3f8] sm:$0xff]
    %v255 = vld [vmem:[#allocation2 + $0x400] sm:$0xff]
    %v256 = vld [vmem:[#allocation2 + $0x408] sm:$0xff]
    %v257 = vld [vmem:[#allocation2 + $0x410] sm:$0xff]
    %v258 = vld [vmem:[#allocation2 + $0x418] sm:$0xff]
    %v259 = vld [vmem:[#allocation2 + $0x420] sm:$0xff]
    %v260 = vld [vmem:[#allocation2 + $0x428] sm:$0xff]
    %v261 = vld [vmem:[#allocation2 + $0x430] sm:$0xff]
    %v262 = vld [vmem:[#allocation2 + $0x438] sm:$0xff]
    %v263 = vld [vmem:[#allocation2 + $0x440] sm:$0xff]
    %v264 = vld [vmem:[#allocation2 + $0x448] sm:$0xff]
    %v265 = vld [vmem:[#allocation2 + $0x450] sm:$0xff]
    %v266 = vld [vmem:[#allocation2 + $0x458] sm:$0xff]
    %v267 = vld [vmem:[#allocation2 + $0x460] sm:$0xff]
    %v268 = vld [vmem:[#allocation2 + $0x468] sm:$0xff]
    %v269 = vld [vmem:[#allocation2 + $0x470] sm:$0xff]
    %v270 = vld [vmem:[#allocation2 + $0x478] sm:$0xff]
    %v271 = vld [vmem:[#allocation2 + $0x480] sm:$0xff]
    %v272 = vld [vmem:[#allocation2 + $0x488] sm:$0xff]
    %v273 = vld [vmem:[#allocation2 + $0x490] sm:$0xff]
    %v274 = vld [vmem:[#allocation2 + $0x498] sm:$0xff]
    %v275 = vld [vmem:[#allocation2 + $0x4a0] sm:$0xff]
    %v276 = vld [vmem:[#allocation2 + $0x4a8] sm:$0xff]
    %v277 = vld [vmem:[#allocation2 + $0x4b0] sm:$0xff]
    %v278 = vld [vmem:[#allocation2 + $0x4b8] sm:$0xff]
    %v279 = vld [vmem:[#allocation2 + $0x4c0] sm:$0xff]
    %v280 = vld [vmem:[#allocation2 + $0x4c8] sm:$0xff]
    %v281 = vld [vmem:[#allocation2 + $0x4d0] sm:$0xff]
    %v282 = vld [vmem:[#allocation2 + $0x4d8] sm:$0xff]
    %v283 = vld [vmem:[#allocation2 + $0x4e0] sm:$0xff]
    %v284 = vld [vmem:[#allocation2 + $0x4e8] sm:$0xff]
    %v285 = vld [vmem:[#allocation2 + $0x4f0] sm:$0xff]
    %v286 = vld [vmem:[#allocation2 + $0x4f8] sm:$0xff]
    %v287 = vld [vmem:[#allocation2 + $0x500] sm:$0xff]
    %v288 = vld [vmem:[#allocation2 + $0x508] sm:$0xff]
    %v289 = vld [vmem:[#allocation2 + $0x510] sm:$0xff]
    %v290 = vld [vmem:[#allocation2 + $0x518] sm:$0xff]
    %v291 = vld [vmem:[#allocation2 + $0x520] sm:$0xff]
    %v292 = vld [vmem:[#allocation2 + $0x528] sm:$0xff]
    %v293 = vld [vmem:[#allocation2 + $0x530] sm:$0xff]
    %v294 = vld [vmem:[#allocation2 + $0x538] sm:$0xff]
    %v295 = vld [vmem:[#allocation2 + $0x540] sm:$0xff]
    %v296 = vld [vmem:[#allocation2 + $0x548] sm:$0xff]
    %v297 = vld [vmem:[#allocation2 + $0x550] sm:$0xff]
    %v298 = vld [vmem:[#allocation2 + $0x558] sm:$0xff]
    %v299 = vld [vmem:[#allocation2 + $0x560] sm:$0xff]
    %v300 = vld [vmem:[#allocation2 + $0x568] sm:$0xff]
    %v301 = vld [vmem:[#allocation2 + $0x570] sm:$0xff]
    %v302 = vld [vmem:[#allocation2 + $0x578] sm:$0xff]
    %v303 = vld [vmem:[#allocation2 + $0x580] sm:$0xff]
    %v304 = vld [vmem:[#allocation2 + $0x588] sm:$0xff]
    %v305 = vld [vmem:[#allocation2 + $0x590] sm:$0xff]
    %v306 = vld [vmem:[#allocation2 + $0x598] sm:$0xff]
    %v307 = vld [vmem:[#allocation2 + $0x5a0] sm:$0xff]
    %v308 = vld [vmem:[#allocation2 + $0x5a8] sm:$0xff]
    %v309 = vld [vmem:[#allocation2 + $0x5b0] sm:$0xff]
    %v310 = vld [vmem:[#allocation2 + $0x5b8] sm:$0xff]
    %v311 = vld [vmem:[#allocation2 + $0x5c0] sm:$0xff]
    %v312 = vld [vmem:[#allocation2 + $0x5c8] sm:$0xff]
    %v313 = vld [vmem:[#allocation2 + $0x5d0] sm:$0xff]
    %v314 = vld [vmem:[#allocation2 + $0x5d8] sm:$0xff]
    %v315 = vld [vmem:[#allocation2 + $0x5e0] sm:$0xff]
    %v316 = vld [vmem:[#allocation2 + $0x5e8] sm:$0xff]
    %v317 = vld [vmem:[#allocation2 + $0x5f0] sm:$0xff]
    %v318 = vld [vmem:[#allocation2 + $0x5f8] sm:$0xff]
    %v319 = vld [vmem:[#allocation2 + $0x600] sm:$0xff]
    %v320 = vld [vmem:[#allocation2 + $0x608] sm:$0xff]
    %v321 = vld [vmem:[#allocation2 + $0x610] sm:$0xff]
    %v322 = vld [vmem:[#allocation2 + $0x618] sm:$0xff]
    %v323 = vld [vmem:[#allocation2 + $0x620] sm:$0xff]
    %v324 = vld [vmem:[#allocation2 + $0x628] sm:$0xff]
    %v325 = vld [vmem:[#allocation2 + $0x630] sm:$0xff]
    %v326 = vld [vmem:[#allocation2 + $0x638] sm:$0xff]
    %v327 = vld [vmem:[#allocation2 + $0x640] sm:$0xff]
    %v328 = vld [vmem:[#allocation2 + $0x648] sm:$0xff]
    %v329 = vld [vmem:[#allocation2 + $0x650] sm:$0xff]
    %v330 = vld [vmem:[#allocation2 + $0x658] sm:$0xff]
    %v331 = vld [vmem:[#allocation2 + $0x660] sm:$0xff]
    %v332 = vld [vmem:[#allocation2 + $0x668] sm:$0xff]
    %v333 = vld [vmem:[#allocation2 + $0x670] sm:$0xff]
    %v334 = vld [vmem:[#allocation2 + $0x678] sm:$0xff]
    %v335 = vld [vmem:[#allocation2 + $0x680] sm:$0xff]
    %v336 = vld [vmem:[#allocation2 + $0x688] sm:$0xff]
    %v337 = vld [vmem:[#allocation2 + $0x690] sm:$0xff]
    %v338 = vld [vmem:[#allocation2 + $0x698] sm:$0xff]
    %v339 = vld [vmem:[#allocation2 + $0x6a0] sm:$0xff]
    %v340 = vld [vmem:[#allocation2 + $0x6a8] sm:$0xff]
    %v341 = vld [vmem:[#allocation2 + $0x6b0] sm:$0xff]
    %v342 = vld [vmem:[#allocation2 + $0x6b8] sm:$0xff]
    %v343 = vld [vmem:[#allocation2 + $0x6c0] sm:$0xff]
    %v344 = vld [vmem:[#allocation2 + $0x6c8] sm:$0xff]
    %v345 = vld [vmem:[#allocation2 + $0x6d0] sm:$0xff]
    %v346 = vld [vmem:[#allocation2 + $0x6d8] sm:$0xff]
    %v347 = vld [vmem:[#allocation2 + $0x6e0] sm:$0xff]
    %v348 = vld [vmem:[#allocation2 + $0x6e8] sm:$0xff]
    %v349 = vld [vmem:[#allocation2 + $0x6f0] sm:$0xff]
    %v350 = vld [vmem:[#allocation2 + $0x6f8] sm:$0xff]
    %v355 = vunpack.c.l.b16 %v123
    %v356 = vunpack.c.h.b16 %v123
    %v357 = vunpack.c.l.b16 %v124
    %v358 = vunpack.c.h.b16 %v124
    %v359 = vunpack.c.l.b16 %v125
    %v360 = vunpack.c.h.b16 %v125
    %v361 = vunpack.c.l.b16 %v126
    %v362 = vpack.c.b16 %v355, %v355
    %v363 = vpack.c.b16 %v356, %v356
    %v364 = vpack.c.b16 %v357, %v357
    %v365 = vpack.c.b16 %v358, %v358
    %v366 = vpack.c.b16 %v359, %v359
    %v367 = vpack.c.b16 %v360, %v360
    %v368 = vpack.c.b16 %v361, %v361
    %v600 = vunpack.c.l.b16 %v127
    %v601 = vunpack.c.h.b16 %v127
    %v602 = vunpack.c.l.b16 %v128
    %v603 = vunpack.c.h.b16 %v128
    %v604 = vunpack.c.l.b16 %v129
    %v605 = vunpack.c.h.b16 %v129
    %v606 = vunpack.c.l.b16 %v130
    %v607 = vunpack.c.h.b16 %v130
    %v608 = vunpack.c.l.b16 %v131
    %v609 = vunpack.c.h.b16 %v131
    %v610 = vunpack.c.l.b16 %v132
    %v611 = vunpack.c.h.b16 %v132
    %v612 = vunpack.c.l.b16 %v133
    %v613 = vunpack.c.h.b16 %v133
    %v614 = vunpack.c.l.b16 %v134
    %v615 = vunpack.c.h.b16 %v134
    %v616 = vunpack.c.l.b16 %v135
    %v617 = vunpack.c.h.b16 %v135
    %v618 = vunpack.c.l.b16 %v136
    %v619 = vunpack.c.h.b16 %v136
    %v620 = vunpack.c.l.b16 %v137
    %v621 = vunpack.c.h.b16 %v137
    %v622 = vunpack.c.l.b16 %v138
    %v623 = vunpack.c.h.b16 %v138
    %v624 = vunpack.c.l.b16 %v139
    %v625 = vunpack.c.h.b16 %v139
    %v626 = vunpack.c.l.b16 %v140
    %v627 = vunpack.c.h.b16 %v140
    %v628 = vunpack.c.l.b16 %v141
    %v629 = vunpack.c.h.b16 %v141
    %v630 = vunpack.c.l.b16 %v142
    %v631 = vunpack.c.h.b16 %v142
    %v632 = vunpack.c.l.b16 %v143
    %v633 = vunpack.c.h.b16 %v143
    %v634 = vunpack.c.l.b16 %v144
    %v635 = vunpack.c.h.b16 %v144
    %v636 = vunpack.c.l.b16 %v145
    %v637 = vunpack.c.h.b16 %v145
    %v638 = vunpack.c.l.b16 %v146
    %v639 = vunpack.c.h.b16 %v146
    %v640 = vunpack.c.l.b16 %v147
    %v641 = vunpack.c.h.b16 %v147
    %v642 = vunpack.c.l.b16 %v148
    %v643 = vunpack.c.h.b16 %v148
    %v644 = vunpack.c.l.b16 %v149
    %v645 = vunpack.c.h.b16 %v149
    %v646 = vunpack.c.l.b16 %v150
    %v647 = vunpack.c.h.b16 %v150
    %v648 = vunpack.c.l.b16 %v151
    %v649 = vunpack.c.h.b16 %v151
    %v650 = vunpack.c.l.b16 %v152
    %v651 = vunpack.c.h.b16 %v152
    %v652 = vunpack.c.l.b16 %v153
    %v653 = vunpack.c.h.b16 %v153
    %v654 = vunpack.c.l.b16 %v154
    %v655 = vunpack.c.h.b16 %v154
    %v656 = vunpack.c.l.b16 %v155
    %v657 = vunpack.c.h.b16 %v155
    %v658 = vunpack.c.l.b16 %v156
    %v659 = vunpack.c.h.b16 %v156
    %v660 = vunpack.c.l.b16 %v157
    %v661 = vunpack.c.h.b16 %v157
    %v662 = vunpack.c.l.b16 %v158
    %v663 = vunpack.c.h.b16 %v158
    %v664 = vunpack.c.l.b16 %v159
    %v665 = vunpack.c.h.b16 %v159
    %v666 = vunpack.c.l.b16 %v160
    %v667 = vunpack.c.h.b16 %v160
    %v668 = vunpack.c.l.b16 %v161
    %v669 = vunpack.c.h.b16 %v161
    %v670 = vunpack.c.l.b16 %v162
    %v671 = vunpack.c.h.b16 %v162
    %v672 = vunpack.c.l.b16 %v163
    %v673 = vunpack.c.h.b16 %v163
    %v674 = vunpack.c.l.b16 %v164
    %v675 = vunpack.c.h.b16 %v164
    %v676 = vunpack.c.l.b16 %v165
    %v677 = vunpack.c.h.b16 %v165
    %v678 = vunpack.c.l.b16 %v166
    %v679 = vunpack.c.h.b16 %v166
    %v680 = vunpack.c.l.b16 %v167
    %v681 = vunpack.c.h.b16 %v167
    %v682 = vunpack.c.l.b16 %v168
    %v683 = vunpack.c.h.b16 %v168
    %v684 = vunpack.c.l.b16 %v169
    %v685 = vunpack.c.h.b16 %v169
    %v686 = vunpack.c.l.b16 %v170
    %v687 = vunpack.c.h.b16 %v170
    %v688 = vunpack.c.l.b16 %v171
    %v689 = vunpack.c.h.b16 %v171
    %v690 = vunpack.c.l.b16 %v172
    %v691 = vunpack.c.h.b16 %v172
    %v692 = vunpack.c.l.b16 %v173
    %v693 = vunpack.c.h.b16 %v173
    %v694 = vunpack.c.l.b16 %v174
    %v695 = vunpack.c.h.b16 %v174
    %v696 = vunpack.c.l.b16 %v175
    %v697 = vunpack.c.h.b16 %v175
    %v698 = vunpack.c.l.b16 %v176
    %v699 = vunpack.c.h.b16 %v176
    %v700 = vunpack.c.l.b16 %v177
    %v701 = vunpack.c.h.b16 %v177
    %v702 = vunpack.c.l.b16 %v178
    %v703 = vunpack.c.h.b16 %v178
    %v704 = vunpack.c.l.b16 %v179
    %v705 = vunpack.c.h.b16 %v179
    %v706 = vunpack.c.l.b16 %v180
    %v707 = vunpack.c.h.b16 %v180
    %v708 = vunpack.c.l.b16 %v181
    %v709 = vunpack.c.h.b16 %v181
    %v710 = vunpack.c.l.b16 %v182
    %v711 = vunpack.c.h.b16 %v182
    %v712 = vunpack.c.l.b16 %v183
    %v713 = vunpack.c.h.b16 %v183
    %v714 = vunpack.c.l.b16 %v184
    %v715 = vunpack.c.h.b16 %v184
    %v716 = vunpack.c.l.b16 %v185
    %v717 = vunpack.c.h.b16 %v185
    %v718 = vunpack.c.l.b16 %v186
    %v719 = vunpack.c.h.b16 %v186
    %v720 = vunpack.c.l.b16 %v187
    %v721 = vunpack.c.h.b16 %v187
    %v722 = vunpack.c.l.b16 %v188
    %v723 = vunpack.c.h.b16 %v188
    %v724 = vunpack.c.l.b16 %v189
    %v725 = vunpack.c.h.b16 %v189
    %v726 = vunpack.c.l.b16 %v190
    %v727 = vunpack.c.h.b16 %v190
    %v728 = vunpack.c.l.b16 %v191
    %v729 = vunpack.c.h.b16 %v191
    %v730 = vunpack.c.l.b16 %v192
    %v731 = vunpack.c.h.b16 %v192
    %v732 = vunpack.c.l.b16 %v193
    %v733 = vunpack.c.h.b16 %v193
    %v734 = vunpack.c.l.b16 %v194
    %v735 = vunpack.c.h.b16 %v194
    %v736 = vunpack.c.l.b16 %v195
    %v737 = vunpack.c.h.b16 %v195
    %v738 = vunpack.c.l.b16 %v196
    %v739 = vunpack.c.h.b16 %v196
    %v740 = vunpack.c.l.b16 %v197
    %v741 = vunpack.c.h.b16 %v197
    %v742 = vunpack.c.l.b16 %v198
    %v743 = vunpack.c.h.b16 %v198
    %v744 = vunpack.c.l.b16 %v199
    %v745 = vunpack.c.h.b16 %v199
    %v746 = vunpack.c.l.b16 %v200
    %v747 = vunpack.c.h.b16 %v200
    %v748 = vunpack.c.l.b16 %v201
    %v749 = vunpack.c.h.b16 %v201
    %v750 = vunpack.c.l.b16 %v202
    %v751 = vunpack.c.h.b16 %v202
    %v752 = vunpack.c.l.b16 %v203
    %v753 = vunpack.c.h.b16 %v203
    %v754 = vunpack.c.l.b16 %v204
    %v755 = vunpack.c.h.b16 %v204
    %v756 = vunpack.c.l.b16 %v205
    %v757 = vunpack.c.h.b16 %v205
    %v758 = vunpack.c.l.b16 %v206
    %v759 = vunpack.c.h.b16 %v206
    %v760 = vunpack.c.l.b16 %v207
    %v761 = vunpack.c.h.b16 %v207
    %v762 = vunpack.c.l.b16 %v208
    %v763 = vunpack.c.h.b16 %v208
    %v764 = vunpack.c.l.b16 %v209
    %v765 = vunpack.c.h.b16 %v209
    %v766 = vunpack.c.l.b16 %v210
    %v767 = vunpack.c.h.b16 %v210
    %v768 = vunpack.c.l.b16 %v211
    %v769 = vunpack.c.h.b16 %v211
    %v770 = vunpack.c.l.b16 %v212
    %v771 = vunpack.c.h.b16 %v212
    %v772 = vunpack.c.l.b16 %v213
    %v773 = vunpack.c.h.b16 %v213
    %v774 = vunpack.c.l.b16 %v214
    %v775 = vunpack.c.h.b16 %v214
    %v776 = vunpack.c.l.b16 %v215
    %v777 = vunpack.c.h.b16 %v215
    %v778 = vunpack.c.l.b16 %v216
    %v779 = vunpack.c.h.b16 %v216
    %v780 = vunpack.c.l.b16 %v217
    %v781 = vunpack.c.h.b16 %v217
    %v782 = vunpack.c.l.b16 %v218
    %v783 = vunpack.c.h.b16 %v218
    %v784 = vunpack.c.l.b16 %v219
    %v785 = vunpack.c.h.b16 %v219
    %v786 = vunpack.c.l.b16 %v220
    %v787 = vunpack.c.h.b16 %v220
    %v788 = vunpack.c.l.b16 %v221
    %v789 = vunpack.c.h.b16 %v221
    %v790 = vunpack.c.l.b16 %v222
    %v791 = vunpack.c.h.b16 %v222
    %v792 = vunpack.c.l.b16 %v223
    %v793 = vunpack.c.h.b16 %v223
    %v794 = vunpack.c.l.b16 %v224
    %v795 = vunpack.c.h.b16 %v224
    %v796 = vunpack.c.l.b16 %v225
    %v797 = vunpack.c.h.b16 %v225
    %v798 = vunpack.c.l.b16 %v226
    %v799 = vunpack.c.h.b16 %v226
    %v800 = vunpack.c.l.b16 %v227
    %v801 = vunpack.c.h.b16 %v227
    %v802 = vunpack.c.l.b16 %v228
    %v803 = vunpack.c.h.b16 %v228
    %v804 = vunpack.c.l.b16 %v229
    %v805 = vunpack.c.h.b16 %v229
    %v806 = vunpack.c.l.b16 %v230
    %v807 = vunpack.c.h.b16 %v230
    %v808 = vunpack.c.l.b16 %v231
    %v809 = vunpack.c.h.b16 %v231
    %v810 = vunpack.c.l.b16 %v232
    %v811 = vunpack.c.h.b16 %v232
    %v812 = vunpack.c.l.b16 %v233
    %v813 = vunpack.c.h.b16 %v233
    %v814 = vunpack.c.l.b16 %v234
    %v815 = vunpack.c.h.b16 %v234
    %v816 = vunpack.c.l.b16 %v235
    %v817 = vunpack.c.h.b16 %v235
    %v818 = vunpack.c.l.b16 %v236
    %v819 = vunpack.c.h.b16 %v236
    %v820 = vunpack.c.l.b16 %v237
    %v821 = vunpack.c.h.b16 %v237
    %v822 = vunpack.c.l.b16 %v238
    %v823 = vunpack.c.h.b16 %v238
    %v824 = vunpack.c.l.b16 %v239
    %v825 = vunpack.c.h.b16 %v239
    %v826 = vunpack.c.l.b16 %v240
    %v827 = vunpack.c.h.b16 %v240
    %v828 = vunpack.c.l.b16 %v241
    %v829 = vunpack.c.h.b16 %v241
    %v830 = vunpack.c.l.b16 %v242
    %v831 = vunpack.c.h.b16 %v242
    %v832 = vunpack.c.l.b16 %v243
    %v833 = vunpack.c.h.b16 %v243
    %v834 = vunpack.c.l.b16 %v244
    %v835 = vunpack.c.h.b16 %v244
    %v836 = vunpack.c.l.b16 %v245
    %v837 = vunpack.c.h.b16 %v245
    %v838 = vunpack.c.l.b16 %v246
    %v839 = vunpack.c.h.b16 %v246
    %v840 = vunpack.c.l.b16 %v247
    %v841 = vunpack.c.h.b16 %v247
    %v842 = vunpack.c.l.b16 %v248
    %v843 = vunpack.c.h.b16 %v248
    %v844 = vunpack.c.l.b16 %v249
    %v845 = vunpack.c.h.b16 %v249
    %v846 = vunpack.c.l.b16 %v250
    %v847 = vunpack.c.h.b16 %v250
    %v848 = vunpack.c.l.b16 %v251
    %v849 = vunpack.c.h.b16 %v251
    %v850 = vunpack.c.l.b16 %v252
    %v851 = vunpack.c.h.b16 %v252
    %v852 = vunpack.c.l.b16 %v253
    %v853 = vunpack.c.h.b16 %v253
    %v854 = vunpack.c.l.b16 %v254
    %v855 = vunpack.c.h.b16 %v254
    %v856 = vunpack.c.l.b16 %v255
    %v857 = vunpack.c.h.b16 %v255
    %v858 = vunpack.c.l.b16 %v256
    %v859 = vunpack.c.h.b16 %v256
    %v860 = vunpack.c.l.b16 %v257
    %v861 = vunpack.c.h.b16 %v257
    %v862 = vunpack.c.l.b16 %v258
    %v863 = vunpack.c.h.b16 %v258
    %v864 = vunpack.c.l.b16 %v259
    %v865 = vunpack.c.h.b16 %v259
    %v866 = vunpack.c.l.b16 %v260
    %v867 = vunpack.c.h.b16 %v260
    %v868 = vunpack.c.l.b16 %v261
    %v869 = vunpack.c.h.b16 %v261
    %v870 = vunpack.c.l.b16 %v262
    %v871 = vunpack.c.h.b16 %v262
    %v872 = vunpack.c.l.b16 %v263
    %v873 = vunpack.c.h.b16 %v263
    %v874 = vunpack.c.l.b16 %v264
    %v875 = vunpack.c.h.b16 %v264
    %v876 = vunpack.c.l.b16 %v265
    %v877 = vunpack.c.h.b16 %v265
    %v878 = vunpack.c.l.b16 %v266
    %v879 = vunpack.c.h.b16 %v266
    %v880 = vunpack.c.l.b16 %v267
    %v881 = vunpack.c.h.b16 %v267
    %v882 = vunpack.c.l.b16 %v268
    %v883 = vunpack.c.h.b16 %v268
    %v884 = vunpack.c.l.b16 %v269
    %v885 = vunpack.c.h.b16 %v269
    %v886 = vunpack.c.l.b16 %v270
    %v887 = vunpack.c.h.b16 %v270
    %v888 = vunpack.c.l.b16 %v271
    %v889 = vunpack.c.h.b16 %v271
    %v890 = vunpack.c.l.b16 %v272
    %v891 = vunpack.c.h.b16 %v272
    %v892 = vunpack.c.l.b16 %v273
    %v893 = vunpack.c.h.b16 %v273
    %v894 = vunpack.c.l.b16 %v274
    %v895 = vunpack.c.h.b16 %v274
    %v896 = vunpack.c.l.b16 %v275
    %v897 = vunpack.c.h.b16 %v275
    %v898 = vunpack.c.l.b16 %v276
    %v899 = vunpack.c.h.b16 %v276
    %v900 = vunpack.c.l.b16 %v277
    %v901 = vunpack.c.h.b16 %v277
    %v902 = vunpack.c.l.b16 %v278
    %v903 = vunpack.c.h.b16 %v278
    %v904 = vunpack.c.l.b16 %v279
    %v905 = vunpack.c.h.b16 %v279
    %v906 = vunpack.c.l.b16 %v280
    %v907 = vunpack.c.h.b16 %v280
    %v908 = vunpack.c.l.b16 %v281
    %v909 = vunpack.c.h.b16 %v281
    %v910 = vunpack.c.l.b16 %v282
    %v911 = vunpack.c.h.b16 %v282
    %v912 = vunpack.c.l.b16 %v283
    %v913 = vunpack.c.h.b16 %v283
    %v914 = vunpack.c.l.b16 %v284
    %v915 = vunpack.c.h.b16 %v284
    %v916 = vunpack.c.l.b16 %v285
    %v917 = vunpack.c.h.b16 %v285
    %v918 = vunpack.c.l.b16 %v286
    %v919 = vunpack.c.h.b16 %v286
    %v920 = vunpack.c.l.b16 %v287
    %v921 = vunpack.c.h.b16 %v287
    %v922 = vunpack.c.l.b16 %v288
    %v923 = vunpack.c.h.b16 %v288
    %v924 = vunpack.c.l.b16 %v289
    %v925 = vunpack.c.h.b16 %v289
    %v926 = vunpack.c.l.b16 %v290
    %v927 = vunpack.c.h.b16 %v290
    %v928 = vunpack.c.l.b16 %v291
    %v929 = vunpack.c.h.b16 %v291
    %v930 = vunpack.c.l.b16 %v292
    %v931 = vunpack.c.h.b16 %v292
    %v932 = vunpack.c.l.b16 %v293
    %v933 = vunpack.c.h.b16 %v293
    %v934 = vunpack.c.l.b16 %v294
    %v935 = vunpack.c.h.b16 %v294
    %v936 = vunpack.c.l.b16 %v295
    %v937 = vunpack.c.h.b16 %v295
    %v938 = vunpack.c.l.b16 %v296
    %v939 = vunpack.c.h.b16 %v296
    %v940 = vunpack.c.l.b16 %v297
    %v941 = vunpack.c.h.b16 %v297
    %v942 = vunpack.c.l.b16 %v298
    %v943 = vunpack.c.h.b16 %v298
    %v944 = vunpack.c.l.b16 %v299
    %v945 = vunpack.c.h.b16 %v299
    %v946 = vunpack.c.l.b16 %v300
    %v947 = vunpack.c.h.b16 %v300
    %v948 = vunpack.c.l.b16 %v301
    %v949 = vunpack.c.h.b16 %v301
    %v950 = vunpack.c.l.b16 %v302
    %v951 = vunpack.c.h.b16 %v302
    %v952 = vunpack.c.l.b16 %v303
    %v953 = vunpack.c.h.b16 %v303
    %v954 = vunpack.c.l.b16 %v304
    %v955 = vunpack.c.h.b16 %v304
    %v956 = vunpack.c.l.b16 %v305
    %v957 = vunpack.c.h.b16 %v305
    %v958 = vunpack.c.l.b16 %v306
    %v959 = vunpack.c.h.b16 %v306
    %v960 = vunpack.c.l.b16 %v307
    %v961 = vunpack.c.h.b16 %v307
    %v962 = vunpack.c.l.b16 %v308
    %v963 = vunpack.c.h.b16 %v308
    %v964 = vunpack.c.l.b16 %v309
    %v965 = vunpack.c.h.b16 %v309
    %v966 = vunpack.c.l.b16 %v310
    %v967 = vunpack.c.h.b16 %v310
    %v968 = vunpack.c.l.b16 %v311
    %v969 = vunpack.c.h.b16 %v311
    %v970 = vunpack.c.l.b16 %v312
    %v971 = vunpack.c.h.b16 %v312
    %v972 = vunpack.c.l.b16 %v313
    %v973 = vunpack.c.h.b16 %v313
    %v974 = vunpack.c.l.b16 %v314
    %v975 = vunpack.c.h.b16 %v314
    %v976 = vunpack.c.l.b16 %v315
    %v977 = vunpack.c.h.b16 %v315
    %v978 = vunpack.c.l.b16 %v316
    %v979 = vunpack.c.h.b16 %v316
    %v980 = vunpack.c.l.b16 %v317
    %v981 = vunpack.c.h.b16 %v317
    %v982 = vunpack.c.l.b16 %v318
    %v983 = vunpack.c.h.b16 %v318
    %v984 = vunpack.c.l.b16 %v319
    %v985 = vunpack.c.h.b16 %v319
    %v986 = vunpack.c.l.b16 %v320
    %v987 = vunpack.c.h.b16 %v320
    %v988 = vunpack.c.l.b16 %v321
    %v989 = vunpack.c.h.b16 %v321
    %v990 = vunpack.c.l.b16 %v322
    %v991 = vunpack.c.h.b16 %v322
    %v992 = vunpack.c.l.b16 %v323
    %v993 = vunpack.c.h.b16 %v323
    %v994 = vunpack.c.l.b16 %v324
    %v995 = vunpack.c.h.b16 %v324
    %v996 = vunpack.c.l.b16 %v325
    %v997 = vunpack.c.h.b16 %v325
    %v998 = vunpack.c.l.b16 %v326
    %v999 = vunpack.c.h.b16 %v326
    %v1000 = vunpack.c.l.b16 %v327
    %v1001 = vunpack.c.h.b16 %v327
    %v1002 = vunpack.c.l.b16 %v328
    %v1003 = vunpack.c.h.b16 %v328
    %v1004 = vunpack.c.l.b16 %v329
    %v1005 = vunpack.c.h.b16 %v329
    %v1006 = vunpack.c.l.b16 %v330
    %v1007 = vunpack.c.h.b16 %v330
    %v1008 = vunpack.c.l.b16 %v331
    %v1009 = vunpack.c.h.b16 %v331
    %v1010 = vunpack.c.l.b16 %v332
    %v1011 = vunpack.c.h.b16 %v332
    %v1012 = vunpack.c.l.b16 %v333
    %v1013 = vunpack.c.h.b16 %v333
    %v1014 = vunpack.c.l.b16 %v334
    %v1015 = vunpack.c.h.b16 %v334
    %v1016 = vunpack.c.l.b16 %v335
    %v1017 = vunpack.c.h.b16 %v335
    %v1018 = vunpack.c.l.b16 %v336
    %v1019 = vunpack.c.h.b16 %v336
    %v1020 = vunpack.c.l.b16 %v337
    %v1021 = vunpack.c.h.b16 %v337
    %v1022 = vunpack.c.l.b16 %v338
    %v1023 = vunpack.c.h.b16 %v338
    %v1024 = vunpack.c.l.b16 %v339
    %v1025 = vunpack.c.h.b16 %v339
    %v1026 = vunpack.c.l.b16 %v340
    %v1027 = vunpack.c.h.b16 %v340
    %v1028 = vunpack.c.l.b16 %v341
    %v1029 = vunpack.c.h.b16 %v341
    %v1030 = vunpack.c.l.b16 %v342
    %v1031 = vunpack.c.h.b16 %v342
    %v1032 = vunpack.c.l.b16 %v343
    %v1033 = vunpack.c.h.b16 %v343
    %v1034 = vunpack.c.l.b16 %v344
    %v1035 = vunpack.c.h.b16 %v344
    %v1036 = vunpack.c.l.b16 %v345
    %v1037 = vunpack.c.h.b16 %v345
    %v1038 = vunpack.c.l.b16 %v346
    %v1039 = vunpack.c.h.b16 %v346
    %v1040 = vunpack.c.l.b16 %v347
    %v1041 = vunpack.c.h.b16 %v347
    %v1042 = vunpack.c.l.b16 %v348
    %v1043 = vunpack.c.h.b16 %v348
    %v1044 = vunpack.c.l.b16 %v349
    %v1045 = vunpack.c.h.b16 %v349
    %v1046 = vunpack.c.l.b16 %v350
    %v1047 = vunpack.c.h.b16 %v350
    %v1048 = vpack.c.b16 %v604, %v600
    %v1049 = vpack.c.b16 %v605, %v601
    %v1050 = vpack.c.b16 %v606, %v602
    %v1051 = vpack.c.b16 %v607, %v603
    %v1052 = vpack.c.b16 %v612, %v608
    %v1053 = vpack.c.b16 %v613, %v609
    %v1054 = vpack.c.b16 %v614, %v610
    %v1055 = vpack.c.b16 %v615, %v611
    %v1056 = vpack.c.b16 %v620, %v616
    %v1057 = vpack.c.b16 %v621, %v617
    %v1058 = vpack.c.b16 %v622, %v618
    %v1059 = vpack.c.b16 %v623, %v619
    %v1060 = vpack.c.b16 %v628, %v624
    %v1061 = vpack.c.b16 %v629, %v625
    %v1062 = vpack.c.b16 %v630, %v626
    %v1063 = vpack.c.b16 %v631, %v627
    %v1064 = vpack.c.b16 %v636, %v632
    %v1065 = vpack.c.b16 %v637, %v633
    %v1066 = vpack.c.b16 %v638, %v634
    %v1067 = vpack.c.b16 %v639, %v635
    %v1068 = vpack.c.b16 %v644, %v640
    %v1069 = vpack.c.b16 %v645, %v641
    %v1070 = vpack.c.b16 %v646, %v642
    %v1071 = vpack.c.b16 %v647, %v643
    %v1072 = vpack.c.b16 %v652, %v648
    %v1073 = vpack.c.b16 %v653, %v649
    %v1074 = vpack.c.b16 %v654, %v650
    %v1075 = vpack.c.b16 %v655, %v651
    %v1076 = vpack.c.b16 %v660, %v656
    %v1077 = vpack.c.b16 %v661, %v657
    %v1078 = vpack.c.b16 %v662, %v658
    %v1079 = vpack.c.b16 %v663, %v659
    %v1080 = vpack.c.b16 %v668, %v664
    %v1081 = vpack.c.b16 %v669, %v665
    %v1082 = vpack.c.b16 %v670, %v666
    %v1083 = vpack.c.b16 %v671, %v667
    %v1084 = vpack.c.b16 %v676, %v672
    %v1085 = vpack.c.b16 %v677, %v673
    %v1086 = vpack.c.b16 %v678, %v674
    %v1087 = vpack.c.b16 %v679, %v675
    %v1088 = vpack.c.b16 %v684, %v680
    %v1089 = vpack.c.b16 %v685, %v681
    %v1090 = vpack.c.b16 %v686, %v682
    %v1091 = vpack.c.b16 %v687, %v683
    %v1092 = vpack.c.b16 %v692, %v688
    %v1093 = vpack.c.b16 %v693, %v689
    %v1094 = vpack.c.b16 %v694, %v690
    %v1095 = vpack.c.b16 %v695, %v691
    %v1096 = vpack.c.b16 %v700, %v696
    %v1097 = vpack.c.b16 %v701, %v697
    %v1098 = vpack.c.b16 %v702, %v698
    %v1099 = vpack.c.b16 %v703, %v699
    %v1100 = vpack.c.b16 %v708, %v704
    %v1101 = vpack.c.b16 %v709, %v705
    %v1102 = vpack.c.b16 %v710, %v706
    %v1103 = vpack.c.b16 %v711, %v707
    %v1104 = vpack.c.b16 %v716, %v712
    %v1105 = vpack.c.b16 %v717, %v713
    %v1106 = vpack.c.b16 %v718, %v714
    %v1107 = vpack.c.b16 %v719, %v715
    %v1108 = vpack.c.b16 %v724, %v720
    %v1109 = vpack.c.b16 %v725, %v721
    %v1110 = vpack.c.b16 %v726, %v722
    %v1111 = vpack.c.b16 %v727, %v723
    %v1112 = vpack.c.b16 %v732, %v728
    %v1113 = vpack.c.b16 %v733, %v729
    %v1114 = vpack.c.b16 %v734, %v730
    %v1115 = vpack.c.b16 %v735, %v731
    %v1116 = vpack.c.b16 %v740, %v736
    %v1117 = vpack.c.b16 %v741, %v737
    %v1118 = vpack.c.b16 %v742, %v738
    %v1119 = vpack.c.b16 %v743, %v739
    %v1120 = vpack.c.b16 %v748, %v744
    %v1121 = vpack.c.b16 %v749, %v745
    %v1122 = vpack.c.b16 %v750, %v746
    %v1123 = vpack.c.b16 %v751, %v747
    %v1124 = vpack.c.b16 %v756, %v752
    %v1125 = vpack.c.b16 %v757, %v753
    %v1126 = vpack.c.b16 %v758, %v754
    %v1127 = vpack.c.b16 %v759, %v755
    %v1128 = vpack.c.b16 %v764, %v760
    %v1129 = vpack.c.b16 %v765, %v761
    %v1130 = vpack.c.b16 %v766, %v762
    %v1131 = vpack.c.b16 %v767, %v763
    %v1132 = vpack.c.b16 %v772, %v768
    %v1133 = vpack.c.b16 %v773, %v769
    %v1134 = vpack.c.b16 %v774, %v770
    %v1135 = vpack.c.b16 %v775, %v771
    %v1136 = vpack.c.b16 %v780, %v776
    %v1137 = vpack.c.b16 %v781, %v777
    %v1138 = vpack.c.b16 %v782, %v778
    %v1139 = vpack.c.b16 %v783, %v779
    %v1140 = vpack.c.b16 %v788, %v784
    %v1141 = vpack.c.b16 %v789, %v785
    %v1142 = vpack.c.b16 %v790, %v786
    %v1143 = vpack.c.b16 %v791, %v787
    %v1144 = vpack.c.b16 %v796, %v792
    %v1145 = vpack.c.b16 %v797, %v793
    %v1146 = vpack.c.b16 %v798, %v794
    %v1147 = vpack.c.b16 %v799, %v795
    %v1148 = vpack.c.b16 %v804, %v800
    %v1149 = vpack.c.b16 %v805, %v801
    %v1150 = vpack.c.b16 %v806, %v802
    %v1151 = vpack.c.b16 %v807, %v803
    %v1152 = vpack.c.b16 %v812, %v808
    %v1153 = vpack.c.b16 %v813, %v809
    %v1154 = vpack.c.b16 %v814, %v810
    %v1155 = vpack.c.b16 %v815, %v811
    %v1156 = vpack.c.b16 %v820, %v816
    %v1157 = vpack.c.b16 %v821, %v817
    %v1158 = vpack.c.b16 %v822, %v818
    %v1159 = vpack.c.b16 %v823, %v819
    %v1160 = vpack.c.b16 %v828, %v824
    %v1161 = vpack.c.b16 %v829, %v825
    %v1162 = vpack.c.b16 %v830, %v826
    %v1163 = vpack.c.b16 %v831, %v827
    %v1164 = vpack.c.b16 %v836, %v832
    %v1165 = vpack.c.b16 %v837, %v833
    %v1166 = vpack.c.b16 %v838, %v834
    %v1167 = vpack.c.b16 %v839, %v835
    %v1168 = vpack.c.b16 %v844, %v840
    %v1169 = vpack.c.b16 %v845, %v841
    %v1170 = vpack.c.b16 %v846, %v842
    %v1171 = vpack.c.b16 %v847, %v843
    %v1172 = vpack.c.b16 %v852, %v848
    %v1173 = vpack.c.b16 %v853, %v849
    %v1174 = vpack.c.b16 %v854, %v850
    %v1175 = vpack.c.b16 %v855, %v851
    %v1176 = vpack.c.b16 %v860, %v856
    %v1177 = vpack.c.b16 %v861, %v857
    %v1178 = vpack.c.b16 %v862, %v858
    %v1179 = vpack.c.b16 %v863, %v859
    %v1180 = vpack.c.b16 %v868, %v864
    %v1181 = vpack.c.b16 %v869, %v865
    %v1182 = vpack.c.b16 %v870, %v866
    %v1183 = vpack.c.b16 %v871, %v867
    %v1184 = vpack.c.b16 %v876, %v872
    %v1185 = vpack.c.b16 %v877, %v873
    %v1186 = vpack.c.b16 %v878, %v874
    %v1187 = vpack.c.b16 %v879, %v875
    %v1188 = vpack.c.b16 %v884, %v880
    %v1189 = vpack.c.b16 %v885, %v881
    %v1190 = vpack.c.b16 %v886, %v882
    %v1191 = vpack.c.b16 %v887, %v883
    %v1192 = vpack.c.b16 %v892, %v888
    %v1193 = vpack.c.b16 %v893, %v889
    %v1194 = vpack.c.b16 %v894, %v890
    %v1195 = vpack.c.b16 %v895, %v891
    %v1196 = vpack.c.b16 %v900, %v896
    %v1197 = vpack.c.b16 %v901, %v897
    %v1198 = vpack.c.b16 %v902, %v898
    %v1199 = vpack.c.b16 %v903, %v899
    %v1200 = vpack.c.b16 %v908, %v904
    %v1201 = vpack.c.b16 %v909, %v905
    %v1202 = vpack.c.b16 %v910, %v906
    %v1203 = vpack.c.b16 %v911, %v907
    %v1204 = vpack.c.b16 %v916, %v912
    %v1205 = vpack.c.b16 %v917, %v913
    %v1206 = vpack.c.b16 %v918, %v914
    %v1207 = vpack.c.b16 %v919, %v915
    %v1208 = vpack.c.b16 %v924, %v920
    %v1209 = vpack.c.b16 %v925, %v921
    %v1210 = vpack.c.b16 %v926, %v922
    %v1211 = vpack.c.b16 %v927, %v923
    %v1212 = vpack.c.b16 %v932, %v928
    %v1213 = vpack.c.b16 %v933, %v929
    %v1214 = vpack.c.b16 %v934, %v930
    %v1215 = vpack.c.b16 %v935, %v931
    %v1216 = vpack.c.b16 %v940, %v936
    %v1217 = vpack.c.b16 %v941, %v937
    %v1218 = vpack.c.b16 %v942, %v938
    %v1219 = vpack.c.b16 %v943, %v939
    %v1220 = vpack.c.b16 %v948, %v944
    %v1221 = vpack.c.b16 %v949, %v945
    %v1222 = vpack.c.b16 %v950, %v946
    %v1223 = vpack.c.b16 %v951, %v947
    %v1224 = vpack.c.b16 %v956, %v952
    %v1225 = vpack.c.b16 %v957, %v953
    %v1226 = vpack.c.b16 %v958, %v954
    %v1227 = vpack.c.b16 %v959, %v955
    %v1228 = vpack.c.b16 %v964, %v960
    %v1229 = vpack.c.b16 %v965, %v961
    %v1230 = vpack.c.b16 %v966, %v962
    %v1231 = vpack.c.b16 %v967, %v963
    %v1232 = vpack.c.b16 %v972, %v968
    %v1233 = vpack.c.b16 %v973, %v969
    %v1234 = vpack.c.b16 %v974, %v970
    %v1235 = vpack.c.b16 %v975, %v971
    %v1236 = vpack.c.b16 %v980, %v976
    %v1237 = vpack.c.b16 %v981, %v977
    %v1238 = vpack.c.b16 %v982, %v978
    %v1239 = vpack.c.b16 %v983, %v979
    %v1240 = vpack.c.b16 %v988, %v984
    %v1241 = vpack.c.b16 %v989, %v985
    %v1242 = vpack.c.b16 %v990, %v986
    %v1243 = vpack.c.b16 %v991, %v987
    %v1244 = vpack.c.b16 %v996, %v992
    %v1245 = vpack.c.b16 %v997, %v993
    %v1246 = vpack.c.b16 %v998, %v994
    %v1247 = vpack.c.b16 %v999, %v995
    %v1248 = vpack.c.b16 %v1004, %v1000
    %v1249 = vpack.c.b16 %v1005, %v1001
    %v1250 = vpack.c.b16 %v1006, %v1002
    %v1251 = vpack.c.b16 %v1007, %v1003
    %v1252 = vpack.c.b16 %v1012, %v1008
    %v1253 = vpack.c.b16 %v1013, %v1009
    %v1254 = vpack.c.b16 %v1014, %v1010
    %v1255 = vpack.c.b16 %v1015, %v1011
    %v1256 = vpack.c.b16 %v1020, %v1016
    %v1257 = vpack.c.b16 %v1021, %v1017
    %v1258 = vpack.c.b16 %v1022, %v1018
    %v1259 = vpack.c.b16 %v1023, %v1019
    %v1260 = vpack.c.b16 %v1028, %v1024
    %v1261 = vpack.c.b16 %v1029, %v1025
    %v1262 = vpack.c.b16 %v1030, %v1026
    %v1263 = vpack.c.b16 %v1031, %v1027
    %v1264 = vpack.c.b16 %v1036, %v1032
    %v1265 = vpack.c.b16 %v1037, %v1033
    %v1266 = vpack.c.b16 %v1038, %v1034
    %v1267 = vpack.c.b16 %v1039, %v1035
    %v1268 = vpack.c.b16 %v1044, %v1040
    %v1269 = vpack.c.b16 %v1045, %v1041
    %v1270 = vpack.c.b16 %v1046, %v1042
    %v1271 = vpack.c.b16 %v1047, %v1043
    %1496 = vmatpush.bf16.msra.mxu0 %v1076
    %1497 = vmatpush.bf16.msra.mxu0 %v1072
    %1498 = vmatpush.bf16.msra.mxu0 %v1068
    %1499 = vmatpush.bf16.msra.mxu0 %v1064
    %1500 = vmatpush.bf16.msra.mxu0 %v1060
    %1501 = vmatpush.bf16.msra.mxu0 %v1056
    %1502 = vmatpush.bf16.msra.mxu0 %v1052
    %1503 = vmatpush.bf16.msra.mxu0 %v1048
    %1504 = vmatmul.bf16.gmra.mxu0 %v362
    %v1505 = vpop.f32.mrf.mxu0
    %v1506 = vadd.f32 0.0, %v1505
    %v1507 = vpop.f32.mrf.mxu0
    %1508 = vdwg.mxu0
    %1509 = vmatpush.bf16.msra.mxu0 %v1108
    %1510 = vmatpush.bf16.msra.mxu0 %v1104
    %1511 = vmatpush.bf16.msra.mxu0 %v1100
    %1512 = vmatpush.bf16.msra.mxu0 %v1096
    %1513 = vmatpush.bf16.msra.mxu0 %v1092
    %1514 = vmatpush.bf16.msra.mxu0 %v1088
    %1515 = vmatpush.bf16.msra.mxu0 %v1084
    %1516 = vmatpush.bf16.msra.mxu0 %v1080
    %1517 = vmatmul.bf16.gmra.mxu0 %v363
    %v1518 = vpop.f32.mrf.mxu0
    %v1519 = vadd.f32 %v1506, %v1518
    %v1520 = vpop.f32.mrf.mxu0
    %1521 = vdwg.mxu0
    %1522 = vmatpush.bf16.msra.mxu0 %v1140
    %1523 = vmatpush.bf16.msra.mxu0 %v1136
    %1524 = vmatpush.bf16.msra.mxu0 %v1132
    %1525 = vmatpush.bf16.msra.mxu0 %v1128
    %1526 = vmatpush.bf16.msra.mxu0 %v1124
    %1527 = vmatpush.bf16.msra.mxu0 %v1120
    %1528 = vmatpush.bf16.msra.mxu0 %v1116
    %1529 = vmatpush.bf16.msra.mxu0 %v1112
    %1530 = vmatmul.bf16.gmra.mxu0 %v364
    %v1531 = vpop.f32.mrf.mxu0
    %v1532 = vadd.f32 %v1519, %v1531
    %v1533 = vpop.f32.mrf.mxu0
    %1534 = vdwg.mxu0
    %1535 = vmatpush.bf16.msra.mxu0 %v1172
    %1536 = vmatpush.bf16.msra.mxu0 %v1168
    %1537 = vmatpush.bf16.msra.mxu0 %v1164
    %1538 = vmatpush.bf16.msra.mxu0 %v1160
    %1539 = vmatpush.bf16.msra.mxu0 %v1156
    %1540 = vmatpush.bf16.msra.mxu0 %v1152
    %1541 = vmatpush.bf16.msra.mxu0 %v1148
    %1542 = vmatpush.bf16.msra.mxu0 %v1144
    %1543 = vmatmul.bf16.gmra.mxu0 %v365
    %v1544 = vpop.f32.mrf.mxu0
    %v1545 = vadd.f32 %v1532, %v1544
    %v1546 = vpop.f32.mrf.mxu0
    %1547 = vdwg.mxu0
    %1548 = vmatpush.bf16.msra.mxu0 %v1204
    %1549 = vmatpush.bf16.msra.mxu0 %v1200
    %1550 = vmatpush.bf16.msra.mxu0 %v1196
    %1551 = vmatpush.bf16.msra.mxu0 %v1192
    %1552 = vmatpush.bf16.msra.mxu0 %v1188
    %1553 = vmatpush.bf16.msra.mxu0 %v1184
    %1554 = vmatpush.bf16.msra.mxu0 %v1180
    %1555 = vmatpush.bf16.msra.mxu0 %v1176
    %1556 = vmatmul.bf16.gmra.mxu0 %v366
    %v1557 = vpop.f32.mrf.mxu0
    %v1558 = vadd.f32 %v1545, %v1557
    %v1559 = vpop.f32.mrf.mxu0
    %1560 = vdwg.mxu0
    %1561 = vmatpush.bf16.msra.mxu0 %v1236
    %1562 = vmatpush.bf16.msra.mxu0 %v1232
    %1563 = vmatpush.bf16.msra.mxu0 %v1228
    %1564 = vmatpush.bf16.msra.mxu0 %v1224
    %1565 = vmatpush.bf16.msra.mxu0 %v1220
    %1566 = vmatpush.bf16.msra.mxu0 %v1216
    %1567 = vmatpush.bf16.msra.mxu0 %v1212
    %1568 = vmatpush.bf16.msra.mxu0 %v1208
    %1569 = vmatmul.bf16.gmra.mxu0 %v367
    %v1570 = vpop.f32.mrf.mxu0
    %v1571 = vadd.f32 %v1558, %v1570
    %v1572 = vpop.f32.mrf.mxu0
    %1573 = vdwg.mxu0
    %1574 = vmatpush.bf16.msra.mxu0 %v1268
    %1575 = vmatpush.bf16.msra.mxu0 %v1264
    %1576 = vmatpush.bf16.msra.mxu0 %v1260
    %1577 = vmatpush.bf16.msra.mxu0 %v1256
    %1578 = vmatpush.bf16.msra.mxu0 %v1252
    %1579 = vmatpush.bf16.msra.mxu0 %v1248
    %1580 = vmatpush.bf16.msra.mxu0 %v1244
    %1581 = vmatpush.bf16.msra.mxu0 %v1240
    %1582 = vmatmul.bf16.gmra.mxu0 %v368
    %v1583 = vpop.f32.mrf.mxu0
    %v1584 = vadd.f32 %v1571, %v1583
    %v1585 = vpop.f32.mrf.mxu0
    %1586 = vdwg.mxu0
    %1587 = vmatpush.bf16.msra.mxu0 %v1077
    %1588 = vmatpush.bf16.msra.mxu0 %v1073
    %1589 = vmatpush.bf16.msra.mxu0 %v1069
    %1590 = vmatpush.bf16.msra.mxu0 %v1065
    %1591 = vmatpush.bf16.msra.mxu0 %v1061
    %1592 = vmatpush.bf16.msra.mxu0 %v1057
    %1593 = vmatpush.bf16.msra.mxu0 %v1053
    %1594 = vmatpush.bf16.msra.mxu0 %v1049
    %1595 = vmatmul.bf16.gmra.mxu0 %v362
    %v1596 = vpop.f32.mrf.mxu0
    %v1597 = vadd.f32 0.0, %v1596
    %v1598 = vpop.f32.mrf.mxu0
    %1599 = vdwg.mxu0
    %1600 = vmatpush.bf16.msra.mxu0 %v1109
    %1601 = vmatpush.bf16.msra.mxu0 %v1105
    %1602 = vmatpush.bf16.msra.mxu0 %v1101
    %1603 = vmatpush.bf16.msra.mxu0 %v1097
    %1604 = vmatpush.bf16.msra.mxu0 %v1093
    %1605 = vmatpush.bf16.msra.mxu0 %v1089
    %1606 = vmatpush.bf16.msra.mxu0 %v1085
    %1607 = vmatpush.bf16.msra.mxu0 %v1081
    %1608 = vmatmul.bf16.gmra.mxu0 %v363
    %v1609 = vpop.f32.mrf.mxu0
    %v1610 = vadd.f32 %v1597, %v1609
    %v1611 = vpop.f32.mrf.mxu0
    %1612 = vdwg.mxu0
    %1613 = vmatpush.bf16.msra.mxu0 %v1141
    %1614 = vmatpush.bf16.msra.mxu0 %v1137
    %1615 = vmatpush.bf16.msra.mxu0 %v1133
    %1616 = vmatpush.bf16.msra.mxu0 %v1129
    %1617 = vmatpush.bf16.msra.mxu0 %v1125
    %1618 = vmatpush.bf16.msra.mxu0 %v1121
    %1619 = vmatpush.bf16.msra.mxu0 %v1117
    %1620 = vmatpush.bf16.msra.mxu0 %v1113
    %1621 = vmatmul.bf16.gmra.mxu0 %v364
    %v1622 = vpop.f32.mrf.mxu0
    %v1623 = vadd.f32 %v1610, %v1622
    %v1624 = vpop.f32.mrf.mxu0
    %1625 = vdwg.mxu0
    %1626 = vmatpush.bf16.msra.mxu0 %v1173
    %1627 = vmatpush.bf16.msra.mxu0 %v1169
    %1628 = vmatpush.bf16.msra.mxu0 %v1165
    %1629 = vmatpush.bf16.msra.mxu0 %v1161
    %1630 = vmatpush.bf16.msra.mxu0 %v1157
    %1631 = vmatpush.bf16.msra.mxu0 %v1153
    %1632 = vmatpush.bf16.msra.mxu0 %v1149
    %1633 = vmatpush.bf16.msra.mxu0 %v1145
    %1634 = vmatmul.bf16.gmra.mxu0 %v365
    %v1635 = vpop.f32.mrf.mxu0
    %v1636 = vadd.f32 %v1623, %v1635
    %v1637 = vpop.f32.mrf.mxu0
    %1638 = vdwg.mxu0
    %1639 = vmatpush.bf16.msra.mxu0 %v1205
    %1640 = vmatpush.bf16.msra.mxu0 %v1201
    %1641 = vmatpush.bf16.msra.mxu0 %v1197
    %1642 = vmatpush.bf16.msra.mxu0 %v1193
    %1643 = vmatpush.bf16.msra.mxu0 %v1189
    %1644 = vmatpush.bf16.msra.mxu0 %v1185
    %1645 = vmatpush.bf16.msra.mxu0 %v1181
    %1646 = vmatpush.bf16.msra.mxu0 %v1177
    %1647 = vmatmul.bf16.gmra.mxu0 %v366
    %v1648 = vpop.f32.mrf.mxu0
    %v1649 = vadd.f32 %v1636, %v1648
    %v1650 = vpop.f32.mrf.mxu0
    %1651 = vdwg.mxu0
    %1652 = vmatpush.bf16.msra.mxu0 %v1237
    %1653 = vmatpush.bf16.msra.mxu0 %v1233
    %1654 = vmatpush.bf16.msra.mxu0 %v1229
    %1655 = vmatpush.bf16.msra.mxu0 %v1225
    %1656 = vmatpush.bf16.msra.mxu0 %v1221
    %1657 = vmatpush.bf16.msra.mxu0 %v1217
    %1658 = vmatpush.bf16.msra.mxu0 %v1213
    %1659 = vmatpush.bf16.msra.mxu0 %v1209
    %1660 = vmatmul.bf16.gmra.mxu0 %v367
    %v1661 = vpop.f32.mrf.mxu0
    %v1662 = vadd.f32 %v1649, %v1661
    %v1663 = vpop.f32.mrf.mxu0
    %1664 = vdwg.mxu0
    %1665 = vmatpush.bf16.msra.mxu0 %v1269
    %1666 = vmatpush.bf16.msra.mxu0 %v1265
    %1667 = vmatpush.bf16.msra.mxu0 %v1261
    %1668 = vmatpush.bf16.msra.mxu0 %v1257
    %1669 = vmatpush.bf16.msra.mxu0 %v1253
    %1670 = vmatpush.bf16.msra.mxu0 %v1249
    %1671 = vmatpush.bf16.msra.mxu0 %v1245
    %1672 = vmatpush.bf16.msra.mxu0 %v1241
    %1673 = vmatmul.bf16.gmra.mxu0 %v368
    %v1674 = vpop.f32.mrf.mxu0
    %v1675 = vadd.f32 %v1662, %v1674
    %v1676 = vpop.f32.mrf.mxu0
    %1677 = vdwg.mxu0
    %1678 = vmatpush.bf16.msra.mxu0 %v1078
    %1679 = vmatpush.bf16.msra.mxu0 %v1074
    %1680 = vmatpush.bf16.msra.mxu0 %v1070
    %1681 = vmatpush.bf16.msra.mxu0 %v1066
    %1682 = vmatpush.bf16.msra.mxu0 %v1062
    %1683 = vmatpush.bf16.msra.mxu0 %v1058
    %1684 = vmatpush.bf16.msra.mxu0 %v1054
    %1685 = vmatpush.bf16.msra.mxu0 %v1050
    %1686 = vmatmul.bf16.gmra.mxu0 %v362
    %v1687 = vpop.f32.mrf.mxu0
    %v1688 = vadd.f32 0.0, %v1687
    %v1689 = vpop.f32.mrf.mxu0
    %1690 = vdwg.mxu0
    %1691 = vmatpush.bf16.msra.mxu0 %v1110
    %1692 = vmatpush.bf16.msra.mxu0 %v1106
    %1693 = vmatpush.bf16.msra.mxu0 %v1102
    %1694 = vmatpush.bf16.msra.mxu0 %v1098
    %1695 = vmatpush.bf16.msra.mxu0 %v1094
    %1696 = vmatpush.bf16.msra.mxu0 %v1090
    %1697 = vmatpush.bf16.msra.mxu0 %v1086
    %1698 = vmatpush.bf16.msra.mxu0 %v1082
    %1699 = vmatmul.bf16.gmra.mxu0 %v363
    %v1700 = vpop.f32.mrf.mxu0
    %v1701 = vadd.f32 %v1688, %v1700
    %v1702 = vpop.f32.mrf.mxu0
    %1703 = vdwg.mxu0
    %1704 = vmatpush.bf16.msra.mxu0 %v1142
    %1705 = vmatpush.bf16.msra.mxu0 %v1138
    %1706 = vmatpush.bf16.msra.mxu0 %v1134
    %1707 = vmatpush.bf16.msra.mxu0 %v1130
    %1708 = vmatpush.bf16.msra.mxu0 %v1126
    %1709 = vmatpush.bf16.msra.mxu0 %v1122
    %1710 = vmatpush.bf16.msra.mxu0 %v1118
    %1711 = vmatpush.bf16.msra.mxu0 %v1114
    %1712 = vmatmul.bf16.gmra.mxu0 %v364
    %v1713 = vpop.f32.mrf.mxu0
    %v1714 = vadd.f32 %v1701, %v1713
    %v1715 = vpop.f32.mrf.mxu0
    %1716 = vdwg.mxu0
    %1717 = vmatpush.bf16.msra.mxu0 %v1174
    %1718 = vmatpush.bf16.msra.mxu0 %v1170
    %1719 = vmatpush.bf16.msra.mxu0 %v1166
    %1720 = vmatpush.bf16.msra.mxu0 %v1162
    %1721 = vmatpush.bf16.msra.mxu0 %v1158
    %1722 = vmatpush.bf16.msra.mxu0 %v1154
    %1723 = vmatpush.bf16.msra.mxu0 %v1150
    %1724 = vmatpush.bf16.msra.mxu0 %v1146
    %1725 = vmatmul.bf16.gmra.mxu0 %v365
    %v1726 = vpop.f32.mrf.mxu0
    %v1727 = vadd.f32 %v1714, %v1726
    %v1728 = vpop.f32.mrf.mxu0
    %1729 = vdwg.mxu0
    %1730 = vmatpush.bf16.msra.mxu0 %v1206
    %1731 = vmatpush.bf16.msra.mxu0 %v1202
    %1732 = vmatpush.bf16.msra.mxu0 %v1198
    %1733 = vmatpush.bf16.msra.mxu0 %v1194
    %1734 = vmatpush.bf16.msra.mxu0 %v1190
    %1735 = vmatpush.bf16.msra.mxu0 %v1186
    %1736 = vmatpush.bf16.msra.mxu0 %v1182
    %1737 = vmatpush.bf16.msra.mxu0 %v1178
    %1738 = vmatmul.bf16.gmra.mxu0 %v366
    %v1739 = vpop.f32.mrf.mxu0
    %v1740 = vadd.f32 %v1727, %v1739
    %v1741 = vpop.f32.mrf.mxu0
    %1742 = vdwg.mxu0
    %1743 = vmatpush.bf16.msra.mxu0 %v1238
    %1744 = vmatpush.bf16.msra.mxu0 %v1234
    %1745 = vmatpush.bf16.msra.mxu0 %v1230
    %1746 = vmatpush.bf16.msra.mxu0 %v1226
    %1747 = vmatpush.bf16.msra.mxu0 %v1222
    %1748 = vmatpush.bf16.msra.mxu0 %v1218
    %1749 = vmatpush.bf16.msra.mxu0 %v1214
    %1750 = vmatpush.bf16.msra.mxu0 %v1210
    %1751 = vmatmul.bf16.gmra.mxu0 %v367
    %v1752 = vpop.f32.mrf.mxu0
    %v1753 = vadd.f32 %v1740, %v1752
    %v1754 = vpop.f32.mrf.mxu0
    %1755 = vdwg.mxu0
    %1756 = vmatpush.bf16.msra.mxu0 %v1270
    %1757 = vmatpush.bf16.msra.mxu0 %v1266
    %1758 = vmatpush.bf16.msra.mxu0 %v1262
    %1759 = vmatpush.bf16.msra.mxu0 %v1258
    %1760 = vmatpush.bf16.msra.mxu0 %v1254
    %1761 = vmatpush.bf16.msra.mxu0 %v1250
    %1762 = vmatpush.bf16.msra.mxu0 %v1246
    %1763 = vmatpush.bf16.msra.mxu0 %v1242
    %1764 = vmatmul.bf16.gmra.mxu0 %v368
    %v1765 = vpop.f32.mrf.mxu0
    %v1766 = vadd.f32 %v1753, %v1765
    %v1767 = vpop.f32.mrf.mxu0
    %1768 = vdwg.mxu0
    %1769 = vmatpush.bf16.msra.mxu0 %v1079
    %1770 = vmatpush.bf16.msra.mxu0 %v1075
    %1771 = vmatpush.bf16.msra.mxu0 %v1071
    %1772 = vmatpush.bf16.msra.mxu0 %v1067
    %1773 = vmatpush.bf16.msra.mxu0 %v1063
    %1774 = vmatpush.bf16.msra.mxu0 %v1059
    %1775 = vmatpush.bf16.msra.mxu0 %v1055
    %1776 = vmatpush.bf16.msra.mxu0 %v1051
    %1777 = vmatmul.bf16.gmra.mxu0 %v362
    %v1778 = vpop.f32.mrf.mxu0
    %v1779 = vadd.f32 0.0, %v1778
    %v1780 = vpop.f32.mrf.mxu0
    %1781 = vdwg.mxu0
    %1782 = vmatpush.bf16.msra.mxu0 %v1111
    %1783 = vmatpush.bf16.msra.mxu0 %v1107
    %1784 = vmatpush.bf16.msra.mxu0 %v1103
    %1785 = vmatpush.bf16.msra.mxu0 %v1099
    %1786 = vmatpush.bf16.msra.mxu0 %v1095
    %1787 = vmatpush.bf16.msra.mxu0 %v1091
    %1788 = vmatpush.bf16.msra.mxu0 %v1087
    %1789 = vmatpush.bf16.msra.mxu0 %v1083
    %1790 = vmatmul.bf16.gmra.mxu0 %v363
    %v1791 = vpop.f32.mrf.mxu0
    %v1792 = vadd.f32 %v1779, %v1791
    %v1793 = vpop.f32.mrf.mxu0
    %1794 = vdwg.mxu0
    %1795 = vmatpush.bf16.msra.mxu0 %v1143
    %1796 = vmatpush.bf16.msra.mxu0 %v1139
    %1797 = vmatpush.bf16.msra.mxu0 %v1135
    %1798 = vmatpush.bf16.msra.mxu0 %v1131
    %1799 = vmatpush.bf16.msra.mxu0 %v1127
    %1800 = vmatpush.bf16.msra.mxu0 %v1123
    %1801 = vmatpush.bf16.msra.mxu0 %v1119
    %1802 = vmatpush.bf16.msra.mxu0 %v1115
    %1803 = vmatmul.bf16.gmra.mxu0 %v364
    %v1804 = vpop.f32.mrf.mxu0
    %v1805 = vadd.f32 %v1792, %v1804
    %v1806 = vpop.f32.mrf.mxu0
    %1807 = vdwg.mxu0
    %1808 = vmatpush.bf16.msra.mxu0 %v1175
    %1809 = vmatpush.bf16.msra.mxu0 %v1171
    %1810 = vmatpush.bf16.msra.mxu0 %v1167
    %1811 = vmatpush.bf16.msra.mxu0 %v1163
    %1812 = vmatpush.bf16.msra.mxu0 %v1159
    %1813 = vmatpush.bf16.msra.mxu0 %v1155
    %1814 = vmatpush.bf16.msra.mxu0 %v1151
    %1815 = vmatpush.bf16.msra.mxu0 %v1147
    %1816 = vmatmul.bf16.gmra.mxu0 %v365
    %v1817 = vpop.f32.mrf.mxu0
    %v1818 = vadd.f32 %v1805, %v1817
    %v1819 = vpop.f32.mrf.mxu0
    %1820 = vdwg.mxu0
    %1821 = vmatpush.bf16.msra.mxu0 %v1207
    %1822 = vmatpush.bf16.msra.mxu0 %v1203
    %1823 = vmatpush.bf16.msra.mxu0 %v1199
    %1824 = vmatpush.bf16.msra.mxu0 %v1195
    %1825 = vmatpush.bf16.msra.mxu0 %v1191
    %1826 = vmatpush.bf16.msra.mxu0 %v1187
    %1827 = vmatpush.bf16.msra.mxu0 %v1183
    %1828 = vmatpush.bf16.msra.mxu0 %v1179
    %1829 = vmatmul.bf16.gmra.mxu0 %v366
    %v1830 = vpop.f32.mrf.mxu0
    %v1831 = vadd.f32 %v1818, %v1830
    %v1832 = vpop.f32.mrf.mxu0
    %1833 = vdwg.mxu0
    %1834 = vmatpush.bf16.msra.mxu0 %v1239
    %1835 = vmatpush.bf16.msra.mxu0 %v1235
    %1836 = vmatpush.bf16.msra.mxu0 %v1231
    %1837 = vmatpush.bf16.msra.mxu0 %v1227
    %1838 = vmatpush.bf16.msra.mxu0 %v1223
    %1839 = vmatpush.bf16.msra.mxu0 %v1219
    %1840 = vmatpush.bf16.msra.mxu0 %v1215
    %1841 = vmatpush.bf16.msra.mxu0 %v1211
    %1842 = vmatmul.bf16.gmra.mxu0 %v367
    %v1843 = vpop.f32.mrf.mxu0
    %v1844 = vadd.f32 %v1831, %v1843
    %v1845 = vpop.f32.mrf.mxu0
    %1846 = vdwg.mxu0
    %1847 = vmatpush.bf16.msra.mxu0 %v1271
    %1848 = vmatpush.bf16.msra.mxu0 %v1267
    %1849 = vmatpush.bf16.msra.mxu0 %v1263
    %1850 = vmatpush.bf16.msra.mxu0 %v1259
    %1851 = vmatpush.bf16.msra.mxu0 %v1255
    %1852 = vmatpush.bf16.msra.mxu0 %v1251
    %1853 = vmatpush.bf16.msra.mxu0 %v1247
    %1854 = vmatpush.bf16.msra.mxu0 %v1243
    %1855 = vmatmul.bf16.gmra.mxu0 %v368
    %v1856 = vpop.f32.mrf.mxu0
    %v1857 = vadd.f32 %v1844, %v1856
    %v1858 = vpop.f32.mrf.mxu0
    %1859 = vdwg.mxu0
    %v1860 = vrot.slane %v1584, 4
    %v1861 = vadd.f32 %v1584, %v1860
    %v1862 = vrot.slane %v1861, 2
    %v1863 = vadd.f32 %v1861, %v1862
    %v1864 = vrot.slane %v1863, 1
    %v1865 = vadd.f32 %v1863, %v1864
    %v1866 = vrot.slane %v1675, 4
    %v1867 = vadd.f32 %v1675, %v1866
    %v1868 = vrot.slane %v1867, 2
    %v1869 = vadd.f32 %v1867, %v1868
    %v1870 = vrot.slane %v1869, 1
    %v1871 = vadd.f32 %v1869, %v1870
    %v1872 = vrot.slane %v1766, 4
    %v1873 = vadd.f32 %v1766, %v1872
    %v1874 = vrot.slane %v1873, 2
    %v1875 = vadd.f32 %v1873, %v1874
    %v1876 = vrot.slane %v1875, 1
    %v1877 = vadd.f32 %v1875, %v1876
    %v1878 = vrot.slane %v1857, 4
    %v1879 = vadd.f32 %v1857, %v1878
    %v1880 = vrot.slane %v1879, 2
    %v1881 = vadd.f32 %v1879, %v1880
    %v1882 = vrot.slane %v1881, 1
    %v1883 = vadd.f32 %v1881, %v1882
    %v1884 = vmul.f32 %v1865, 0.125
    %v1885 = vmul.f32 %v1871, 0.125
    %v1886 = vmul.f32 %v1877, 0.125
    %v1887 = vmul.f32 %v1883, 0.125
    %v1888 = vmul.f32 %v1584, %v1584
    %v1889 = vmul.f32 %v1675, %v1675
    %v1890 = vmul.f32 %v1766, %v1766
    %v1891 = vmul.f32 %v1857, %v1857
    %v1892 = vrot.slane %v1888, 4
    %v1893 = vadd.f32 %v1888, %v1892
    %v1894 = vrot.slane %v1893, 2
    %v1895 = vadd.f32 %v1893, %v1894
    %v1896 = vrot.slane %v1895, 1
    %v1897 = vadd.f32 %v1895, %v1896
    %v1898 = vrot.slane %v1889, 4
    %v1899 = vadd.f32 %v1889, %v1898
    %v1900 = vrot.slane %v1899, 2
    %v1901 = vadd.f32 %v1899, %v1900
    %v1902 = vrot.slane %v1901, 1
    %v1903 = vadd.f32 %v1901, %v1902
    %v1904 = vrot.slane %v1890, 4
    %v1905 = vadd.f32 %v1890, %v1904
    %v1906 = vrot.slane %v1905, 2
    %v1907 = vadd.f32 %v1905, %v1906
    %v1908 = vrot.slane %v1907, 1
    %v1909 = vadd.f32 %v1907, %v1908
    %v1910 = vrot.slane %v1891, 4
    %v1911 = vadd.f32 %v1891, %v1910
    %v1912 = vrot.slane %v1911, 2
    %v1913 = vadd.f32 %v1911, %v1912
    %v1914 = vrot.slane %v1913, 1
    %v1915 = vadd.f32 %v1913, %v1914
    %v1916 = vmul.f32 %v1897, 0.125
    %v1917 = vmul.f32 %v1903, 0.125
    %v1918 = vmul.f32 %v1909, 0.125
    %v1919 = vmul.f32 %v1915, 0.125
    %v1920 = vmul.f32 %v1884, %v1884
    %v1921 = vmul.f32 %v1885, %v1885
    %v1922 = vmul.f32 %v1886, %v1886
    %v1923 = vmul.f32 %v1887, %v1887
    %v1924 = vsub.f32 %v1916, %v1920
    %v1925 = vsub.f32 %v1917, %v1921
    %v1926 = vsub.f32 %v1918, %v1922
    %v1927 = vsub.f32 %v1919, %v1923
    %v1928 = vld [vmem:[%s2] sm:$0xf]
    %v1929 = vadd.f32 %v1924, 1e-05
    %v1930 = vadd.f32 %v1925, 1e-05
    %v1931 = vadd.f32 %v1926, 1e-05
    %v1932 = vadd.f32 %v1927, 1e-05
    %v1933 = vrsqrt.pop %v1929
    %v1934 = vmul.f32 %v1933, %v1929
    %v1935 = vmul.f32 %v1934, %v1933
    %v1936 = vmul.f32 0.5, %v1935
    %v1937 = vsub.f32 1.5, %v1936
    %v1938 = vmul.f32 %v1933, %v1937
    %vm1939 = vweird.f32 %v1929
    %vm1940 = vweird.f32 %v1933
    %vm1941 = vmor %vm1939, %vm1940
    %v1942 = vsel %vm1941, %v1933, %v1938
    %v1943 = vrsqrt.pop %v1930
    %v1944 = vmul.f32 %v1943, %v1930
    %v1945 = vmul.f32 %v1944, %v1943
    %v1946 = vmul.f32 0.5, %v1945
    %v1947 = vsub.f32 1.5, %v1946
    %v1948 = vmul.f32 %v1943, %v1947
    %vm1949 = vweird.f32 %v1930
    %vm1950 = vweird.f32 %v1943
    %vm1951 = vmor %vm1949, %vm1950
    %v1952 = vsel %vm1951, %v1943, %v1948
    %v1953 = vrsqrt.pop %v1931
    %v1954 = vmul.f32 %v1953, %v1931
    %v1955 = vmul.f32 %v1954, %v1953
    %v1956 = vmul.f32 0.5, %v1955
    %v1957 = vsub.f32 1.5, %v1956
    %v1958 = vmul.f32 %v1953, %v1957
    %vm1959 = vweird.f32 %v1931
    %vm1960 = vweird.f32 %v1953
    %vm1961 = vmor %vm1959, %vm1960
    %v1962 = vsel %vm1961, %v1953, %v1958
    %v1963 = vrsqrt.pop %v1932
    %v1964 = vmul.f32 %v1963, %v1932
    %v1965 = vmul.f32 %v1964, %v1963
    %v1966 = vmul.f32 0.5, %v1965
    %v1967 = vsub.f32 1.5, %v1966
    %v1968 = vmul.f32 %v1963, %v1967
    %vm1969 = vweird.f32 %v1932
    %vm1970 = vweird.f32 %v1963
    %vm1971 = vmor %vm1969, %vm1970
    %v1972 = vsel %vm1971, %v1963, %v1968
    %v1977 = vrot.slane %v1952, 7
    %v1978 = vrot.slane %v1962, 6
    %v1979 = vrot.slane %v1972, 5
    %vm1980 = vcmask 1040384
    %v1981 = vsel %vm1980, %v1942, %v1977
    %vm1982 = vcmask 1042434
    %v1983 = vsel %vm1982, %v1978, %v1979
    %vm1984 = vcmask 1041408
    %v1985 = vsel %vm1984, %v1981, %v1983
    %v1987 = vmul.f32 %v1928, %v1985
    %v1988 = vld [vmem:[%s3] sm:$0xf]
    %v1990 = vperm.slane %v1987, 0
    %v1991 = vperm.slane %v1987, 1
    %v1992 = vperm.slane %v1987, 2
    %v1993 = vperm.slane %v1987, 3
    %v1998 = vmul.f32 %v1884, %v1990
    %v1999 = vmul.f32 %v1885, %v1991
    %v2000 = vmul.f32 %v1886, %v1992
    %v2001 = vmul.f32 %v1887, %v1993
    %v2006 = vrot.slane %v1999, 7
    %v2007 = vrot.slane %v2000, 6
    %v2008 = vrot.slane %v2001, 5
    %v2009 = vsel %vm1980, %v1998, %v2006
    %v2010 = vsel %vm1982, %v2007, %v2008
    %v2011 = vsel %vm1984, %v2009, %v2010
    %v2013 = vsub.f32 %v1988, %v2011
    %v2014 = vmul.f32 %v1584, %v1990
    %v2015 = vmul.f32 %v1675, %v1991
    %v2016 = vmul.f32 %v1766, %v1992
    %v2017 = vmul.f32 %v1857, %v1993
    %v2019 = vperm.slane %v2013, 0
    %v2020 = vperm.slane %v2013, 1
    %v2021 = vperm.slane %v2013, 2
    %v2022 = vperm.slane %v2013, 3
    %v2027 = vadd.f32 %v2014, %v2019
    %v2028 = vadd.f32 %v2015, %v2020
    %v2029 = vadd.f32 %v2016, %v2021
    %v2030 = vadd.f32 %v2017, %v2022
    %v2031 = vmax.f32 %v2027, 0.0
    %v2032 = vmax.f32 %v2028, 0.0
    %v2033 = vmax.f32 %v2029, 0.0
    %v2034 = vmax.f32 %v2030, 0.0
    %v2035 = vpack.c.bf16 %v2031, %v2031
    %v2036 = vpack.c.bf16 %v2032, %v2032
    %v2037 = vpack.c.bf16 %v2033, %v2033
    %v2038 = vpack.c.bf16 %v2034, %v2034
    %v2039 = vld [vmem:[%s4] sm:$0xff]
    %v2040 = vld [vmem:[%s4 + $0x8] sm:$0xff]
    %v2041 = vld [vmem:[%s4 + $0x10] sm:$0xff]
    %v2042 = vld [vmem:[%s4 + $0x18] sm:$0xff]
    %v2043 = vld [vmem:[%s4 + $0x20] sm:$0xff]
    %v2044 = vld [vmem:[%s4 + $0x28] sm:$0xff]
    %v2045 = vld [vmem:[%s4 + $0x30] sm:$0xff]
    %v2046 = vld [vmem:[%s4 + $0x38] sm:$0xff]
    %v2047 = vld [vmem:[%s4 + $0x40] sm:$0xff]
    %v2048 = vld [vmem:[%s4 + $0x48] sm:$0xff]
    %v2049 = vld [vmem:[%s4 + $0x50] sm:$0xff]
    %v2050 = vld [vmem:[%s4 + $0x58] sm:$0xff]
    %v2051 = vld [vmem:[%s4 + $0x60] sm:$0xff]
    %v2052 = vld [vmem:[%s4 + $0x68] sm:$0xff]
    %v2053 = vld [vmem:[%s4 + $0x70] sm:$0xff]
    %v2054 = vld [vmem:[%s4 + $0x78] sm:$0xff]
    %v2055 = vld [vmem:[%s4 + $0x80] sm:$0xff]
    %v2056 = vld [vmem:[%s4 + $0x88] sm:$0xff]
    %v2057 = vld [vmem:[%s4 + $0x90] sm:$0xff]
    %v2058 = vld [vmem:[%s4 + $0x98] sm:$0xff]
    %v2059 = vld [vmem:[%s4 + $0xa0] sm:$0xff]
    %v2060 = vld [vmem:[%s4 + $0xa8] sm:$0xff]
    %v2061 = vld [vmem:[%s4 + $0xb0] sm:$0xff]
    %v2062 = vld [vmem:[%s4 + $0xb8] sm:$0xff]
    %v2063 = vld [vmem:[%s4 + $0xc0] sm:$0xff]
    %v2064 = vld [vmem:[%s4 + $0xc8] sm:$0xff]
    %v2065 = vld [vmem:[%s4 + $0xd0] sm:$0xff]
    %v2066 = vld [vmem:[%s4 + $0xd8] sm:$0xff]
    %v2067 = vld [vmem:[%s4 + $0xe0] sm:$0xff]
    %v2068 = vld [vmem:[%s4 + $0xe8] sm:$0xff]
    %v2069 = vld [vmem:[%s4 + $0xf0] sm:$0xff]
    %v2070 = vld [vmem:[%s4 + $0xf8] sm:$0xff]
    %v2071 = vld [vmem:[%s4 + $0x100] sm:$0xff]
    %v2072 = vld [vmem:[%s4 + $0x108] sm:$0xff]
    %v2073 = vld [vmem:[%s4 + $0x110] sm:$0xff]
    %v2074 = vld [vmem:[%s4 + $0x118] sm:$0xff]
    %v2075 = vld [vmem:[%s4 + $0x120] sm:$0xff]
    %v2076 = vld [vmem:[%s4 + $0x128] sm:$0xff]
    %v2077 = vld [vmem:[%s4 + $0x130] sm:$0xff]
    %v2078 = vld [vmem:[%s4 + $0x138] sm:$0xff]
    %v2079 = vld [vmem:[%s4 + $0x140] sm:$0xff]
    %v2080 = vld [vmem:[%s4 + $0x148] sm:$0xff]
    %v2081 = vld [vmem:[%s4 + $0x150] sm:$0xff]
    %v2082 = vld [vmem:[%s4 + $0x158] sm:$0xff]
    %v2083 = vld [vmem:[%s4 + $0x160] sm:$0xff]
    %v2084 = vld [vmem:[%s4 + $0x168] sm:$0xff]
    %v2085 = vld [vmem:[%s4 + $0x170] sm:$0xff]
    %v2086 = vld [vmem:[%s4 + $0x178] sm:$0xff]
    %v2087 = vld [vmem:[%s4 + $0x180] sm:$0xff]
    %v2088 = vld [vmem:[%s4 + $0x188] sm:$0xff]
    %v2089 = vld [vmem:[%s4 + $0x190] sm:$0xff]
    %v2090 = vld [vmem:[%s4 + $0x198] sm:$0xff]
    %v2091 = vld [vmem:[%s4 + $0x1a0] sm:$0xff]
    %v2092 = vld [vmem:[%s4 + $0x1a8] sm:$0xff]
    %v2093 = vld [vmem:[%s4 + $0x1b0] sm:$0xff]
    %v2094 = vld [vmem:[%s4 + $0x1b8] sm:$0xff]
    %v2095 = vld [vmem:[%s4 + $0x1c0] sm:$0xff]
    %v2096 = vld [vmem:[%s4 + $0x1c8] sm:$0xff]
    %v2097 = vld [vmem:[%s4 + $0x1d0] sm:$0xff]
    %v2098 = vld [vmem:[%s4 + $0x1d8] sm:$0xff]
    %v2099 = vld [vmem:[%s4 + $0x1e0] sm:$0xff]
    %v2100 = vld [vmem:[%s4 + $0x1e8] sm:$0xff]
    %v2101 = vld [vmem:[%s4 + $0x1f0] sm:$0xff]
    %v2102 = vld [vmem:[%s4 + $0x1f8] sm:$0xff]
    %v2103 = vld [vmem:[%s4 + $0x200] sm:$0xff]
    %v2104 = vld [vmem:[%s4 + $0x208] sm:$0xff]
    %v2105 = vld [vmem:[%s4 + $0x210] sm:$0xff]
    %v2106 = vld [vmem:[%s4 + $0x218] sm:$0xff]
    %v2107 = vld [vmem:[%s4 + $0x220] sm:$0xff]
    %v2108 = vld [vmem:[%s4 + $0x228] sm:$0xff]
    %v2109 = vld [vmem:[%s4 + $0x230] sm:$0xff]
    %v2110 = vld [vmem:[%s4 + $0x238] sm:$0xff]
    %v2111 = vld [vmem:[%s4 + $0x240] sm:$0xff]
    %v2112 = vld [vmem:[%s4 + $0x248] sm:$0xff]
    %v2113 = vld [vmem:[%s4 + $0x250] sm:$0xff]
    %v2114 = vld [vmem:[%s4 + $0x258] sm:$0xff]
    %v2115 = vld [vmem:[%s4 + $0x260] sm:$0xff]
    %v2116 = vld [vmem:[%s4 + $0x268] sm:$0xff]
    %v2117 = vld [vmem:[%s4 + $0x270] sm:$0xff]
    %v2118 = vld [vmem:[%s4 + $0x278] sm:$0xff]
    %v2119 = vld [vmem:[%s4 + $0x280] sm:$0xff]
    %v2120 = vld [vmem:[%s4 + $0x288] sm:$0xff]
    %v2121 = vld [vmem:[%s4 + $0x290] sm:$0xff]
    %v2122 = vld [vmem:[%s4 + $0x298] sm:$0xff]
    %v2123 = vld [vmem:[%s4 + $0x2a0] sm:$0xff]
    %v2124 = vld [vmem:[%s4 + $0x2a8] sm:$0xff]
    %v2125 = vld [vmem:[%s4 + $0x2b0] sm:$0xff]
    %v2126 = vld [vmem:[%s4 + $0x2b8] sm:$0xff]
    %v2127 = vld [vmem:[%s4 + $0x2c0] sm:$0xff]
    %v2128 = vld [vmem:[%s4 + $0x2c8] sm:$0xff]
    %v2129 = vld [vmem:[%s4 + $0x2d0] sm:$0xff]
    %v2130 = vld [vmem:[%s4 + $0x2d8] sm:$0xff]
    %v2131 = vld [vmem:[%s4 + $0x2e0] sm:$0xff]
    %v2132 = vld [vmem:[%s4 + $0x2e8] sm:$0xff]
    %v2133 = vld [vmem:[%s4 + $0x2f0] sm:$0xff]
    %v2134 = vld [vmem:[%s4 + $0x2f8] sm:$0xff]
    %v2135 = vld [vmem:[%s4 + $0x300] sm:$0xff]
    %v2136 = vld [vmem:[%s4 + $0x308] sm:$0xff]
    %v2137 = vld [vmem:[%s4 + $0x310] sm:$0xff]
    %v2138 = vld [vmem:[%s4 + $0x318] sm:$0xff]
    %v2139 = vld [vmem:[%s4 + $0x320] sm:$0xff]
    %v2140 = vld [vmem:[%s4 + $0x328] sm:$0xff]
    %v2141 = vld [vmem:[%s4 + $0x330] sm:$0xff]
    %v2142 = vld [vmem:[%s4 + $0x338] sm:$0xff]
    %v2143 = vld [vmem:[%s4 + $0x340] sm:$0xff]
    %v2144 = vld [vmem:[%s4 + $0x348] sm:$0xff]
    %v2145 = vld [vmem:[%s4 + $0x350] sm:$0xff]
    %v2146 = vld [vmem:[%s4 + $0x358] sm:$0xff]
    %v2147 = vld [vmem:[%s4 + $0x360] sm:$0xff]
    %v2148 = vld [vmem:[%s4 + $0x368] sm:$0xff]
    %v2149 = vld [vmem:[%s4 + $0x370] sm:$0xff]
    %v2150 = vld [vmem:[%s4 + $0x378] sm:$0xff]
    %v2151 = vld [vmem:[%s4 + $0x380] sm:$0xff]
    %v2152 = vld [vmem:[%s4 + $0x388] sm:$0xff]
    %v2153 = vld [vmem:[%s4 + $0x390] sm:$0xff]
    %v2154 = vld [vmem:[%s4 + $0x398] sm:$0xff]
    %v2155 = vld [vmem:[%s4 + $0x3a0] sm:$0xff]
    %v2156 = vld [vmem:[%s4 + $0x3a8] sm:$0xff]
    %v2157 = vld [vmem:[%s4 + $0x3b0] sm:$0xff]
    %v2158 = vld [vmem:[%s4 + $0x3b8] sm:$0xff]
    %v2159 = vld [vmem:[%s4 + $0x3c0] sm:$0xff]
    %v2160 = vld [vmem:[%s4 + $0x3c8] sm:$0xff]
    %v2161 = vld [vmem:[%s4 + $0x3d0] sm:$0xff]
    %v2162 = vld [vmem:[%s4 + $0x3d8] sm:$0xff]
    %v2163 = vld [vmem:[%s4 + $0x3e0] sm:$0xff]
    %v2164 = vld [vmem:[%s4 + $0x3e8] sm:$0xff]
    %v2165 = vld [vmem:[%s4 + $0x3f0] sm:$0xff]
    %v2166 = vld [vmem:[%s4 + $0x3f8] sm:$0xff]
    %v2295 = vunpack.c.l.b16 %v2039
    %v2296 = vunpack.c.h.b16 %v2039
    %v2297 = vunpack.c.l.b16 %v2040
    %v2298 = vunpack.c.h.b16 %v2040
    %v2299 = vunpack.c.l.b16 %v2041
    %v2300 = vunpack.c.h.b16 %v2041
    %v2301 = vunpack.c.l.b16 %v2042
    %v2302 = vunpack.c.h.b16 %v2042
    %v2303 = vunpack.c.l.b16 %v2043
    %v2304 = vunpack.c.h.b16 %v2043
    %v2305 = vunpack.c.l.b16 %v2044
    %v2306 = vunpack.c.h.b16 %v2044
    %v2307 = vunpack.c.l.b16 %v2045
    %v2308 = vunpack.c.h.b16 %v2045
    %v2309 = vunpack.c.l.b16 %v2046
    %v2310 = vunpack.c.h.b16 %v2046
    %v2311 = vunpack.c.l.b16 %v2047
    %v2312 = vunpack.c.h.b16 %v2047
    %v2313 = vunpack.c.l.b16 %v2048
    %v2314 = vunpack.c.h.b16 %v2048
    %v2315 = vunpack.c.l.b16 %v2049
    %v2316 = vunpack.c.h.b16 %v2049
    %v2317 = vunpack.c.l.b16 %v2050
    %v2318 = vunpack.c.h.b16 %v2050
    %v2319 = vunpack.c.l.b16 %v2051
    %v2320 = vunpack.c.h.b16 %v2051
    %v2321 = vunpack.c.l.b16 %v2052
    %v2322 = vunpack.c.h.b16 %v2052
    %v2323 = vunpack.c.l.b16 %v2053
    %v2324 = vunpack.c.h.b16 %v2053
    %v2325 = vunpack.c.l.b16 %v2054
    %v2326 = vunpack.c.h.b16 %v2054
    %v2327 = vunpack.c.l.b16 %v2055
    %v2328 = vunpack.c.h.b16 %v2055
    %v2329 = vunpack.c.l.b16 %v2056
    %v2330 = vunpack.c.h.b16 %v2056
    %v2331 = vunpack.c.l.b16 %v2057
    %v2332 = vunpack.c.h.b16 %v2057
    %v2333 = vunpack.c.l.b16 %v2058
    %v2334 = vunpack.c.h.b16 %v2058
    %v2335 = vunpack.c.l.b16 %v2059
    %v2336 = vunpack.c.h.b16 %v2059
    %v2337 = vunpack.c.l.b16 %v2060
    %v2338 = vunpack.c.h.b16 %v2060
    %v2339 = vunpack.c.l.b16 %v2061
    %v2340 = vunpack.c.h.b16 %v2061
    %v2341 = vunpack.c.l.b16 %v2062
    %v2342 = vunpack.c.h.b16 %v2062
    %v2343 = vunpack.c.l.b16 %v2063
    %v2344 = vunpack.c.h.b16 %v2063
    %v2345 = vunpack.c.l.b16 %v2064
    %v2346 = vunpack.c.h.b16 %v2064
    %v2347 = vunpack.c.l.b16 %v2065
    %v2348 = vunpack.c.h.b16 %v2065
    %v2349 = vunpack.c.l.b16 %v2066
    %v2350 = vunpack.c.h.b16 %v2066
    %v2351 = vunpack.c.l.b16 %v2067
    %v2352 = vunpack.c.h.b16 %v2067
    %v2353 = vunpack.c.l.b16 %v2068
    %v2354 = vunpack.c.h.b16 %v2068
    %v2355 = vunpack.c.l.b16 %v2069
    %v2356 = vunpack.c.h.b16 %v2069
    %v2357 = vunpack.c.l.b16 %v2070
    %v2358 = vunpack.c.h.b16 %v2070
    %v2359 = vunpack.c.l.b16 %v2071
    %v2360 = vunpack.c.h.b16 %v2071
    %v2361 = vunpack.c.l.b16 %v2072
    %v2362 = vunpack.c.h.b16 %v2072
    %v2363 = vunpack.c.l.b16 %v2073
    %v2364 = vunpack.c.h.b16 %v2073
    %v2365 = vunpack.c.l.b16 %v2074
    %v2366 = vunpack.c.h.b16 %v2074
    %v2367 = vunpack.c.l.b16 %v2075
    %v2368 = vunpack.c.h.b16 %v2075
    %v2369 = vunpack.c.l.b16 %v2076
    %v2370 = vunpack.c.h.b16 %v2076
    %v2371 = vunpack.c.l.b16 %v2077
    %v2372 = vunpack.c.h.b16 %v2077
    %v2373 = vunpack.c.l.b16 %v2078
    %v2374 = vunpack.c.h.b16 %v2078
    %v2375 = vunpack.c.l.b16 %v2079
    %v2376 = vunpack.c.h.b16 %v2079
    %v2377 = vunpack.c.l.b16 %v2080
    %v2378 = vunpack.c.h.b16 %v2080
    %v2379 = vunpack.c.l.b16 %v2081
    %v2380 = vunpack.c.h.b16 %v2081
    %v2381 = vunpack.c.l.b16 %v2082
    %v2382 = vunpack.c.h.b16 %v2082
    %v2383 = vunpack.c.l.b16 %v2083
    %v2384 = vunpack.c.h.b16 %v2083
    %v2385 = vunpack.c.l.b16 %v2084
    %v2386 = vunpack.c.h.b16 %v2084
    %v2387 = vunpack.c.l.b16 %v2085
    %v2388 = vunpack.c.h.b16 %v2085
    %v2389 = vunpack.c.l.b16 %v2086
    %v2390 = vunpack.c.h.b16 %v2086
    %v2391 = vunpack.c.l.b16 %v2087
    %v2392 = vunpack.c.h.b16 %v2087
    %v2393 = vunpack.c.l.b16 %v2088
    %v2394 = vunpack.c.h.b16 %v2088
    %v2395 = vunpack.c.l.b16 %v2089
    %v2396 = vunpack.c.h.b16 %v2089
    %v2397 = vunpack.c.l.b16 %v2090
    %v2398 = vunpack.c.h.b16 %v2090
    %v2399 = vunpack.c.l.b16 %v2091
    %v2400 = vunpack.c.h.b16 %v2091
    %v2401 = vunpack.c.l.b16 %v2092
    %v2402 = vunpack.c.h.b16 %v2092
    %v2403 = vunpack.c.l.b16 %v2093
    %v2404 = vunpack.c.h.b16 %v2093
    %v2405 = vunpack.c.l.b16 %v2094
    %v2406 = vunpack.c.h.b16 %v2094
    %v2407 = vunpack.c.l.b16 %v2095
    %v2408 = vunpack.c.h.b16 %v2095
    %v2409 = vunpack.c.l.b16 %v2096
    %v2410 = vunpack.c.h.b16 %v2096
    %v2411 = vunpack.c.l.b16 %v2097
    %v2412 = vunpack.c.h.b16 %v2097
    %v2413 = vunpack.c.l.b16 %v2098
    %v2414 = vunpack.c.h.b16 %v2098
    %v2415 = vunpack.c.l.b16 %v2099
    %v2416 = vunpack.c.h.b16 %v2099
    %v2417 = vunpack.c.l.b16 %v2100
    %v2418 = vunpack.c.h.b16 %v2100
    %v2419 = vunpack.c.l.b16 %v2101
    %v2420 = vunpack.c.h.b16 %v2101
    %v2421 = vunpack.c.l.b16 %v2102
    %v2422 = vunpack.c.h.b16 %v2102
    %v2423 = vunpack.c.l.b16 %v2103
    %v2424 = vunpack.c.h.b16 %v2103
    %v2425 = vunpack.c.l.b16 %v2104
    %v2426 = vunpack.c.h.b16 %v2104
    %v2427 = vunpack.c.l.b16 %v2105
    %v2428 = vunpack.c.h.b16 %v2105
    %v2429 = vunpack.c.l.b16 %v2106
    %v2430 = vunpack.c.h.b16 %v2106
    %v2431 = vunpack.c.l.b16 %v2107
    %v2432 = vunpack.c.h.b16 %v2107
    %v2433 = vunpack.c.l.b16 %v2108
    %v2434 = vunpack.c.h.b16 %v2108
    %v2435 = vunpack.c.l.b16 %v2109
    %v2436 = vunpack.c.h.b16 %v2109
    %v2437 = vunpack.c.l.b16 %v2110
    %v2438 = vunpack.c.h.b16 %v2110
    %v2439 = vunpack.c.l.b16 %v2111
    %v2440 = vunpack.c.h.b16 %v2111
    %v2441 = vunpack.c.l.b16 %v2112
    %v2442 = vunpack.c.h.b16 %v2112
    %v2443 = vunpack.c.l.b16 %v2113
    %v2444 = vunpack.c.h.b16 %v2113
    %v2445 = vunpack.c.l.b16 %v2114
    %v2446 = vunpack.c.h.b16 %v2114
    %v2447 = vunpack.c.l.b16 %v2115
    %v2448 = vunpack.c.h.b16 %v2115
    %v2449 = vunpack.c.l.b16 %v2116
    %v2450 = vunpack.c.h.b16 %v2116
    %v2451 = vunpack.c.l.b16 %v2117
    %v2452 = vunpack.c.h.b16 %v2117
    %v2453 = vunpack.c.l.b16 %v2118
    %v2454 = vunpack.c.h.b16 %v2118
    %v2455 = vunpack.c.l.b16 %v2119
    %v2456 = vunpack.c.h.b16 %v2119
    %v2457 = vunpack.c.l.b16 %v2120
    %v2458 = vunpack.c.h.b16 %v2120
    %v2459 = vunpack.c.l.b16 %v2121
    %v2460 = vunpack.c.h.b16 %v2121
    %v2461 = vunpack.c.l.b16 %v2122
    %v2462 = vunpack.c.h.b16 %v2122
    %v2463 = vunpack.c.l.b16 %v2123
    %v2464 = vunpack.c.h.b16 %v2123
    %v2465 = vunpack.c.l.b16 %v2124
    %v2466 = vunpack.c.h.b16 %v2124
    %v2467 = vunpack.c.l.b16 %v2125
    %v2468 = vunpack.c.h.b16 %v2125
    %v2469 = vunpack.c.l.b16 %v2126
    %v2470 = vunpack.c.h.b16 %v2126
    %v2471 = vunpack.c.l.b16 %v2127
    %v2472 = vunpack.c.h.b16 %v2127
    %v2473 = vunpack.c.l.b16 %v2128
    %v2474 = vunpack.c.h.b16 %v2128
    %v2475 = vunpack.c.l.b16 %v2129
    %v2476 = vunpack.c.h.b16 %v2129
    %v2477 = vunpack.c.l.b16 %v2130
    %v2478 = vunpack.c.h.b16 %v2130
    %v2479 = vunpack.c.l.b16 %v2131
    %v2480 = vunpack.c.h.b16 %v2131
    %v2481 = vunpack.c.l.b16 %v2132
    %v2482 = vunpack.c.h.b16 %v2132
    %v2483 = vunpack.c.l.b16 %v2133
    %v2484 = vunpack.c.h.b16 %v2133
    %v2485 = vunpack.c.l.b16 %v2134
    %v2486 = vunpack.c.h.b16 %v2134
    %v2487 = vunpack.c.l.b16 %v2135
    %v2488 = vunpack.c.h.b16 %v2135
    %v2489 = vunpack.c.l.b16 %v2136
    %v2490 = vunpack.c.h.b16 %v2136
    %v2491 = vunpack.c.l.b16 %v2137
    %v2492 = vunpack.c.h.b16 %v2137
    %v2493 = vunpack.c.l.b16 %v2138
    %v2494 = vunpack.c.h.b16 %v2138
    %v2495 = vunpack.c.l.b16 %v2139
    %v2496 = vunpack.c.h.b16 %v2139
    %v2497 = vunpack.c.l.b16 %v2140
    %v2498 = vunpack.c.h.b16 %v2140
    %v2499 = vunpack.c.l.b16 %v2141
    %v2500 = vunpack.c.h.b16 %v2141
    %v2501 = vunpack.c.l.b16 %v2142
    %v2502 = vunpack.c.h.b16 %v2142
    %v2503 = vunpack.c.l.b16 %v2143
    %v2504 = vunpack.c.h.b16 %v2143
    %v2505 = vunpack.c.l.b16 %v2144
    %v2506 = vunpack.c.h.b16 %v2144
    %v2507 = vunpack.c.l.b16 %v2145
    %v2508 = vunpack.c.h.b16 %v2145
    %v2509 = vunpack.c.l.b16 %v2146
    %v2510 = vunpack.c.h.b16 %v2146
    %v2511 = vunpack.c.l.b16 %v2147
    %v2512 = vunpack.c.h.b16 %v2147
    %v2513 = vunpack.c.l.b16 %v2148
    %v2514 = vunpack.c.h.b16 %v2148
    %v2515 = vunpack.c.l.b16 %v2149
    %v2516 = vunpack.c.h.b16 %v2149
    %v2517 = vunpack.c.l.b16 %v2150
    %v2518 = vunpack.c.h.b16 %v2150
    %v2519 = vunpack.c.l.b16 %v2151
    %v2520 = vunpack.c.h.b16 %v2151
    %v2521 = vunpack.c.l.b16 %v2152
    %v2522 = vunpack.c.h.b16 %v2152
    %v2523 = vunpack.c.l.b16 %v2153
    %v2524 = vunpack.c.h.b16 %v2153
    %v2525 = vunpack.c.l.b16 %v2154
    %v2526 = vunpack.c.h.b16 %v2154
    %v2527 = vunpack.c.l.b16 %v2155
    %v2528 = vunpack.c.h.b16 %v2155
    %v2529 = vunpack.c.l.b16 %v2156
    %v2530 = vunpack.c.h.b16 %v2156
    %v2531 = vunpack.c.l.b16 %v2157
    %v2532 = vunpack.c.h.b16 %v2157
    %v2533 = vunpack.c.l.b16 %v2158
    %v2534 = vunpack.c.h.b16 %v2158
    %v2535 = vunpack.c.l.b16 %v2159
    %v2536 = vunpack.c.h.b16 %v2159
    %v2537 = vunpack.c.l.b16 %v2160
    %v2538 = vunpack.c.h.b16 %v2160
    %v2539 = vunpack.c.l.b16 %v2161
    %v2540 = vunpack.c.h.b16 %v2161
    %v2541 = vunpack.c.l.b16 %v2162
    %v2542 = vunpack.c.h.b16 %v2162
    %v2543 = vunpack.c.l.b16 %v2163
    %v2544 = vunpack.c.h.b16 %v2163
    %v2545 = vunpack.c.l.b16 %v2164
    %v2546 = vunpack.c.h.b16 %v2164
    %v2547 = vunpack.c.l.b16 %v2165
    %v2548 = vunpack.c.h.b16 %v2165
    %v2549 = vunpack.c.l.b16 %v2166
    %v2550 = vunpack.c.h.b16 %v2166
    %v2551 = vpack.c.b16 %v2299, %v2295
    %v2552 = vpack.c.b16 %v2300, %v2296
    %v2553 = vpack.c.b16 %v2301, %v2297
    %v2554 = vpack.c.b16 %v2302, %v2298
    %v2555 = vpack.c.b16 %v2307, %v2303
    %v2556 = vpack.c.b16 %v2308, %v2304
    %v2557 = vpack.c.b16 %v2309, %v2305
    %v2558 = vpack.c.b16 %v2310, %v2306
    %v2559 = vpack.c.b16 %v2315, %v2311
    %v2560 = vpack.c.b16 %v2316, %v2312
    %v2561 = vpack.c.b16 %v2317, %v2313
    %v2562 = vpack.c.b16 %v2318, %v2314
    %v2563 = vpack.c.b16 %v2323, %v2319
    %v2564 = vpack.c.b16 %v2324, %v2320
    %v2565 = vpack.c.b16 %v2325, %v2321
    %v2566 = vpack.c.b16 %v2326, %v2322
    %v2567 = vpack.c.b16 %v2331, %v2327
    %v2568 = vpack.c.b16 %v2332, %v2328
    %v2569 = vpack.c.b16 %v2333, %v2329
    %v2570 = vpack.c.b16 %v2334, %v2330
    %v2571 = vpack.c.b16 %v2339, %v2335
    %v2572 = vpack.c.b16 %v2340, %v2336
    %v2573 = vpack.c.b16 %v2341, %v2337
    %v2574 = vpack.c.b16 %v2342, %v2338
    %v2575 = vpack.c.b16 %v2347, %v2343
    %v2576 = vpack.c.b16 %v2348, %v2344
    %v2577 = vpack.c.b16 %v2349, %v2345
    %v2578 = vpack.c.b16 %v2350, %v2346
    %v2579 = vpack.c.b16 %v2355, %v2351
    %v2580 = vpack.c.b16 %v2356, %v2352
    %v2581 = vpack.c.b16 %v2357, %v2353
    %v2582 = vpack.c.b16 %v2358, %v2354
    %v2583 = vpack.c.b16 %v2363, %v2359
    %v2584 = vpack.c.b16 %v2364, %v2360
    %v2585 = vpack.c.b16 %v2365, %v2361
    %v2586 = vpack.c.b16 %v2366, %v2362
    %v2587 = vpack.c.b16 %v2371, %v2367
    %v2588 = vpack.c.b16 %v2372, %v2368
    %v2589 = vpack.c.b16 %v2373, %v2369
    %v2590 = vpack.c.b16 %v2374, %v2370
    %v2591 = vpack.c.b16 %v2379, %v2375
    %v2592 = vpack.c.b16 %v2380, %v2376
    %v2593 = vpack.c.b16 %v2381, %v2377
    %v2594 = vpack.c.b16 %v2382, %v2378
    %v2595 = vpack.c.b16 %v2387, %v2383
    %v2596 = vpack.c.b16 %v2388, %v2384
    %v2597 = vpack.c.b16 %v2389, %v2385
    %v2598 = vpack.c.b16 %v2390, %v2386
    %v2599 = vpack.c.b16 %v2395, %v2391
    %v2600 = vpack.c.b16 %v2396, %v2392
    %v2601 = vpack.c.b16 %v2397, %v2393
    %v2602 = vpack.c.b16 %v2398, %v2394
    %v2603 = vpack.c.b16 %v2403, %v2399
    %v2604 = vpack.c.b16 %v2404, %v2400
    %v2605 = vpack.c.b16 %v2405, %v2401
    %v2606 = vpack.c.b16 %v2406, %v2402
    %v2607 = vpack.c.b16 %v2411, %v2407
    %v2608 = vpack.c.b16 %v2412, %v2408
    %v2609 = vpack.c.b16 %v2413, %v2409
    %v2610 = vpack.c.b16 %v2414, %v2410
    %v2611 = vpack.c.b16 %v2419, %v2415
    %v2612 = vpack.c.b16 %v2420, %v2416
    %v2613 = vpack.c.b16 %v2421, %v2417
    %v2614 = vpack.c.b16 %v2422, %v2418
    %v2615 = vpack.c.b16 %v2427, %v2423
    %v2616 = vpack.c.b16 %v2428, %v2424
    %v2617 = vpack.c.b16 %v2429, %v2425
    %v2618 = vpack.c.b16 %v2430, %v2426
    %v2619 = vpack.c.b16 %v2435, %v2431
    %v2620 = vpack.c.b16 %v2436, %v2432
    %v2621 = vpack.c.b16 %v2437, %v2433
    %v2622 = vpack.c.b16 %v2438, %v2434
    %v2623 = vpack.c.b16 %v2443, %v2439
    %v2624 = vpack.c.b16 %v2444, %v2440
    %v2625 = vpack.c.b16 %v2445, %v2441
    %v2626 = vpack.c.b16 %v2446, %v2442
    %v2627 = vpack.c.b16 %v2451, %v2447
    %v2628 = vpack.c.b16 %v2452, %v2448
    %v2629 = vpack.c.b16 %v2453, %v2449
    %v2630 = vpack.c.b16 %v2454, %v2450
    %v2631 = vpack.c.b16 %v2459, %v2455
    %v2632 = vpack.c.b16 %v2460, %v2456
    %v2633 = vpack.c.b16 %v2461, %v2457
    %v2634 = vpack.c.b16 %v2462, %v2458
    %v2635 = vpack.c.b16 %v2467, %v2463
    %v2636 = vpack.c.b16 %v2468, %v2464
    %v2637 = vpack.c.b16 %v2469, %v2465
    %v2638 = vpack.c.b16 %v2470, %v2466
    %v2639 = vpack.c.b16 %v2475, %v2471
    %v2640 = vpack.c.b16 %v2476, %v2472
    %v2641 = vpack.c.b16 %v2477, %v2473
    %v2642 = vpack.c.b16 %v2478, %v2474
    %v2643 = vpack.c.b16 %v2483, %v2479
    %v2644 = vpack.c.b16 %v2484, %v2480
    %v2645 = vpack.c.b16 %v2485, %v2481
    %v2646 = vpack.c.b16 %v2486, %v2482
    %v2647 = vpack.c.b16 %v2491, %v2487
    %v2648 = vpack.c.b16 %v2492, %v2488
    %v2649 = vpack.c.b16 %v2493, %v2489
    %v2650 = vpack.c.b16 %v2494, %v2490
    %v2651 = vpack.c.b16 %v2499, %v2495
    %v2652 = vpack.c.b16 %v2500, %v2496
    %v2653 = vpack.c.b16 %v2501, %v2497
    %v2654 = vpack.c.b16 %v2502, %v2498
    %v2655 = vpack.c.b16 %v2507, %v2503
    %v2656 = vpack.c.b16 %v2508, %v2504
    %v2657 = vpack.c.b16 %v2509, %v2505
    %v2658 = vpack.c.b16 %v2510, %v2506
    %v2659 = vpack.c.b16 %v2515, %v2511
    %v2660 = vpack.c.b16 %v2516, %v2512
    %v2661 = vpack.c.b16 %v2517, %v2513
    %v2662 = vpack.c.b16 %v2518, %v2514
    %v2663 = vpack.c.b16 %v2523, %v2519
    %v2664 = vpack.c.b16 %v2524, %v2520
    %v2665 = vpack.c.b16 %v2525, %v2521
    %v2666 = vpack.c.b16 %v2526, %v2522
    %v2667 = vpack.c.b16 %v2531, %v2527
    %v2668 = vpack.c.b16 %v2532, %v2528
    %v2669 = vpack.c.b16 %v2533, %v2529
    %v2670 = vpack.c.b16 %v2534, %v2530
    %v2671 = vpack.c.b16 %v2539, %v2535
    %v2672 = vpack.c.b16 %v2540, %v2536
    %v2673 = vpack.c.b16 %v2541, %v2537
    %v2674 = vpack.c.b16 %v2542, %v2538
    %v2675 = vpack.c.b16 %v2547, %v2543
    %v2676 = vpack.c.b16 %v2548, %v2544
    %v2677 = vpack.c.b16 %v2549, %v2545
    %v2678 = vpack.c.b16 %v2550, %v2546
    %2807 = vmatpush.bf16.msra.mxu0 %v2579
    %2808 = vmatpush.bf16.msra.mxu0 %v2575
    %2809 = vmatpush.bf16.msra.mxu0 %v2571
    %2810 = vmatpush.bf16.msra.mxu0 %v2567
    %2811 = vmatpush.bf16.msra.mxu0 %v2563
    %2812 = vmatpush.bf16.msra.mxu0 %v2559
    %2813 = vmatpush.bf16.msra.mxu0 %v2555
    %2814 = vmatpush.bf16.msra.mxu0 %v2551
    %2815 = vmatmul.bf16.gmra.mxu0 %v2035
    %v2816 = vpop.f32.mrf.mxu0
    %v2817 = vadd.f32 0.0, %v2816
    %v2818 = vpop.f32.mrf.mxu0
    %2819 = vdwg.mxu0
    %2820 = vmatpush.bf16.msra.mxu0 %v2611
    %2821 = vmatpush.bf16.msra.mxu0 %v2607
    %2822 = vmatpush.bf16.msra.mxu0 %v2603
    %2823 = vmatpush.bf16.msra.mxu0 %v2599
    %2824 = vmatpush.bf16.msra.mxu0 %v2595
    %2825 = vmatpush.bf16.msra.mxu0 %v2591
    %2826 = vmatpush.bf16.msra.mxu0 %v2587
    %2827 = vmatpush.bf16.msra.mxu0 %v2583
    %2828 = vmatmul.bf16.gmra.mxu0 %v2036
    %v2829 = vpop.f32.mrf.mxu0
    %v2830 = vadd.f32 %v2817, %v2829
    %v2831 = vpop.f32.mrf.mxu0
    %2832 = vdwg.mxu0
    %2833 = vmatpush.bf16.msra.mxu0 %v2643
    %2834 = vmatpush.bf16.msra.mxu0 %v2639
    %2835 = vmatpush.bf16.msra.mxu0 %v2635
    %2836 = vmatpush.bf16.msra.mxu0 %v2631
    %2837 = vmatpush.bf16.msra.mxu0 %v2627
    %2838 = vmatpush.bf16.msra.mxu0 %v2623
    %2839 = vmatpush.bf16.msra.mxu0 %v2619
    %2840 = vmatpush.bf16.msra.mxu0 %v2615
    %2841 = vmatmul.bf16.gmra.mxu0 %v2037
    %v2842 = vpop.f32.mrf.mxu0
    %v2843 = vadd.f32 %v2830, %v2842
    %v2844 = vpop.f32.mrf.mxu0
    %2845 = vdwg.mxu0
    %2846 = vmatpush.bf16.msra.mxu0 %v2675
    %2847 = vmatpush.bf16.msra.mxu0 %v2671
    %2848 = vmatpush.bf16.msra.mxu0 %v2667
    %2849 = vmatpush.bf16.msra.mxu0 %v2663
    %2850 = vmatpush.bf16.msra.mxu0 %v2659
    %2851 = vmatpush.bf16.msra.mxu0 %v2655
    %2852 = vmatpush.bf16.msra.mxu0 %v2651
    %2853 = vmatpush.bf16.msra.mxu0 %v2647
    %2854 = vmatmul.bf16.gmra.mxu0 %v2038
    %v2855 = vpop.f32.mrf.mxu0
    %v2856 = vadd.f32 %v2843, %v2855
    %v2857 = vpop.f32.mrf.mxu0
    %2858 = vdwg.mxu0
    %2859 = vmatpush.bf16.msra.mxu0 %v2580
    %2860 = vmatpush.bf16.msra.mxu0 %v2576
    %2861 = vmatpush.bf16.msra.mxu0 %v2572
    %2862 = vmatpush.bf16.msra.mxu0 %v2568
    %2863 = vmatpush.bf16.msra.mxu0 %v2564
    %2864 = vmatpush.bf16.msra.mxu0 %v2560
    %2865 = vmatpush.bf16.msra.mxu0 %v2556
    %2866 = vmatpush.bf16.msra.mxu0 %v2552
    %2867 = vmatmul.bf16.gmra.mxu0 %v2035
    %v2868 = vpop.f32.mrf.mxu0
    %v2869 = vadd.f32 0.0, %v2868
    %v2870 = vpop.f32.mrf.mxu0
    %2871 = vdwg.mxu0
    %2872 = vmatpush.bf16.msra.mxu0 %v2612
    %2873 = vmatpush.bf16.msra.mxu0 %v2608
    %2874 = vmatpush.bf16.msra.mxu0 %v2604
    %2875 = vmatpush.bf16.msra.mxu0 %v2600
    %2876 = vmatpush.bf16.msra.mxu0 %v2596
    %2877 = vmatpush.bf16.msra.mxu0 %v2592
    %2878 = vmatpush.bf16.msra.mxu0 %v2588
    %2879 = vmatpush.bf16.msra.mxu0 %v2584
    %2880 = vmatmul.bf16.gmra.mxu0 %v2036
    %v2881 = vpop.f32.mrf.mxu0
    %v2882 = vadd.f32 %v2869, %v2881
    %v2883 = vpop.f32.mrf.mxu0
    %2884 = vdwg.mxu0
    %2885 = vmatpush.bf16.msra.mxu0 %v2644
    %2886 = vmatpush.bf16.msra.mxu0 %v2640
    %2887 = vmatpush.bf16.msra.mxu0 %v2636
    %2888 = vmatpush.bf16.msra.mxu0 %v2632
    %2889 = vmatpush.bf16.msra.mxu0 %v2628
    %2890 = vmatpush.bf16.msra.mxu0 %v2624
    %2891 = vmatpush.bf16.msra.mxu0 %v2620
    %2892 = vmatpush.bf16.msra.mxu0 %v2616
    %2893 = vmatmul.bf16.gmra.mxu0 %v2037
    %v2894 = vpop.f32.mrf.mxu0
    %v2895 = vadd.f32 %v2882, %v2894
    %v2896 = vpop.f32.mrf.mxu0
    %2897 = vdwg.mxu0
    %2898 = vmatpush.bf16.msra.mxu0 %v2676
    %2899 = vmatpush.bf16.msra.mxu0 %v2672
    %2900 = vmatpush.bf16.msra.mxu0 %v2668
    %2901 = vmatpush.bf16.msra.mxu0 %v2664
    %2902 = vmatpush.bf16.msra.mxu0 %v2660
    %2903 = vmatpush.bf16.msra.mxu0 %v2656
    %2904 = vmatpush.bf16.msra.mxu0 %v2652
    %2905 = vmatpush.bf16.msra.mxu0 %v2648
    %2906 = vmatmul.bf16.gmra.mxu0 %v2038
    %v2907 = vpop.f32.mrf.mxu0
    %v2908 = vadd.f32 %v2895, %v2907
    %v2909 = vpop.f32.mrf.mxu0
    %2910 = vdwg.mxu0
    %2911 = vmatpush.bf16.msra.mxu0 %v2581
    %2912 = vmatpush.bf16.msra.mxu0 %v2577
    %2913 = vmatpush.bf16.msra.mxu0 %v2573
    %2914 = vmatpush.bf16.msra.mxu0 %v2569
    %2915 = vmatpush.bf16.msra.mxu0 %v2565
    %2916 = vmatpush.bf16.msra.mxu0 %v2561
    %2917 = vmatpush.bf16.msra.mxu0 %v2557
    %2918 = vmatpush.bf16.msra.mxu0 %v2553
    %2919 = vmatmul.bf16.gmra.mxu0 %v2035
    %v2920 = vpop.f32.mrf.mxu0
    %v2921 = vadd.f32 0.0, %v2920
    %v2922 = vpop.f32.mrf.mxu0
    %2923 = vdwg.mxu0
    %2924 = vmatpush.bf16.msra.mxu0 %v2613
    %2925 = vmatpush.bf16.msra.mxu0 %v2609
    %2926 = vmatpush.bf16.msra.mxu0 %v2605
    %2927 = vmatpush.bf16.msra.mxu0 %v2601
    %2928 = vmatpush.bf16.msra.mxu0 %v2597
    %2929 = vmatpush.bf16.msra.mxu0 %v2593
    %2930 = vmatpush.bf16.msra.mxu0 %v2589
    %2931 = vmatpush.bf16.msra.mxu0 %v2585
    %2932 = vmatmul.bf16.gmra.mxu0 %v2036
    %v2933 = vpop.f32.mrf.mxu0
    %v2934 = vadd.f32 %v2921, %v2933
    %v2935 = vpop.f32.mrf.mxu0
    %2936 = vdwg.mxu0
    %2937 = vmatpush.bf16.msra.mxu0 %v2645
    %2938 = vmatpush.bf16.msra.mxu0 %v2641
    %2939 = vmatpush.bf16.msra.mxu0 %v2637
    %2940 = vmatpush.bf16.msra.mxu0 %v2633
    %2941 = vmatpush.bf16.msra.mxu0 %v2629
    %2942 = vmatpush.bf16.msra.mxu0 %v2625
    %2943 = vmatpush.bf16.msra.mxu0 %v2621
    %2944 = vmatpush.bf16.msra.mxu0 %v2617
    %2945 = vmatmul.bf16.gmra.mxu0 %v2037
    %v2946 = vpop.f32.mrf.mxu0
    %v2947 = vadd.f32 %v2934, %v2946
    %v2948 = vpop.f32.mrf.mxu0
    %2949 = vdwg.mxu0
    %2950 = vmatpush.bf16.msra.mxu0 %v2677
    %2951 = vmatpush.bf16.msra.mxu0 %v2673
    %2952 = vmatpush.bf16.msra.mxu0 %v2669
    %2953 = vmatpush.bf16.msra.mxu0 %v2665
    %2954 = vmatpush.bf16.msra.mxu0 %v2661
    %2955 = vmatpush.bf16.msra.mxu0 %v2657
    %2956 = vmatpush.bf16.msra.mxu0 %v2653
    %2957 = vmatpush.bf16.msra.mxu0 %v2649
    %2958 = vmatmul.bf16.gmra.mxu0 %v2038
    %v2959 = vpop.f32.mrf.mxu0
    %v2960 = vadd.f32 %v2947, %v2959
    %v2961 = vpop.f32.mrf.mxu0
    %2962 = vdwg.mxu0
    %2963 = vmatpush.bf16.msra.mxu0 %v2582
    %2964 = vmatpush.bf16.msra.mxu0 %v2578
    %2965 = vmatpush.bf16.msra.mxu0 %v2574
    %2966 = vmatpush.bf16.msra.mxu0 %v2570
    %2967 = vmatpush.bf16.msra.mxu0 %v2566
    %2968 = vmatpush.bf16.msra.mxu0 %v2562
    %2969 = vmatpush.bf16.msra.mxu0 %v2558
    %2970 = vmatpush.bf16.msra.mxu0 %v2554
    %2971 = vmatmul.bf16.gmra.mxu0 %v2035
    %v2972 = vpop.f32.mrf.mxu0
    %v2973 = vadd.f32 0.0, %v2972
    %v2974 = vpop.f32.mrf.mxu0
    %2975 = vdwg.mxu0
    %2976 = vmatpush.bf16.msra.mxu0 %v2614
    %2977 = vmatpush.bf16.msra.mxu0 %v2610
    %2978 = vmatpush.bf16.msra.mxu0 %v2606
    %2979 = vmatpush.bf16.msra.mxu0 %v2602
    %2980 = vmatpush.bf16.msra.mxu0 %v2598
    %2981 = vmatpush.bf16.msra.mxu0 %v2594
    %2982 = vmatpush.bf16.msra.mxu0 %v2590
    %2983 = vmatpush.bf16.msra.mxu0 %v2586
    %2984 = vmatmul.bf16.gmra.mxu0 %v2036
    %v2985 = vpop.f32.mrf.mxu0
    %v2986 = vadd.f32 %v2973, %v2985
    %v2987 = vpop.f32.mrf.mxu0
    %2988 = vdwg.mxu0
    %2989 = vmatpush.bf16.msra.mxu0 %v2646
    %2990 = vmatpush.bf16.msra.mxu0 %v2642
    %2991 = vmatpush.bf16.msra.mxu0 %v2638
    %2992 = vmatpush.bf16.msra.mxu0 %v2634
    %2993 = vmatpush.bf16.msra.mxu0 %v2630
    %2994 = vmatpush.bf16.msra.mxu0 %v2626
    %2995 = vmatpush.bf16.msra.mxu0 %v2622
    %2996 = vmatpush.bf16.msra.mxu0 %v2618
    %2997 = vmatmul.bf16.gmra.mxu0 %v2037
    %v2998 = vpop.f32.mrf.mxu0
    %v2999 = vadd.f32 %v2986, %v2998
    %v3000 = vpop.f32.mrf.mxu0
    %3001 = vdwg.mxu0
    %3002 = vmatpush.bf16.msra.mxu0 %v2678
    %3003 = vmatpush.bf16.msra.mxu0 %v2674
    %3004 = vmatpush.bf16.msra.mxu0 %v2670
    %3005 = vmatpush.bf16.msra.mxu0 %v2666
    %3006 = vmatpush.bf16.msra.mxu0 %v2662
    %3007 = vmatpush.bf16.msra.mxu0 %v2658
    %3008 = vmatpush.bf16.msra.mxu0 %v2654
    %3009 = vmatpush.bf16.msra.mxu0 %v2650
    %3010 = vmatmul.bf16.gmra.mxu0 %v2038
    %v3011 = vpop.f32.mrf.mxu0
    %v3012 = vadd.f32 %v2999, %v3011
    %v3013 = vpop.f32.mrf.mxu0
    %3014 = vdwg.mxu0
    %v3015 = vrot.slane %v2856, 4
    %v3016 = vadd.f32 %v2856, %v3015
    %v3017 = vrot.slane %v3016, 2
    %v3018 = vadd.f32 %v3016, %v3017
    %v3019 = vrot.slane %v3018, 1
    %v3020 = vadd.f32 %v3018, %v3019
    %v3021 = vrot.slane %v2908, 4
    %v3022 = vadd.f32 %v2908, %v3021
    %v3023 = vrot.slane %v3022, 2
    %v3024 = vadd.f32 %v3022, %v3023
    %v3025 = vrot.slane %v3024, 1
    %v3026 = vadd.f32 %v3024, %v3025
    %v3027 = vrot.slane %v2960, 4
    %v3028 = vadd.f32 %v2960, %v3027
    %v3029 = vrot.slane %v3028, 2
    %v3030 = vadd.f32 %v3028, %v3029
    %v3031 = vrot.slane %v3030, 1
    %v3032 = vadd.f32 %v3030, %v3031
    %v3033 = vrot.slane %v3012, 4
    %v3034 = vadd.f32 %v3012, %v3033
    %v3035 = vrot.slane %v3034, 2
    %v3036 = vadd.f32 %v3034, %v3035
    %v3037 = vrot.slane %v3036, 1
    %v3038 = vadd.f32 %v3036, %v3037
    %v3039 = vmul.f32 %v3020, 0.125
    %v3040 = vmul.f32 %v3026, 0.125
    %v3041 = vmul.f32 %v3032, 0.125
    %v3042 = vmul.f32 %v3038, 0.125
    %v3043 = vmul.f32 %v2856, %v2856
    %v3044 = vmul.f32 %v2908, %v2908
    %v3045 = vmul.f32 %v2960, %v2960
    %v3046 = vmul.f32 %v3012, %v3012
    %v3047 = vrot.slane %v3043, 4
    %v3048 = vadd.f32 %v3043, %v3047
    %v3049 = vrot.slane %v3048, 2
    %v3050 = vadd.f32 %v3048, %v3049
    %v3051 = vrot.slane %v3050, 1
    %v3052 = vadd.f32 %v3050, %v3051
    %v3053 = vrot.slane %v3044, 4
    %v3054 = vadd.f32 %v3044, %v3053
    %v3055 = vrot.slane %v3054, 2
    %v3056 = vadd.f32 %v3054, %v3055
    %v3057 = vrot.slane %v3056, 1
    %v3058 = vadd.f32 %v3056, %v3057
    %v3059 = vrot.slane %v3045, 4
    %v3060 = vadd.f32 %v3045, %v3059
    %v3061 = vrot.slane %v3060, 2
    %v3062 = vadd.f32 %v3060, %v3061
    %v3063 = vrot.slane %v3062, 1
    %v3064 = vadd.f32 %v3062, %v3063
    %v3065 = vrot.slane %v3046, 4
    %v3066 = vadd.f32 %v3046, %v3065
    %v3067 = vrot.slane %v3066, 2
    %v3068 = vadd.f32 %v3066, %v3067
    %v3069 = vrot.slane %v3068, 1
    %v3070 = vadd.f32 %v3068, %v3069
    %v3071 = vmul.f32 %v3052, 0.125
    %v3072 = vmul.f32 %v3058, 0.125
    %v3073 = vmul.f32 %v3064, 0.125
    %v3074 = vmul.f32 %v3070, 0.125
    %v3075 = vmul.f32 %v3039, %v3039
    %v3076 = vmul.f32 %v3040, %v3040
    %v3077 = vmul.f32 %v3041, %v3041
    %v3078 = vmul.f32 %v3042, %v3042
    %v3079 = vsub.f32 %v3071, %v3075
    %v3080 = vsub.f32 %v3072, %v3076
    %v3081 = vsub.f32 %v3073, %v3077
    %v3082 = vsub.f32 %v3074, %v3078
    %v3083 = vld [vmem:[%s5] sm:$0xf]
    %v3084 = vadd.f32 %v3079, 1e-05
    %v3085 = vadd.f32 %v3080, 1e-05
    %v3086 = vadd.f32 %v3081, 1e-05
    %v3087 = vadd.f32 %v3082, 1e-05
    %v3088 = vrsqrt.pop %v3084
    %v3089 = vmul.f32 %v3088, %v3084
    %v3090 = vmul.f32 %v3089, %v3088
    %v3091 = vmul.f32 0.5, %v3090
    %v3092 = vsub.f32 1.5, %v3091
    %v3093 = vmul.f32 %v3088, %v3092
    %vm3094 = vweird.f32 %v3084
    %vm3095 = vweird.f32 %v3088
    %vm3096 = vmor %vm3094, %vm3095
    %v3097 = vsel %vm3096, %v3088, %v3093
    %v3098 = vrsqrt.pop %v3085
    %v3099 = vmul.f32 %v3098, %v3085
    %v3100 = vmul.f32 %v3099, %v3098
    %v3101 = vmul.f32 0.5, %v3100
    %v3102 = vsub.f32 1.5, %v3101
    %v3103 = vmul.f32 %v3098, %v3102
    %vm3104 = vweird.f32 %v3085
    %vm3105 = vweird.f32 %v3098
    %vm3106 = vmor %vm3104, %vm3105
    %v3107 = vsel %vm3106, %v3098, %v3103
    %v3108 = vrsqrt.pop %v3086
    %v3109 = vmul.f32 %v3108, %v3086
    %v3110 = vmul.f32 %v3109, %v3108
    %v3111 = vmul.f32 0.5, %v3110
    %v3112 = vsub.f32 1.5, %v3111
    %v3113 = vmul.f32 %v3108, %v3112
    %vm3114 = vweird.f32 %v3086
    %vm3115 = vweird.f32 %v3108
    %vm3116 = vmor %vm3114, %vm3115
    %v3117 = vsel %vm3116, %v3108, %v3113
    %v3118 = vrsqrt.pop %v3087
    %v3119 = vmul.f32 %v3118, %v3087
    %v3120 = vmul.f32 %v3119, %v3118
    %v3121 = vmul.f32 0.5, %v3120
    %v3122 = vsub.f32 1.5, %v3121
    %v3123 = vmul.f32 %v3118, %v3122
    %vm3124 = vweird.f32 %v3087
    %vm3125 = vweird.f32 %v3118
    %vm3126 = vmor %vm3124, %vm3125
    %v3127 = vsel %vm3126, %v3118, %v3123
    %v3132 = vrot.slane %v3107, 7
    %v3133 = vrot.slane %v3117, 6
    %v3134 = vrot.slane %v3127, 5
    %v3135 = vsel %vm1980, %v3097, %v3132
    %v3136 = vsel %vm1982, %v3133, %v3134
    %v3137 = vsel %vm1984, %v3135, %v3136
    %v3139 = vmul.f32 %v3083, %v3137
    %v3140 = vld [vmem:[%s6] sm:$0xf]
    %v3142 = vperm.slane %v3139, 0
    %v3143 = vperm.slane %v3139, 1
    %v3144 = vperm.slane %v3139, 2
    %v3145 = vperm.slane %v3139, 3
    %v3150 = vmul.f32 %v3039, %v3142
    %v3151 = vmul.f32 %v3040, %v3143
    %v3152 = vmul.f32 %v3041, %v3144
    %v3153 = vmul.f32 %v3042, %v3145
    %v3158 = vrot.slane %v3151, 7
    %v3159 = vrot.slane %v3152, 6
    %v3160 = vrot.slane %v3153, 5
    %v3161 = vsel %vm1980, %v3150, %v3158
    %v3162 = vsel %vm1982, %v3159, %v3160
    %v3163 = vsel %vm1984, %v3161, %v3162
    %v3165 = vsub.f32 %v3140, %v3163
    %v3166 = vmul.f32 %v2856, %v3142
    %v3167 = vmul.f32 %v2908, %v3143
    %v3168 = vmul.f32 %v2960, %v3144
    %v3169 = vmul.f32 %v3012, %v3145
    %v3171 = vperm.slane %v3165, 0
    %v3172 = vperm.slane %v3165, 1
    %v3173 = vperm.slane %v3165, 2
    %v3174 = vperm.slane %v3165, 3
    %v3179 = vadd.f32 %v3166, %v3171
    %v3180 = vadd.f32 %v3167, %v3172
    %v3181 = vadd.f32 %v3168, %v3173
    %v3182 = vadd.f32 %v3169, %v3174
    %v3183 = vmax.f32 %v3179, 0.0
    %v3184 = vmax.f32 %v3180, 0.0
    %v3185 = vmax.f32 %v3181, 0.0
    %v3186 = vmax.f32 %v3182, 0.0
    %v3187 = vpack.c.bf16 %v3183, %v3183
    %v3188 = vpack.c.bf16 %v3184, %v3184
    %v3189 = vpack.c.bf16 %v3185, %v3185
    %v3190 = vpack.c.bf16 %v3186, %v3186
    %v3191 = vld [vmem:[#allocation5] sm:$0xff]
    %v3192 = vld [vmem:[#allocation5 + $0x8] sm:$0xff]
    %v3193 = vld [vmem:[#allocation5 + $0x10] sm:$0xff]
    %v3194 = vld [vmem:[#allocation5 + $0x18] sm:$0xff]
    %v3195 = vld [vmem:[#allocation5 + $0x20] sm:$0xff]
    %v3196 = vld [vmem:[#allocation5 + $0x28] sm:$0xff]
    %v3197 = vld [vmem:[#allocation5 + $0x30] sm:$0xff]
    %v3198 = vld [vmem:[#allocation5 + $0x38] sm:$0xff]
    %v3199 = vld [vmem:[#allocation5 + $0x40] sm:$0xff]
    %v3200 = vld [vmem:[#allocation5 + $0x48] sm:$0xff]
    %v3201 = vld [vmem:[#allocation5 + $0x50] sm:$0xff]
    %v3202 = vld [vmem:[#allocation5 + $0x58] sm:$0xff]
    %v3203 = vld [vmem:[#allocation5 + $0x60] sm:$0xff]
    %v3204 = vld [vmem:[#allocation5 + $0x68] sm:$0xff]
    %v3205 = vld [vmem:[#allocation5 + $0x70] sm:$0xff]
    %v3206 = vld [vmem:[#allocation5 + $0x78] sm:$0xff]
    %v3207 = vld [vmem:[#allocation5 + $0x80] sm:$0xff]
    %v3208 = vld [vmem:[#allocation5 + $0x88] sm:$0xff]
    %v3209 = vld [vmem:[#allocation5 + $0x90] sm:$0xff]
    %v3210 = vld [vmem:[#allocation5 + $0x98] sm:$0xff]
    %v3211 = vld [vmem:[#allocation5 + $0xa0] sm:$0xff]
    %v3212 = vld [vmem:[#allocation5 + $0xa8] sm:$0xff]
    %v3213 = vld [vmem:[#allocation5 + $0xb0] sm:$0xff]
    %v3214 = vld [vmem:[#allocation5 + $0xb8] sm:$0xff]
    %v3215 = vld [vmem:[#allocation5 + $0xc0] sm:$0xff]
    %v3216 = vld [vmem:[#allocation5 + $0xc8] sm:$0xff]
    %v3217 = vld [vmem:[#allocation5 + $0xd0] sm:$0xff]
    %v3218 = vld [vmem:[#allocation5 + $0xd8] sm:$0xff]
    %v3219 = vld [vmem:[#allocation5 + $0xe0] sm:$0xff]
    %v3220 = vld [vmem:[#allocation5 + $0xe8] sm:$0xff]
    %v3221 = vld [vmem:[#allocation5 + $0xf0] sm:$0xff]
    %v3222 = vld [vmem:[#allocation5 + $0xf8] sm:$0xff]
    %v3223 = vld [vmem:[#allocation5 + $0x100] sm:$0xff]
    %v3224 = vld [vmem:[#allocation5 + $0x108] sm:$0xff]
    %v3225 = vld [vmem:[#allocation5 + $0x110] sm:$0xff]
    %v3226 = vld [vmem:[#allocation5 + $0x118] sm:$0xff]
    %v3227 = vld [vmem:[#allocation5 + $0x120] sm:$0xff]
    %v3228 = vld [vmem:[#allocation5 + $0x128] sm:$0xff]
    %v3229 = vld [vmem:[#allocation5 + $0x130] sm:$0xff]
    %v3230 = vld [vmem:[#allocation5 + $0x138] sm:$0xff]
    %v3231 = vld [vmem:[#allocation5 + $0x140] sm:$0xff]
    %v3232 = vld [vmem:[#allocation5 + $0x148] sm:$0xff]
    %v3233 = vld [vmem:[#allocation5 + $0x150] sm:$0xff]
    %v3234 = vld [vmem:[#allocation5 + $0x158] sm:$0xff]
    %v3235 = vld [vmem:[#allocation5 + $0x160] sm:$0xff]
    %v3236 = vld [vmem:[#allocation5 + $0x168] sm:$0xff]
    %v3237 = vld [vmem:[#allocation5 + $0x170] sm:$0xff]
    %v3238 = vld [vmem:[#allocation5 + $0x178] sm:$0xff]
    %v3239 = vld [vmem:[#allocation5 + $0x180] sm:$0xff]
    %v3240 = vld [vmem:[#allocation5 + $0x188] sm:$0xff]
    %v3241 = vld [vmem:[#allocation5 + $0x190] sm:$0xff]
    %v3242 = vld [vmem:[#allocation5 + $0x198] sm:$0xff]
    %v3243 = vld [vmem:[#allocation5 + $0x1a0] sm:$0xff]
    %v3244 = vld [vmem:[#allocation5 + $0x1a8] sm:$0xff]
    %v3245 = vld [vmem:[#allocation5 + $0x1b0] sm:$0xff]
    %v3246 = vld [vmem:[#allocation5 + $0x1b8] sm:$0xff]
    %v3247 = vld [vmem:[#allocation5 + $0x1c0] sm:$0xff]
    %v3248 = vld [vmem:[#allocation5 + $0x1c8] sm:$0xff]
    %v3249 = vld [vmem:[#allocation5 + $0x1d0] sm:$0xff]
    %v3250 = vld [vmem:[#allocation5 + $0x1d8] sm:$0xff]
    %v3251 = vld [vmem:[#allocation5 + $0x1e0] sm:$0xff]
    %v3252 = vld [vmem:[#allocation5 + $0x1e8] sm:$0xff]
    %v3253 = vld [vmem:[#allocation5 + $0x1f0] sm:$0xff]
    %v3254 = vld [vmem:[#allocation5 + $0x1f8] sm:$0xff]
    %v3255 = vld [vmem:[#allocation5 + $0x200] sm:$0xff]
    %v3256 = vld [vmem:[#allocation5 + $0x208] sm:$0xff]
    %v3257 = vld [vmem:[#allocation5 + $0x210] sm:$0xff]
    %v3258 = vld [vmem:[#allocation5 + $0x218] sm:$0xff]
    %v3259 = vld [vmem:[#allocation5 + $0x220] sm:$0xff]
    %v3260 = vld [vmem:[#allocation5 + $0x228] sm:$0xff]
    %v3261 = vld [vmem:[#allocation5 + $0x230] sm:$0xff]
    %v3262 = vld [vmem:[#allocation5 + $0x238] sm:$0xff]
    %v3263 = vld [vmem:[#allocation5 + $0x240] sm:$0xff]
    %v3264 = vld [vmem:[#allocation5 + $0x248] sm:$0xff]
    %v3265 = vld [vmem:[#allocation5 + $0x250] sm:$0xff]
    %v3266 = vld [vmem:[#allocation5 + $0x258] sm:$0xff]
    %v3267 = vld [vmem:[#allocation5 + $0x260] sm:$0xff]
    %v3268 = vld [vmem:[#allocation5 + $0x268] sm:$0xff]
    %v3269 = vld [vmem:[#allocation5 + $0x270] sm:$0xff]
    %v3270 = vld [vmem:[#allocation5 + $0x278] sm:$0xff]
    %v3271 = vld [vmem:[#allocation5 + $0x280] sm:$0xff]
    %v3272 = vld [vmem:[#allocation5 + $0x288] sm:$0xff]
    %v3273 = vld [vmem:[#allocation5 + $0x290] sm:$0xff]
    %v3274 = vld [vmem:[#allocation5 + $0x298] sm:$0xff]
    %v3275 = vld [vmem:[#allocation5 + $0x2a0] sm:$0xff]
    %v3276 = vld [vmem:[#allocation5 + $0x2a8] sm:$0xff]
    %v3277 = vld [vmem:[#allocation5 + $0x2b0] sm:$0xff]
    %v3278 = vld [vmem:[#allocation5 + $0x2b8] sm:$0xff]
    %v3279 = vld [vmem:[#allocation5 + $0x2c0] sm:$0xff]
    %v3280 = vld [vmem:[#allocation5 + $0x2c8] sm:$0xff]
    %v3281 = vld [vmem:[#allocation5 + $0x2d0] sm:$0xff]
    %v3282 = vld [vmem:[#allocation5 + $0x2d8] sm:$0xff]
    %v3283 = vld [vmem:[#allocation5 + $0x2e0] sm:$0xff]
    %v3284 = vld [vmem:[#allocation5 + $0x2e8] sm:$0xff]
    %v3285 = vld [vmem:[#allocation5 + $0x2f0] sm:$0xff]
    %v3286 = vld [vmem:[#allocation5 + $0x2f8] sm:$0xff]
    %v3287 = vld [vmem:[#allocation5 + $0x300] sm:$0xff]
    %v3288 = vld [vmem:[#allocation5 + $0x308] sm:$0xff]
    %v3289 = vld [vmem:[#allocation5 + $0x310] sm:$0xff]
    %v3290 = vld [vmem:[#allocation5 + $0x318] sm:$0xff]
    %v3291 = vld [vmem:[#allocation5 + $0x320] sm:$0xff]
    %v3292 = vld [vmem:[#allocation5 + $0x328] sm:$0xff]
    %v3293 = vld [vmem:[#allocation5 + $0x330] sm:$0xff]
    %v3294 = vld [vmem:[#allocation5 + $0x338] sm:$0xff]
    %v3295 = vld [vmem:[#allocation5 + $0x340] sm:$0xff]
    %v3296 = vld [vmem:[#allocation5 + $0x348] sm:$0xff]
    %v3297 = vld [vmem:[#allocation5 + $0x350] sm:$0xff]
    %v3298 = vld [vmem:[#allocation5 + $0x358] sm:$0xff]
    %v3299 = vld [vmem:[#allocation5 + $0x360] sm:$0xff]
    %v3300 = vld [vmem:[#allocation5 + $0x368] sm:$0xff]
    %v3301 = vld [vmem:[#allocation5 + $0x370] sm:$0xff]
    %v3302 = vld [vmem:[#allocation5 + $0x378] sm:$0xff]
    %v3303 = vld [vmem:[#allocation5 + $0x380] sm:$0xff]
    %v3304 = vld [vmem:[#allocation5 + $0x388] sm:$0xff]
    %v3305 = vld [vmem:[#allocation5 + $0x390] sm:$0xff]
    %v3306 = vld [vmem:[#allocation5 + $0x398] sm:$0xff]
    %v3307 = vld [vmem:[#allocation5 + $0x3a0] sm:$0xff]
    %v3308 = vld [vmem:[#allocation5 + $0x3a8] sm:$0xff]
    %v3309 = vld [vmem:[#allocation5 + $0x3b0] sm:$0xff]
    %v3310 = vld [vmem:[#allocation5 + $0x3b8] sm:$0xff]
    %v3311 = vld [vmem:[#allocation5 + $0x3c0] sm:$0xff]
    %v3312 = vld [vmem:[#allocation5 + $0x3c8] sm:$0xff]
    %v3313 = vld [vmem:[#allocation5 + $0x3d0] sm:$0xff]
    %v3314 = vld [vmem:[#allocation5 + $0x3d8] sm:$0xff]
    %v3315 = vld [vmem:[#allocation5 + $0x3e0] sm:$0xff]
    %v3316 = vld [vmem:[#allocation5 + $0x3e8] sm:$0xff]
    %v3317 = vld [vmem:[#allocation5 + $0x3f0] sm:$0xff]
    %v3318 = vld [vmem:[#allocation5 + $0x3f8] sm:$0xff]
    %v3447 = vunpack.c.l.b16 %v3191
    %v3448 = vunpack.c.h.b16 %v3191
    %v3449 = vunpack.c.l.b16 %v3192
    %v3450 = vunpack.c.h.b16 %v3192
    %v3451 = vunpack.c.l.b16 %v3193
    %v3452 = vunpack.c.h.b16 %v3193
    %v3453 = vunpack.c.l.b16 %v3194
    %v3454 = vunpack.c.h.b16 %v3194
    %v3455 = vunpack.c.l.b16 %v3195
    %v3456 = vunpack.c.h.b16 %v3195
    %v3457 = vunpack.c.l.b16 %v3196
    %v3458 = vunpack.c.h.b16 %v3196
    %v3459 = vunpack.c.l.b16 %v3197
    %v3460 = vunpack.c.h.b16 %v3197
    %v3461 = vunpack.c.l.b16 %v3198
    %v3462 = vunpack.c.h.b16 %v3198
    %v3463 = vunpack.c.l.b16 %v3199
    %v3464 = vunpack.c.h.b16 %v3199
    %v3465 = vunpack.c.l.b16 %v3200
    %v3466 = vunpack.c.h.b16 %v3200
    %v3467 = vunpack.c.l.b16 %v3201
    %v3468 = vunpack.c.h.b16 %v3201
    %v3469 = vunpack.c.l.b16 %v3202
    %v3470 = vunpack.c.h.b16 %v3202
    %v3471 = vunpack.c.l.b16 %v3203
    %v3472 = vunpack.c.h.b16 %v3203
    %v3473 = vunpack.c.l.b16 %v3204
    %v3474 = vunpack.c.h.b16 %v3204
    %v3475 = vunpack.c.l.b16 %v3205
    %v3476 = vunpack.c.h.b16 %v3205
    %v3477 = vunpack.c.l.b16 %v3206
    %v3478 = vunpack.c.h.b16 %v3206
    %v3479 = vunpack.c.l.b16 %v3207
    %v3480 = vunpack.c.h.b16 %v3207
    %v3481 = vunpack.c.l.b16 %v3208
    %v3482 = vunpack.c.h.b16 %v3208
    %v3483 = vunpack.c.l.b16 %v3209
    %v3484 = vunpack.c.h.b16 %v3209
    %v3485 = vunpack.c.l.b16 %v3210
    %v3486 = vunpack.c.h.b16 %v3210
    %v3487 = vunpack.c.l.b16 %v3211
    %v3488 = vunpack.c.h.b16 %v3211
    %v3489 = vunpack.c.l.b16 %v3212
    %v3490 = vunpack.c.h.b16 %v3212
    %v3491 = vunpack.c.l.b16 %v3213
    %v3492 = vunpack.c.h.b16 %v3213
    %v3493 = vunpack.c.l.b16 %v3214
    %v3494 = vunpack.c.h.b16 %v3214
    %v3495 = vunpack.c.l.b16 %v3215
    %v3496 = vunpack.c.h.b16 %v3215
    %v3497 = vunpack.c.l.b16 %v3216
    %v3498 = vunpack.c.h.b16 %v3216
    %v3499 = vunpack.c.l.b16 %v3217
    %v3500 = vunpack.c.h.b16 %v3217
    %v3501 = vunpack.c.l.b16 %v3218
    %v3502 = vunpack.c.h.b16 %v3218
    %v3503 = vunpack.c.l.b16 %v3219
    %v3504 = vunpack.c.h.b16 %v3219
    %v3505 = vunpack.c.l.b16 %v3220
    %v3506 = vunpack.c.h.b16 %v3220
    %v3507 = vunpack.c.l.b16 %v3221
    %v3508 = vunpack.c.h.b16 %v3221
    %v3509 = vunpack.c.l.b16 %v3222
    %v3510 = vunpack.c.h.b16 %v3222
    %v3511 = vunpack.c.l.b16 %v3223
    %v3512 = vunpack.c.h.b16 %v3223
    %v3513 = vunpack.c.l.b16 %v3224
    %v3514 = vunpack.c.h.b16 %v3224
    %v3515 = vunpack.c.l.b16 %v3225
    %v3516 = vunpack.c.h.b16 %v3225
    %v3517 = vunpack.c.l.b16 %v3226
    %v3518 = vunpack.c.h.b16 %v3226
    %v3519 = vunpack.c.l.b16 %v3227
    %v3520 = vunpack.c.h.b16 %v3227
    %v3521 = vunpack.c.l.b16 %v3228
    %v3522 = vunpack.c.h.b16 %v3228
    %v3523 = vunpack.c.l.b16 %v3229
    %v3524 = vunpack.c.h.b16 %v3229
    %v3525 = vunpack.c.l.b16 %v3230
    %v3526 = vunpack.c.h.b16 %v3230
    %v3527 = vunpack.c.l.b16 %v3231
    %v3528 = vunpack.c.h.b16 %v3231
    %v3529 = vunpack.c.l.b16 %v3232
    %v3530 = vunpack.c.h.b16 %v3232
    %v3531 = vunpack.c.l.b16 %v3233
    %v3532 = vunpack.c.h.b16 %v3233
    %v3533 = vunpack.c.l.b16 %v3234
    %v3534 = vunpack.c.h.b16 %v3234
    %v3535 = vunpack.c.l.b16 %v3235
    %v3536 = vunpack.c.h.b16 %v3235
    %v3537 = vunpack.c.l.b16 %v3236
    %v3538 = vunpack.c.h.b16 %v3236
    %v3539 = vunpack.c.l.b16 %v3237
    %v3540 = vunpack.c.h.b16 %v3237
    %v3541 = vunpack.c.l.b16 %v3238
    %v3542 = vunpack.c.h.b16 %v3238
    %v3543 = vunpack.c.l.b16 %v3239
    %v3544 = vunpack.c.h.b16 %v3239
    %v3545 = vunpack.c.l.b16 %v3240
    %v3546 = vunpack.c.h.b16 %v3240
    %v3547 = vunpack.c.l.b16 %v3241
    %v3548 = vunpack.c.h.b16 %v3241
    %v3549 = vunpack.c.l.b16 %v3242
    %v3550 = vunpack.c.h.b16 %v3242
    %v3551 = vunpack.c.l.b16 %v3243
    %v3552 = vunpack.c.h.b16 %v3243
    %v3553 = vunpack.c.l.b16 %v3244
    %v3554 = vunpack.c.h.b16 %v3244
    %v3555 = vunpack.c.l.b16 %v3245
    %v3556 = vunpack.c.h.b16 %v3245
    %v3557 = vunpack.c.l.b16 %v3246
    %v3558 = vunpack.c.h.b16 %v3246
    %v3559 = vunpack.c.l.b16 %v3247
    %v3560 = vunpack.c.h.b16 %v3247
    %v3561 = vunpack.c.l.b16 %v3248
    %v3562 = vunpack.c.h.b16 %v3248
    %v3563 = vunpack.c.l.b16 %v3249
    %v3564 = vunpack.c.h.b16 %v3249
    %v3565 = vunpack.c.l.b16 %v3250
    %v3566 = vunpack.c.h.b16 %v3250
    %v3567 = vunpack.c.l.b16 %v3251
    %v3568 = vunpack.c.h.b16 %v3251
    %v3569 = vunpack.c.l.b16 %v3252
    %v3570 = vunpack.c.h.b16 %v3252
    %v3571 = vunpack.c.l.b16 %v3253
    %v3572 = vunpack.c.h.b16 %v3253
    %v3573 = vunpack.c.l.b16 %v3254
    %v3574 = vunpack.c.h.b16 %v3254
    %v3575 = vunpack.c.l.b16 %v3255
    %v3576 = vunpack.c.h.b16 %v3255
    %v3577 = vunpack.c.l.b16 %v3256
    %v3578 = vunpack.c.h.b16 %v3256
    %v3579 = vunpack.c.l.b16 %v3257
    %v3580 = vunpack.c.h.b16 %v3257
    %v3581 = vunpack.c.l.b16 %v3258
    %v3582 = vunpack.c.h.b16 %v3258
    %v3583 = vunpack.c.l.b16 %v3259
    %v3584 = vunpack.c.h.b16 %v3259
    %v3585 = vunpack.c.l.b16 %v3260
    %v3586 = vunpack.c.h.b16 %v3260
    %v3587 = vunpack.c.l.b16 %v3261
    %v3588 = vunpack.c.h.b16 %v3261
    %v3589 = vunpack.c.l.b16 %v3262
    %v3590 = vunpack.c.h.b16 %v3262
    %v3591 = vunpack.c.l.b16 %v3263
    %v3592 = vunpack.c.h.b16 %v3263
    %v3593 = vunpack.c.l.b16 %v3264
    %v3594 = vunpack.c.h.b16 %v3264
    %v3595 = vunpack.c.l.b16 %v3265
    %v3596 = vunpack.c.h.b16 %v3265
    %v3597 = vunpack.c.l.b16 %v3266
    %v3598 = vunpack.c.h.b16 %v3266
    %v3599 = vunpack.c.l.b16 %v3267
    %v3600 = vunpack.c.h.b16 %v3267
    %v3601 = vunpack.c.l.b16 %v3268
    %v3602 = vunpack.c.h.b16 %v3268
    %v3603 = vunpack.c.l.b16 %v3269
    %v3604 = vunpack.c.h.b16 %v3269
    %v3605 = vunpack.c.l.b16 %v3270
    %v3606 = vunpack.c.h.b16 %v3270
    %v3607 = vunpack.c.l.b16 %v3271
    %v3608 = vunpack.c.h.b16 %v3271
    %v3609 = vunpack.c.l.b16 %v3272
    %v3610 = vunpack.c.h.b16 %v3272
    %v3611 = vunpack.c.l.b16 %v3273
    %v3612 = vunpack.c.h.b16 %v3273
    %v3613 = vunpack.c.l.b16 %v3274
    %v3614 = vunpack.c.h.b16 %v3274
    %v3615 = vunpack.c.l.b16 %v3275
    %v3616 = vunpack.c.h.b16 %v3275
    %v3617 = vunpack.c.l.b16 %v3276
    %v3618 = vunpack.c.h.b16 %v3276
    %v3619 = vunpack.c.l.b16 %v3277
    %v3620 = vunpack.c.h.b16 %v3277
    %v3621 = vunpack.c.l.b16 %v3278
    %v3622 = vunpack.c.h.b16 %v3278
    %v3623 = vunpack.c.l.b16 %v3279
    %v3624 = vunpack.c.h.b16 %v3279
    %v3625 = vunpack.c.l.b16 %v3280
    %v3626 = vunpack.c.h.b16 %v3280
    %v3627 = vunpack.c.l.b16 %v3281
    %v3628 = vunpack.c.h.b16 %v3281
    %v3629 = vunpack.c.l.b16 %v3282
    %v3630 = vunpack.c.h.b16 %v3282
    %v3631 = vunpack.c.l.b16 %v3283
    %v3632 = vunpack.c.h.b16 %v3283
    %v3633 = vunpack.c.l.b16 %v3284
    %v3634 = vunpack.c.h.b16 %v3284
    %v3635 = vunpack.c.l.b16 %v3285
    %v3636 = vunpack.c.h.b16 %v3285
    %v3637 = vunpack.c.l.b16 %v3286
    %v3638 = vunpack.c.h.b16 %v3286
    %v3639 = vunpack.c.l.b16 %v3287
    %v3640 = vunpack.c.h.b16 %v3287
    %v3641 = vunpack.c.l.b16 %v3288
    %v3642 = vunpack.c.h.b16 %v3288
    %v3643 = vunpack.c.l.b16 %v3289
    %v3644 = vunpack.c.h.b16 %v3289
    %v3645 = vunpack.c.l.b16 %v3290
    %v3646 = vunpack.c.h.b16 %v3290
    %v3647 = vunpack.c.l.b16 %v3291
    %v3648 = vunpack.c.h.b16 %v3291
    %v3649 = vunpack.c.l.b16 %v3292
    %v3650 = vunpack.c.h.b16 %v3292
    %v3651 = vunpack.c.l.b16 %v3293
    %v3652 = vunpack.c.h.b16 %v3293
    %v3653 = vunpack.c.l.b16 %v3294
    %v3654 = vunpack.c.h.b16 %v3294
    %v3655 = vunpack.c.l.b16 %v3295
    %v3656 = vunpack.c.h.b16 %v3295
    %v3657 = vunpack.c.l.b16 %v3296
    %v3658 = vunpack.c.h.b16 %v3296
    %v3659 = vunpack.c.l.b16 %v3297
    %v3660 = vunpack.c.h.b16 %v3297
    %v3661 = vunpack.c.l.b16 %v3298
    %v3662 = vunpack.c.h.b16 %v3298
    %v3663 = vunpack.c.l.b16 %v3299
    %v3664 = vunpack.c.h.b16 %v3299
    %v3665 = vunpack.c.l.b16 %v3300
    %v3666 = vunpack.c.h.b16 %v3300
    %v3667 = vunpack.c.l.b16 %v3301
    %v3668 = vunpack.c.h.b16 %v3301
    %v3669 = vunpack.c.l.b16 %v3302
    %v3670 = vunpack.c.h.b16 %v3302
    %v3671 = vunpack.c.l.b16 %v3303
    %v3672 = vunpack.c.h.b16 %v3303
    %v3673 = vunpack.c.l.b16 %v3304
    %v3674 = vunpack.c.h.b16 %v3304
    %v3675 = vunpack.c.l.b16 %v3305
    %v3676 = vunpack.c.h.b16 %v3305
    %v3677 = vunpack.c.l.b16 %v3306
    %v3678 = vunpack.c.h.b16 %v3306
    %v3679 = vunpack.c.l.b16 %v3307
    %v3680 = vunpack.c.h.b16 %v3307
    %v3681 = vunpack.c.l.b16 %v3308
    %v3682 = vunpack.c.h.b16 %v3308
    %v3683 = vunpack.c.l.b16 %v3309
    %v3684 = vunpack.c.h.b16 %v3309
    %v3685 = vunpack.c.l.b16 %v3310
    %v3686 = vunpack.c.h.b16 %v3310
    %v3687 = vunpack.c.l.b16 %v3311
    %v3688 = vunpack.c.h.b16 %v3311
    %v3689 = vunpack.c.l.b16 %v3312
    %v3690 = vunpack.c.h.b16 %v3312
    %v3691 = vunpack.c.l.b16 %v3313
    %v3692 = vunpack.c.h.b16 %v3313
    %v3693 = vunpack.c.l.b16 %v3314
    %v3694 = vunpack.c.h.b16 %v3314
    %v3695 = vunpack.c.l.b16 %v3315
    %v3696 = vunpack.c.h.b16 %v3315
    %v3697 = vunpack.c.l.b16 %v3316
    %v3698 = vunpack.c.h.b16 %v3316
    %v3699 = vunpack.c.l.b16 %v3317
    %v3700 = vunpack.c.h.b16 %v3317
    %v3701 = vunpack.c.l.b16 %v3318
    %v3702 = vunpack.c.h.b16 %v3318
    %v3703 = vpack.c.b16 %v3451, %v3447
    %v3704 = vpack.c.b16 %v3452, %v3448
    %v3705 = vpack.c.b16 %v3453, %v3449
    %v3706 = vpack.c.b16 %v3454, %v3450
    %v3707 = vpack.c.b16 %v3459, %v3455
    %v3708 = vpack.c.b16 %v3460, %v3456
    %v3709 = vpack.c.b16 %v3461, %v3457
    %v3710 = vpack.c.b16 %v3462, %v3458
    %v3711 = vpack.c.b16 %v3467, %v3463
    %v3712 = vpack.c.b16 %v3468, %v3464
    %v3713 = vpack.c.b16 %v3469, %v3465
    %v3714 = vpack.c.b16 %v3470, %v3466
    %v3715 = vpack.c.b16 %v3475, %v3471
    %v3716 = vpack.c.b16 %v3476, %v3472
    %v3717 = vpack.c.b16 %v3477, %v3473
    %v3718 = vpack.c.b16 %v3478, %v3474
    %v3719 = vpack.c.b16 %v3483, %v3479
    %v3720 = vpack.c.b16 %v3484, %v3480
    %v3721 = vpack.c.b16 %v3485, %v3481
    %v3722 = vpack.c.b16 %v3486, %v3482
    %v3723 = vpack.c.b16 %v3491, %v3487
    %v3724 = vpack.c.b16 %v3492, %v3488
    %v3725 = vpack.c.b16 %v3493, %v3489
    %v3726 = vpack.c.b16 %v3494, %v3490
    %v3727 = vpack.c.b16 %v3499, %v3495
    %v3728 = vpack.c.b16 %v3500, %v3496
    %v3729 = vpack.c.b16 %v3501, %v3497
    %v3730 = vpack.c.b16 %v3502, %v3498
    %v3731 = vpack.c.b16 %v3507, %v3503
    %v3732 = vpack.c.b16 %v3508, %v3504
    %v3733 = vpack.c.b16 %v3509, %v3505
    %v3734 = vpack.c.b16 %v3510, %v3506
    %v3735 = vpack.c.b16 %v3515, %v3511
    %v3736 = vpack.c.b16 %v3516, %v3512
    %v3737 = vpack.c.b16 %v3517, %v3513
    %v3738 = vpack.c.b16 %v3518, %v3514
    %v3739 = vpack.c.b16 %v3523, %v3519
    %v3740 = vpack.c.b16 %v3524, %v3520
    %v3741 = vpack.c.b16 %v3525, %v3521
    %v3742 = vpack.c.b16 %v3526, %v3522
    %v3743 = vpack.c.b16 %v3531, %v3527
    %v3744 = vpack.c.b16 %v3532, %v3528
    %v3745 = vpack.c.b16 %v3533, %v3529
    %v3746 = vpack.c.b16 %v3534, %v3530
    %v3747 = vpack.c.b16 %v3539, %v3535
    %v3748 = vpack.c.b16 %v3540, %v3536
    %v3749 = vpack.c.b16 %v3541, %v3537
    %v3750 = vpack.c.b16 %v3542, %v3538
    %v3751 = vpack.c.b16 %v3547, %v3543
    %v3752 = vpack.c.b16 %v3548, %v3544
    %v3753 = vpack.c.b16 %v3549, %v3545
    %v3754 = vpack.c.b16 %v3550, %v3546
    %v3755 = vpack.c.b16 %v3555, %v3551
    %v3756 = vpack.c.b16 %v3556, %v3552
    %v3757 = vpack.c.b16 %v3557, %v3553
    %v3758 = vpack.c.b16 %v3558, %v3554
    %v3759 = vpack.c.b16 %v3563, %v3559
    %v3760 = vpack.c.b16 %v3564, %v3560
    %v3761 = vpack.c.b16 %v3565, %v3561
    %v3762 = vpack.c.b16 %v3566, %v3562
    %v3763 = vpack.c.b16 %v3571, %v3567
    %v3764 = vpack.c.b16 %v3572, %v3568
    %v3765 = vpack.c.b16 %v3573, %v3569
    %v3766 = vpack.c.b16 %v3574, %v3570
    %v3767 = vpack.c.b16 %v3579, %v3575
    %v3768 = vpack.c.b16 %v3580, %v3576
    %v3769 = vpack.c.b16 %v3581, %v3577
    %v3770 = vpack.c.b16 %v3582, %v3578
    %v3771 = vpack.c.b16 %v3587, %v3583
    %v3772 = vpack.c.b16 %v3588, %v3584
    %v3773 = vpack.c.b16 %v3589, %v3585
    %v3774 = vpack.c.b16 %v3590, %v3586
    %v3775 = vpack.c.b16 %v3595, %v3591
    %v3776 = vpack.c.b16 %v3596, %v3592
    %v3777 = vpack.c.b16 %v3597, %v3593
    %v3778 = vpack.c.b16 %v3598, %v3594
    %v3779 = vpack.c.b16 %v3603, %v3599
    %v3780 = vpack.c.b16 %v3604, %v3600
    %v3781 = vpack.c.b16 %v3605, %v3601
    %v3782 = vpack.c.b16 %v3606, %v3602
    %v3783 = vpack.c.b16 %v3611, %v3607
    %v3784 = vpack.c.b16 %v3612, %v3608
    %v3785 = vpack.c.b16 %v3613, %v3609
    %v3786 = vpack.c.b16 %v3614, %v3610
    %v3787 = vpack.c.b16 %v3619, %v3615
    %v3788 = vpack.c.b16 %v3620, %v3616
    %v3789 = vpack.c.b16 %v3621, %v3617
    %v3790 = vpack.c.b16 %v3622, %v3618
    %v3791 = vpack.c.b16 %v3627, %v3623
    %v3792 = vpack.c.b16 %v3628, %v3624
    %v3793 = vpack.c.b16 %v3629, %v3625
    %v3794 = vpack.c.b16 %v3630, %v3626
    %v3795 = vpack.c.b16 %v3635, %v3631
    %v3796 = vpack.c.b16 %v3636, %v3632
    %v3797 = vpack.c.b16 %v3637, %v3633
    %v3798 = vpack.c.b16 %v3638, %v3634
    %v3799 = vpack.c.b16 %v3643, %v3639
    %v3800 = vpack.c.b16 %v3644, %v3640
    %v3801 = vpack.c.b16 %v3645, %v3641
    %v3802 = vpack.c.b16 %v3646, %v3642
    %v3803 = vpack.c.b16 %v3651, %v3647
    %v3804 = vpack.c.b16 %v3652, %v3648
    %v3805 = vpack.c.b16 %v3653, %v3649
    %v3806 = vpack.c.b16 %v3654, %v3650
    %v3807 = vpack.c.b16 %v3659, %v3655
    %v3808 = vpack.c.b16 %v3660, %v3656
    %v3809 = vpack.c.b16 %v3661, %v3657
    %v3810 = vpack.c.b16 %v3662, %v3658
    %v3811 = vpack.c.b16 %v3667, %v3663
    %v3812 = vpack.c.b16 %v3668, %v3664
    %v3813 = vpack.c.b16 %v3669, %v3665
    %v3814 = vpack.c.b16 %v3670, %v3666
    %v3815 = vpack.c.b16 %v3675, %v3671
    %v3816 = vpack.c.b16 %v3676, %v3672
    %v3817 = vpack.c.b16 %v3677, %v3673
    %v3818 = vpack.c.b16 %v3678, %v3674
    %v3819 = vpack.c.b16 %v3683, %v3679
    %v3820 = vpack.c.b16 %v3684, %v3680
    %v3821 = vpack.c.b16 %v3685, %v3681
    %v3822 = vpack.c.b16 %v3686, %v3682
    %v3823 = vpack.c.b16 %v3691, %v3687
    %v3824 = vpack.c.b16 %v3692, %v3688
    %v3825 = vpack.c.b16 %v3693, %v3689
    %v3826 = vpack.c.b16 %v3694, %v3690
    %v3827 = vpack.c.b16 %v3699, %v3695
    %v3828 = vpack.c.b16 %v3700, %v3696
    %v3829 = vpack.c.b16 %v3701, %v3697
    %v3830 = vpack.c.b16 %v3702, %v3698
    %3959 = vmatpush.bf16.msra.mxu0 %v3731
    %3960 = vmatpush.bf16.msra.mxu0 %v3727
    %3961 = vmatpush.bf16.msra.mxu0 %v3723
    %3962 = vmatpush.bf16.msra.mxu0 %v3719
    %3963 = vmatpush.bf16.msra.mxu0 %v3715
    %3964 = vmatpush.bf16.msra.mxu0 %v3711
    %3965 = vmatpush.bf16.msra.mxu0 %v3707
    %3966 = vmatpush.bf16.msra.mxu0 %v3703
    %3967 = vmatmul.bf16.gmra.mxu0 %v3187
    %v3968 = vpop.f32.mrf.mxu0
    %v3969 = vadd.f32 0.0, %v3968
    %v3970 = vpop.f32.mrf.mxu0
    %3971 = vdwg.mxu0
    %3972 = vmatpush.bf16.msra.mxu0 %v3763
    %3973 = vmatpush.bf16.msra.mxu0 %v3759
    %3974 = vmatpush.bf16.msra.mxu0 %v3755
    %3975 = vmatpush.bf16.msra.mxu0 %v3751
    %3976 = vmatpush.bf16.msra.mxu0 %v3747
    %3977 = vmatpush.bf16.msra.mxu0 %v3743
    %3978 = vmatpush.bf16.msra.mxu0 %v3739
    %3979 = vmatpush.bf16.msra.mxu0 %v3735
    %3980 = vmatmul.bf16.gmra.mxu0 %v3188
    %v3981 = vpop.f32.mrf.mxu0
    %v3982 = vadd.f32 %v3969, %v3981
    %v3983 = vpop.f32.mrf.mxu0
    %3984 = vdwg.mxu0
    %3985 = vmatpush.bf16.msra.mxu0 %v3795
    %3986 = vmatpush.bf16.msra.mxu0 %v3791
    %3987 = vmatpush.bf16.msra.mxu0 %v3787
    %3988 = vmatpush.bf16.msra.mxu0 %v3783
    %3989 = vmatpush.bf16.msra.mxu0 %v3779
    %3990 = vmatpush.bf16.msra.mxu0 %v3775
    %3991 = vmatpush.bf16.msra.mxu0 %v3771
    %3992 = vmatpush.bf16.msra.mxu0 %v3767
    %3993 = vmatmul.bf16.gmra.mxu0 %v3189
    %v3994 = vpop.f32.mrf.mxu0
    %v3995 = vadd.f32 %v3982, %v3994
    %v3996 = vpop.f32.mrf.mxu0
    %3997 = vdwg.mxu0
    %3998 = vmatpush.bf16.msra.mxu0 %v3827
    %3999 = vmatpush.bf16.msra.mxu0 %v3823
    %4000 = vmatpush.bf16.msra.mxu0 %v3819
    %4001 = vmatpush.bf16.msra.mxu0 %v3815
    %4002 = vmatpush.bf16.msra.mxu0 %v3811
    %4003 = vmatpush.bf16.msra.mxu0 %v3807
    %4004 = vmatpush.bf16.msra.mxu0 %v3803
    %4005 = vmatpush.bf16.msra.mxu0 %v3799
    %4006 = vmatmul.bf16.gmra.mxu0 %v3190
    %v4007 = vpop.f32.mrf.mxu0
    %v4008 = vadd.f32 %v3995, %v4007
    %v4009 = vpop.f32.mrf.mxu0
    %4010 = vdwg.mxu0
    %4011 = vmatpush.bf16.msra.mxu0 %v3732
    %4012 = vmatpush.bf16.msra.mxu0 %v3728
    %4013 = vmatpush.bf16.msra.mxu0 %v3724
    %4014 = vmatpush.bf16.msra.mxu0 %v3720
    %4015 = vmatpush.bf16.msra.mxu0 %v3716
    %4016 = vmatpush.bf16.msra.mxu0 %v3712
    %4017 = vmatpush.bf16.msra.mxu0 %v3708
    %4018 = vmatpush.bf16.msra.mxu0 %v3704
    %4019 = vmatmul.bf16.gmra.mxu0 %v3187
    %v4020 = vpop.f32.mrf.mxu0
    %v4021 = vadd.f32 0.0, %v4020
    %v4022 = vpop.f32.mrf.mxu0
    %4023 = vdwg.mxu0
    %4024 = vmatpush.bf16.msra.mxu0 %v3764
    %4025 = vmatpush.bf16.msra.mxu0 %v3760
    %4026 = vmatpush.bf16.msra.mxu0 %v3756
    %4027 = vmatpush.bf16.msra.mxu0 %v3752
    %4028 = vmatpush.bf16.msra.mxu0 %v3748
    %4029 = vmatpush.bf16.msra.mxu0 %v3744
    %4030 = vmatpush.bf16.msra.mxu0 %v3740
    %4031 = vmatpush.bf16.msra.mxu0 %v3736
    %4032 = vmatmul.bf16.gmra.mxu0 %v3188
    %v4033 = vpop.f32.mrf.mxu0
    %v4034 = vadd.f32 %v4021, %v4033
    %v4035 = vpop.f32.mrf.mxu0
    %4036 = vdwg.mxu0
    %4037 = vmatpush.bf16.msra.mxu0 %v3796
    %4038 = vmatpush.bf16.msra.mxu0 %v3792
    %4039 = vmatpush.bf16.msra.mxu0 %v3788
    %4040 = vmatpush.bf16.msra.mxu0 %v3784
    %4041 = vmatpush.bf16.msra.mxu0 %v3780
    %4042 = vmatpush.bf16.msra.mxu0 %v3776
    %4043 = vmatpush.bf16.msra.mxu0 %v3772
    %4044 = vmatpush.bf16.msra.mxu0 %v3768
    %4045 = vmatmul.bf16.gmra.mxu0 %v3189
    %v4046 = vpop.f32.mrf.mxu0
    %v4047 = vadd.f32 %v4034, %v4046
    %v4048 = vpop.f32.mrf.mxu0
    %4049 = vdwg.mxu0
    %4050 = vmatpush.bf16.msra.mxu0 %v3828
    %4051 = vmatpush.bf16.msra.mxu0 %v3824
    %4052 = vmatpush.bf16.msra.mxu0 %v3820
    %4053 = vmatpush.bf16.msra.mxu0 %v3816
    %4054 = vmatpush.bf16.msra.mxu0 %v3812
    %4055 = vmatpush.bf16.msra.mxu0 %v3808
    %4056 = vmatpush.bf16.msra.mxu0 %v3804
    %4057 = vmatpush.bf16.msra.mxu0 %v3800
    %4058 = vmatmul.bf16.gmra.mxu0 %v3190
    %v4059 = vpop.f32.mrf.mxu0
    %v4060 = vadd.f32 %v4047, %v4059
    %v4061 = vpop.f32.mrf.mxu0
    %4062 = vdwg.mxu0
    %4063 = vmatpush.bf16.msra.mxu0 %v3733
    %4064 = vmatpush.bf16.msra.mxu0 %v3729
    %4065 = vmatpush.bf16.msra.mxu0 %v3725
    %4066 = vmatpush.bf16.msra.mxu0 %v3721
    %4067 = vmatpush.bf16.msra.mxu0 %v3717
    %4068 = vmatpush.bf16.msra.mxu0 %v3713
    %4069 = vmatpush.bf16.msra.mxu0 %v3709
    %4070 = vmatpush.bf16.msra.mxu0 %v3705
    %4071 = vmatmul.bf16.gmra.mxu0 %v3187
    %v4072 = vpop.f32.mrf.mxu0
    %v4073 = vadd.f32 0.0, %v4072
    %v4074 = vpop.f32.mrf.mxu0
    %4075 = vdwg.mxu0
    %4076 = vmatpush.bf16.msra.mxu0 %v3765
    %4077 = vmatpush.bf16.msra.mxu0 %v3761
    %4078 = vmatpush.bf16.msra.mxu0 %v3757
    %4079 = vmatpush.bf16.msra.mxu0 %v3753
    %4080 = vmatpush.bf16.msra.mxu0 %v3749
    %4081 = vmatpush.bf16.msra.mxu0 %v3745
    %4082 = vmatpush.bf16.msra.mxu0 %v3741
    %4083 = vmatpush.bf16.msra.mxu0 %v3737
    %4084 = vmatmul.bf16.gmra.mxu0 %v3188
    %v4085 = vpop.f32.mrf.mxu0
    %v4086 = vadd.f32 %v4073, %v4085
    %v4087 = vpop.f32.mrf.mxu0
    %4088 = vdwg.mxu0
    %4089 = vmatpush.bf16.msra.mxu0 %v3797
    %4090 = vmatpush.bf16.msra.mxu0 %v3793
    %4091 = vmatpush.bf16.msra.mxu0 %v3789
    %4092 = vmatpush.bf16.msra.mxu0 %v3785
    %4093 = vmatpush.bf16.msra.mxu0 %v3781
    %4094 = vmatpush.bf16.msra.mxu0 %v3777
    %4095 = vmatpush.bf16.msra.mxu0 %v3773
    %4096 = vmatpush.bf16.msra.mxu0 %v3769
    %4097 = vmatmul.bf16.gmra.mxu0 %v3189
    %v4098 = vpop.f32.mrf.mxu0
    %v4099 = vadd.f32 %v4086, %v4098
    %v4100 = vpop.f32.mrf.mxu0
    %4101 = vdwg.mxu0
    %4102 = vmatpush.bf16.msra.mxu0 %v3829
    %4103 = vmatpush.bf16.msra.mxu0 %v3825
    %4104 = vmatpush.bf16.msra.mxu0 %v3821
    %4105 = vmatpush.bf16.msra.mxu0 %v3817
    %4106 = vmatpush.bf16.msra.mxu0 %v3813
    %4107 = vmatpush.bf16.msra.mxu0 %v3809
    %4108 = vmatpush.bf16.msra.mxu0 %v3805
    %4109 = vmatpush.bf16.msra.mxu0 %v3801
    %4110 = vmatmul.bf16.gmra.mxu0 %v3190
    %v4111 = vpop.f32.mrf.mxu0
    %v4112 = vadd.f32 %v4099, %v4111
    %v4113 = vpop.f32.mrf.mxu0
    %4114 = vdwg.mxu0
    %4115 = vmatpush.bf16.msra.mxu0 %v3734
    %4116 = vmatpush.bf16.msra.mxu0 %v3730
    %4117 = vmatpush.bf16.msra.mxu0 %v3726
    %4118 = vmatpush.bf16.msra.mxu0 %v3722
    %4119 = vmatpush.bf16.msra.mxu0 %v3718
    %4120 = vmatpush.bf16.msra.mxu0 %v3714
    %4121 = vmatpush.bf16.msra.mxu0 %v3710
    %4122 = vmatpush.bf16.msra.mxu0 %v3706
    %4123 = vmatmul.bf16.gmra.mxu0 %v3187
    %v4124 = vpop.f32.mrf.mxu0
    %v4125 = vadd.f32 0.0, %v4124
    %v4126 = vpop.f32.mrf.mxu0
    %4127 = vdwg.mxu0
    %4128 = vmatpush.bf16.msra.mxu0 %v3766
    %4129 = vmatpush.bf16.msra.mxu0 %v3762
    %4130 = vmatpush.bf16.msra.mxu0 %v3758
    %4131 = vmatpush.bf16.msra.mxu0 %v3754
    %4132 = vmatpush.bf16.msra.mxu0 %v3750
    %4133 = vmatpush.bf16.msra.mxu0 %v3746
    %4134 = vmatpush.bf16.msra.mxu0 %v3742
    %4135 = vmatpush.bf16.msra.mxu0 %v3738
    %4136 = vmatmul.bf16.gmra.mxu0 %v3188
    %v4137 = vpop.f32.mrf.mxu0
    %v4138 = vadd.f32 %v4125, %v4137
    %v4139 = vpop.f32.mrf.mxu0
    %4140 = vdwg.mxu0
    %4141 = vmatpush.bf16.msra.mxu0 %v3798
    %4142 = vmatpush.bf16.msra.mxu0 %v3794
    %4143 = vmatpush.bf16.msra.mxu0 %v3790
    %4144 = vmatpush.bf16.msra.mxu0 %v3786
    %4145 = vmatpush.bf16.msra.mxu0 %v3782
    %4146 = vmatpush.bf16.msra.mxu0 %v3778
    %4147 = vmatpush.bf16.msra.mxu0 %v3774
    %4148 = vmatpush.bf16.msra.mxu0 %v3770
    %4149 = vmatmul.bf16.gmra.mxu0 %v3189
    %v4150 = vpop.f32.mrf.mxu0
    %v4151 = vadd.f32 %v4138, %v4150
    %v4152 = vpop.f32.mrf.mxu0
    %4153 = vdwg.mxu0
    %4154 = vmatpush.bf16.msra.mxu0 %v3830
    %4155 = vmatpush.bf16.msra.mxu0 %v3826
    %4156 = vmatpush.bf16.msra.mxu0 %v3822
    %4157 = vmatpush.bf16.msra.mxu0 %v3818
    %4158 = vmatpush.bf16.msra.mxu0 %v3814
    %4159 = vmatpush.bf16.msra.mxu0 %v3810
    %4160 = vmatpush.bf16.msra.mxu0 %v3806
    %4161 = vmatpush.bf16.msra.mxu0 %v3802
    %4162 = vmatmul.bf16.gmra.mxu0 %v3190
    %v4163 = vpop.f32.mrf.mxu0
    %v4164 = vadd.f32 %v4151, %v4163
    %v4165 = vpop.f32.mrf.mxu0
    %4166 = vdwg.mxu0
    %v4167 = vrot.slane %v4008, 4
    %v4168 = vadd.f32 %v4008, %v4167
    %v4169 = vrot.slane %v4168, 2
    %v4170 = vadd.f32 %v4168, %v4169
    %v4171 = vrot.slane %v4170, 1
    %v4172 = vadd.f32 %v4170, %v4171
    %v4173 = vrot.slane %v4060, 4
    %v4174 = vadd.f32 %v4060, %v4173
    %v4175 = vrot.slane %v4174, 2
    %v4176 = vadd.f32 %v4174, %v4175
    %v4177 = vrot.slane %v4176, 1
    %v4178 = vadd.f32 %v4176, %v4177
    %v4179 = vrot.slane %v4112, 4
    %v4180 = vadd.f32 %v4112, %v4179
    %v4181 = vrot.slane %v4180, 2
    %v4182 = vadd.f32 %v4180, %v4181
    %v4183 = vrot.slane %v4182, 1
    %v4184 = vadd.f32 %v4182, %v4183
    %v4185 = vrot.slane %v4164, 4
    %v4186 = vadd.f32 %v4164, %v4185
    %v4187 = vrot.slane %v4186, 2
    %v4188 = vadd.f32 %v4186, %v4187
    %v4189 = vrot.slane %v4188, 1
    %v4190 = vadd.f32 %v4188, %v4189
    %v4191 = vmul.f32 %v4172, 0.125
    %v4192 = vmul.f32 %v4178, 0.125
    %v4193 = vmul.f32 %v4184, 0.125
    %v4194 = vmul.f32 %v4190, 0.125
    %v4195 = vmul.f32 %v4008, %v4008
    %v4196 = vmul.f32 %v4060, %v4060
    %v4197 = vmul.f32 %v4112, %v4112
    %v4198 = vmul.f32 %v4164, %v4164
    %v4199 = vrot.slane %v4195, 4
    %v4200 = vadd.f32 %v4195, %v4199
    %v4201 = vrot.slane %v4200, 2
    %v4202 = vadd.f32 %v4200, %v4201
    %v4203 = vrot.slane %v4202, 1
    %v4204 = vadd.f32 %v4202, %v4203
    %v4205 = vrot.slane %v4196, 4
    %v4206 = vadd.f32 %v4196, %v4205
    %v4207 = vrot.slane %v4206, 2
    %v4208 = vadd.f32 %v4206, %v4207
    %v4209 = vrot.slane %v4208, 1
    %v4210 = vadd.f32 %v4208, %v4209
    %v4211 = vrot.slane %v4197, 4
    %v4212 = vadd.f32 %v4197, %v4211
    %v4213 = vrot.slane %v4212, 2
    %v4214 = vadd.f32 %v4212, %v4213
    %v4215 = vrot.slane %v4214, 1
    %v4216 = vadd.f32 %v4214, %v4215
    %v4217 = vrot.slane %v4198, 4
    %v4218 = vadd.f32 %v4198, %v4217
    %v4219 = vrot.slane %v4218, 2
    %v4220 = vadd.f32 %v4218, %v4219
    %v4221 = vrot.slane %v4220, 1
    %v4222 = vadd.f32 %v4220, %v4221
    %v4223 = vmul.f32 %v4204, 0.125
    %v4224 = vmul.f32 %v4210, 0.125
    %v4225 = vmul.f32 %v4216, 0.125
    %v4226 = vmul.f32 %v4222, 0.125
    %v4227 = vmul.f32 %v4191, %v4191
    %v4228 = vmul.f32 %v4192, %v4192
    %v4229 = vmul.f32 %v4193, %v4193
    %v4230 = vmul.f32 %v4194, %v4194
    %v4231 = vsub.f32 %v4223, %v4227
    %v4232 = vsub.f32 %v4224, %v4228
    %v4233 = vsub.f32 %v4225, %v4229
    %v4234 = vsub.f32 %v4226, %v4230
    %v4235 = vld [vmem:[%s8] sm:$0xf]
    %v4236 = vadd.f32 %v4231, 1e-05
    %v4237 = vadd.f32 %v4232, 1e-05
    %v4238 = vadd.f32 %v4233, 1e-05
    %v4239 = vadd.f32 %v4234, 1e-05
    %v4240 = vrsqrt.pop %v4236
    %v4241 = vmul.f32 %v4240, %v4236
    %v4242 = vmul.f32 %v4241, %v4240
    %v4243 = vmul.f32 0.5, %v4242
    %v4244 = vsub.f32 1.5, %v4243
    %v4245 = vmul.f32 %v4240, %v4244
    %vm4246 = vweird.f32 %v4236
    %vm4247 = vweird.f32 %v4240
    %vm4248 = vmor %vm4246, %vm4247
    %v4249 = vsel %vm4248, %v4240, %v4245
    %v4250 = vrsqrt.pop %v4237
    %v4251 = vmul.f32 %v4250, %v4237
    %v4252 = vmul.f32 %v4251, %v4250
    %v4253 = vmul.f32 0.5, %v4252
    %v4254 = vsub.f32 1.5, %v4253
    %v4255 = vmul.f32 %v4250, %v4254
    %vm4256 = vweird.f32 %v4237
    %vm4257 = vweird.f32 %v4250
    %vm4258 = vmor %vm4256, %vm4257
    %v4259 = vsel %vm4258, %v4250, %v4255
    %v4260 = vrsqrt.pop %v4238
    %v4261 = vmul.f32 %v4260, %v4238
    %v4262 = vmul.f32 %v4261, %v4260
    %v4263 = vmul.f32 0.5, %v4262
    %v4264 = vsub.f32 1.5, %v4263
    %v4265 = vmul.f32 %v4260, %v4264
    %vm4266 = vweird.f32 %v4238
    %vm4267 = vweird.f32 %v4260
    %vm4268 = vmor %vm4266, %vm4267
    %v4269 = vsel %vm4268, %v4260, %v4265
    %v4270 = vrsqrt.pop %v4239
    %v4271 = vmul.f32 %v4270, %v4239
    %v4272 = vmul.f32 %v4271, %v4270
    %v4273 = vmul.f32 0.5, %v4272
    %v4274 = vsub.f32 1.5, %v4273
    %v4275 = vmul.f32 %v4270, %v4274
    %vm4276 = vweird.f32 %v4239
    %vm4277 = vweird.f32 %v4270
    %vm4278 = vmor %vm4276, %vm4277
    %v4279 = vsel %vm4278, %v4270, %v4275
    %v4284 = vrot.slane %v4259, 7
    %v4285 = vrot.slane %v4269, 6
    %v4286 = vrot.slane %v4279, 5
    %v4287 = vsel %vm1980, %v4249, %v4284
    %v4288 = vsel %vm1982, %v4285, %v4286
    %v4289 = vsel %vm1984, %v4287, %v4288
    %v4291 = vmul.f32 %v4235, %v4289
    %v4292 = vld [vmem:[%s9] sm:$0xf]
    %v4294 = vperm.slane %v4291, 0
    %v4295 = vperm.slane %v4291, 1
    %v4296 = vperm.slane %v4291, 2
    %v4297 = vperm.slane %v4291, 3
    %v4302 = vmul.f32 %v4191, %v4294
    %v4303 = vmul.f32 %v4192, %v4295
    %v4304 = vmul.f32 %v4193, %v4296
    %v4305 = vmul.f32 %v4194, %v4297
    %v4310 = vrot.slane %v4303, 7
    %v4311 = vrot.slane %v4304, 6
    %v4312 = vrot.slane %v4305, 5
    %v4313 = vsel %vm1980, %v4302, %v4310
    %v4314 = vsel %vm1982, %v4311, %v4312
    %v4315 = vsel %vm1984, %v4313, %v4314
    %v4317 = vsub.f32 %v4292, %v4315
    %v4318 = vmul.f32 %v4008, %v4294
    %v4319 = vmul.f32 %v4060, %v4295
    %v4320 = vmul.f32 %v4112, %v4296
    %v4321 = vmul.f32 %v4164, %v4297
    %v4323 = vperm.slane %v4317, 0
    %v4324 = vperm.slane %v4317, 1
    %v4325 = vperm.slane %v4317, 2
    %v4326 = vperm.slane %v4317, 3
    %v4331 = vadd.f32 %v4318, %v4323
    %v4332 = vadd.f32 %v4319, %v4324
    %v4333 = vadd.f32 %v4320, %v4325
    %v4334 = vadd.f32 %v4321, %v4326
    %v4335 = vmax.f32 %v4331, 0.0
    %v4336 = vmax.f32 %v4332, 0.0
    %v4337 = vmax.f32 %v4333, 0.0
    %v4338 = vmax.f32 %v4334, 0.0
    %v4339 = vpack.c.bf16 %v4335, %v4335
    %v4340 = vpack.c.bf16 %v4336, %v4336
    %v4341 = vpack.c.bf16 %v4337, %v4337
    %v4342 = vpack.c.bf16 %v4338, %v4338
    %v4343 = vld [vmem:[#allocation7] sm:$0xff]
    %v4344 = vld [vmem:[#allocation7 + $0x8] sm:$0xff]
    %v4345 = vld [vmem:[#allocation7 + $0x10] sm:$0xff]
    %v4346 = vld [vmem:[#allocation7 + $0x18] sm:$0xff]
    %v4347 = vld [vmem:[#allocation7 + $0x20] sm:$0xff]
    %v4348 = vld [vmem:[#allocation7 + $0x28] sm:$0xff]
    %v4349 = vld [vmem:[#allocation7 + $0x30] sm:$0xff]
    %v4350 = vld [vmem:[#allocation7 + $0x38] sm:$0xff]
    %v4351 = vld [vmem:[#allocation7 + $0x40] sm:$0xff]
    %v4352 = vld [vmem:[#allocation7 + $0x48] sm:$0xff]
    %v4353 = vld [vmem:[#allocation7 + $0x50] sm:$0xff]
    %v4354 = vld [vmem:[#allocation7 + $0x58] sm:$0xff]
    %v4355 = vld [vmem:[#allocation7 + $0x60] sm:$0xff]
    %v4356 = vld [vmem:[#allocation7 + $0x68] sm:$0xff]
    %v4357 = vld [vmem:[#allocation7 + $0x70] sm:$0xff]
    %v4358 = vld [vmem:[#allocation7 + $0x78] sm:$0xff]
    %v4359 = vld [vmem:[#allocation7 + $0x80] sm:$0xff]
    %v4360 = vld [vmem:[#allocation7 + $0x88] sm:$0xff]
    %v4361 = vld [vmem:[#allocation7 + $0x90] sm:$0xff]
    %v4362 = vld [vmem:[#allocation7 + $0x98] sm:$0xff]
    %v4363 = vld [vmem:[#allocation7 + $0xa0] sm:$0xff]
    %v4364 = vld [vmem:[#allocation7 + $0xa8] sm:$0xff]
    %v4365 = vld [vmem:[#allocation7 + $0xb0] sm:$0xff]
    %v4366 = vld [vmem:[#allocation7 + $0xb8] sm:$0xff]
    %v4367 = vld [vmem:[#allocation7 + $0xc0] sm:$0xff]
    %v4368 = vld [vmem:[#allocation7 + $0xc8] sm:$0xff]
    %v4369 = vld [vmem:[#allocation7 + $0xd0] sm:$0xff]
    %v4370 = vld [vmem:[#allocation7 + $0xd8] sm:$0xff]
    %v4371 = vld [vmem:[#allocation7 + $0xe0] sm:$0xff]
    %v4372 = vld [vmem:[#allocation7 + $0xe8] sm:$0xff]
    %v4373 = vld [vmem:[#allocation7 + $0xf0] sm:$0xff]
    %v4374 = vld [vmem:[#allocation7 + $0xf8] sm:$0xff]
    %v4375 = vld [vmem:[#allocation7 + $0x100] sm:$0xff]
    %v4376 = vld [vmem:[#allocation7 + $0x108] sm:$0xff]
    %v4377 = vld [vmem:[#allocation7 + $0x110] sm:$0xff]
    %v4378 = vld [vmem:[#allocation7 + $0x118] sm:$0xff]
    %v4379 = vld [vmem:[#allocation7 + $0x120] sm:$0xff]
    %v4380 = vld [vmem:[#allocation7 + $0x128] sm:$0xff]
    %v4381 = vld [vmem:[#allocation7 + $0x130] sm:$0xff]
    %v4382 = vld [vmem:[#allocation7 + $0x138] sm:$0xff]
    %v4383 = vld [vmem:[#allocation7 + $0x140] sm:$0xff]
    %v4384 = vld [vmem:[#allocation7 + $0x148] sm:$0xff]
    %v4385 = vld [vmem:[#allocation7 + $0x150] sm:$0xff]
    %v4386 = vld [vmem:[#allocation7 + $0x158] sm:$0xff]
    %v4387 = vld [vmem:[#allocation7 + $0x160] sm:$0xff]
    %v4388 = vld [vmem:[#allocation7 + $0x168] sm:$0xff]
    %v4389 = vld [vmem:[#allocation7 + $0x170] sm:$0xff]
    %v4390 = vld [vmem:[#allocation7 + $0x178] sm:$0xff]
    %v4391 = vld [vmem:[#allocation7 + $0x180] sm:$0xff]
    %v4392 = vld [vmem:[#allocation7 + $0x188] sm:$0xff]
    %v4393 = vld [vmem:[#allocation7 + $0x190] sm:$0xff]
    %v4394 = vld [vmem:[#allocation7 + $0x198] sm:$0xff]
    %v4395 = vld [vmem:[#allocation7 + $0x1a0] sm:$0xff]
    %v4396 = vld [vmem:[#allocation7 + $0x1a8] sm:$0xff]
    %v4397 = vld [vmem:[#allocation7 + $0x1b0] sm:$0xff]
    %v4398 = vld [vmem:[#allocation7 + $0x1b8] sm:$0xff]
    %v4399 = vld [vmem:[#allocation7 + $0x1c0] sm:$0xff]
    %v4400 = vld [vmem:[#allocation7 + $0x1c8] sm:$0xff]
    %v4401 = vld [vmem:[#allocation7 + $0x1d0] sm:$0xff]
    %v4402 = vld [vmem:[#allocation7 + $0x1d8] sm:$0xff]
    %v4403 = vld [vmem:[#allocation7 + $0x1e0] sm:$0xff]
    %v4404 = vld [vmem:[#allocation7 + $0x1e8] sm:$0xff]
    %v4405 = vld [vmem:[#allocation7 + $0x1f0] sm:$0xff]
    %v4406 = vld [vmem:[#allocation7 + $0x1f8] sm:$0xff]
    %v4407 = vld [vmem:[#allocation7 + $0x200] sm:$0xff]
    %v4408 = vld [vmem:[#allocation7 + $0x208] sm:$0xff]
    %v4409 = vld [vmem:[#allocation7 + $0x210] sm:$0xff]
    %v4410 = vld [vmem:[#allocation7 + $0x218] sm:$0xff]
    %v4411 = vld [vmem:[#allocation7 + $0x220] sm:$0xff]
    %v4412 = vld [vmem:[#allocation7 + $0x228] sm:$0xff]
    %v4413 = vld [vmem:[#allocation7 + $0x230] sm:$0xff]
    %v4414 = vld [vmem:[#allocation7 + $0x238] sm:$0xff]
    %v4415 = vld [vmem:[#allocation7 + $0x240] sm:$0xff]
    %v4416 = vld [vmem:[#allocation7 + $0x248] sm:$0xff]
    %v4417 = vld [vmem:[#allocation7 + $0x250] sm:$0xff]
    %v4418 = vld [vmem:[#allocation7 + $0x258] sm:$0xff]
    %v4419 = vld [vmem:[#allocation7 + $0x260] sm:$0xff]
    %v4420 = vld [vmem:[#allocation7 + $0x268] sm:$0xff]
    %v4421 = vld [vmem:[#allocation7 + $0x270] sm:$0xff]
    %v4422 = vld [vmem:[#allocation7 + $0x278] sm:$0xff]
    %v4423 = vld [vmem:[#allocation7 + $0x280] sm:$0xff]
    %v4424 = vld [vmem:[#allocation7 + $0x288] sm:$0xff]
    %v4425 = vld [vmem:[#allocation7 + $0x290] sm:$0xff]
    %v4426 = vld [vmem:[#allocation7 + $0x298] sm:$0xff]
    %v4427 = vld [vmem:[#allocation7 + $0x2a0] sm:$0xff]
    %v4428 = vld [vmem:[#allocation7 + $0x2a8] sm:$0xff]
    %v4429 = vld [vmem:[#allocation7 + $0x2b0] sm:$0xff]
    %v4430 = vld [vmem:[#allocation7 + $0x2b8] sm:$0xff]
    %v4431 = vld [vmem:[#allocation7 + $0x2c0] sm:$0xff]
    %v4432 = vld [vmem:[#allocation7 + $0x2c8] sm:$0xff]
    %v4433 = vld [vmem:[#allocation7 + $0x2d0] sm:$0xff]
    %v4434 = vld [vmem:[#allocation7 + $0x2d8] sm:$0xff]
    %v4435 = vld [vmem:[#allocation7 + $0x2e0] sm:$0xff]
    %v4436 = vld [vmem:[#allocation7 + $0x2e8] sm:$0xff]
    %v4437 = vld [vmem:[#allocation7 + $0x2f0] sm:$0xff]
    %v4438 = vld [vmem:[#allocation7 + $0x2f8] sm:$0xff]
    %v4439 = vld [vmem:[#allocation7 + $0x300] sm:$0xff]
    %v4440 = vld [vmem:[#allocation7 + $0x308] sm:$0xff]
    %v4441 = vld [vmem:[#allocation7 + $0x310] sm:$0xff]
    %v4442 = vld [vmem:[#allocation7 + $0x318] sm:$0xff]
    %v4443 = vld [vmem:[#allocation7 + $0x320] sm:$0xff]
    %v4444 = vld [vmem:[#allocation7 + $0x328] sm:$0xff]
    %v4445 = vld [vmem:[#allocation7 + $0x330] sm:$0xff]
    %v4446 = vld [vmem:[#allocation7 + $0x338] sm:$0xff]
    %v4447 = vld [vmem:[#allocation7 + $0x340] sm:$0xff]
    %v4448 = vld [vmem:[#allocation7 + $0x348] sm:$0xff]
    %v4449 = vld [vmem:[#allocation7 + $0x350] sm:$0xff]
    %v4450 = vld [vmem:[#allocation7 + $0x358] sm:$0xff]
    %v4451 = vld [vmem:[#allocation7 + $0x360] sm:$0xff]
    %v4452 = vld [vmem:[#allocation7 + $0x368] sm:$0xff]
    %v4453 = vld [vmem:[#allocation7 + $0x370] sm:$0xff]
    %v4454 = vld [vmem:[#allocation7 + $0x378] sm:$0xff]
    %v4455 = vld [vmem:[#allocation7 + $0x380] sm:$0xff]
    %v4456 = vld [vmem:[#allocation7 + $0x388] sm:$0xff]
    %v4457 = vld [vmem:[#allocation7 + $0x390] sm:$0xff]
    %v4458 = vld [vmem:[#allocation7 + $0x398] sm:$0xff]
    %v4459 = vld [vmem:[#allocation7 + $0x3a0] sm:$0xff]
    %v4460 = vld [vmem:[#allocation7 + $0x3a8] sm:$0xff]
    %v4461 = vld [vmem:[#allocation7 + $0x3b0] sm:$0xff]
    %v4462 = vld [vmem:[#allocation7 + $0x3b8] sm:$0xff]
    %v4463 = vld [vmem:[#allocation7 + $0x3c0] sm:$0xff]
    %v4464 = vld [vmem:[#allocation7 + $0x3c8] sm:$0xff]
    %v4465 = vld [vmem:[#allocation7 + $0x3d0] sm:$0xff]
    %v4466 = vld [vmem:[#allocation7 + $0x3d8] sm:$0xff]
    %v4467 = vld [vmem:[#allocation7 + $0x3e0] sm:$0xff]
    %v4468 = vld [vmem:[#allocation7 + $0x3e8] sm:$0xff]
    %v4469 = vld [vmem:[#allocation7 + $0x3f0] sm:$0xff]
    %v4470 = vld [vmem:[#allocation7 + $0x3f8] sm:$0xff]
    %v4599 = vunpack.c.l.b16 %v4343
    %v4600 = vunpack.c.h.b16 %v4343
    %v4601 = vunpack.c.l.b16 %v4344
    %v4602 = vunpack.c.h.b16 %v4344
    %v4603 = vunpack.c.l.b16 %v4345
    %v4604 = vunpack.c.h.b16 %v4345
    %v4605 = vunpack.c.l.b16 %v4346
    %v4606 = vunpack.c.h.b16 %v4346
    %v4607 = vunpack.c.l.b16 %v4347
    %v4608 = vunpack.c.h.b16 %v4347
    %v4609 = vunpack.c.l.b16 %v4348
    %v4610 = vunpack.c.h.b16 %v4348
    %v4611 = vunpack.c.l.b16 %v4349
    %v4612 = vunpack.c.h.b16 %v4349
    %v4613 = vunpack.c.l.b16 %v4350
    %v4614 = vunpack.c.h.b16 %v4350
    %v4615 = vunpack.c.l.b16 %v4351
    %v4616 = vunpack.c.h.b16 %v4351
    %v4617 = vunpack.c.l.b16 %v4352
    %v4618 = vunpack.c.h.b16 %v4352
    %v4619 = vunpack.c.l.b16 %v4353
    %v4620 = vunpack.c.h.b16 %v4353
    %v4621 = vunpack.c.l.b16 %v4354
    %v4622 = vunpack.c.h.b16 %v4354
    %v4623 = vunpack.c.l.b16 %v4355
    %v4624 = vunpack.c.h.b16 %v4355
    %v4625 = vunpack.c.l.b16 %v4356
    %v4626 = vunpack.c.h.b16 %v4356
    %v4627 = vunpack.c.l.b16 %v4357
    %v4628 = vunpack.c.h.b16 %v4357
    %v4629 = vunpack.c.l.b16 %v4358
    %v4630 = vunpack.c.h.b16 %v4358
    %v4631 = vunpack.c.l.b16 %v4359
    %v4632 = vunpack.c.h.b16 %v4359
    %v4633 = vunpack.c.l.b16 %v4360
    %v4634 = vunpack.c.h.b16 %v4360
    %v4635 = vunpack.c.l.b16 %v4361
    %v4636 = vunpack.c.h.b16 %v4361
    %v4637 = vunpack.c.l.b16 %v4362
    %v4638 = vunpack.c.h.b16 %v4362
    %v4639 = vunpack.c.l.b16 %v4363
    %v4640 = vunpack.c.h.b16 %v4363
    %v4641 = vunpack.c.l.b16 %v4364
    %v4642 = vunpack.c.h.b16 %v4364
    %v4643 = vunpack.c.l.b16 %v4365
    %v4644 = vunpack.c.h.b16 %v4365
    %v4645 = vunpack.c.l.b16 %v4366
    %v4646 = vunpack.c.h.b16 %v4366
    %v4647 = vunpack.c.l.b16 %v4367
    %v4648 = vunpack.c.h.b16 %v4367
    %v4649 = vunpack.c.l.b16 %v4368
    %v4650 = vunpack.c.h.b16 %v4368
    %v4651 = vunpack.c.l.b16 %v4369
    %v4652 = vunpack.c.h.b16 %v4369
    %v4653 = vunpack.c.l.b16 %v4370
    %v4654 = vunpack.c.h.b16 %v4370
    %v4655 = vunpack.c.l.b16 %v4371
    %v4656 = vunpack.c.h.b16 %v4371
    %v4657 = vunpack.c.l.b16 %v4372
    %v4658 = vunpack.c.h.b16 %v4372
    %v4659 = vunpack.c.l.b16 %v4373
    %v4660 = vunpack.c.h.b16 %v4373
    %v4661 = vunpack.c.l.b16 %v4374
    %v4662 = vunpack.c.h.b16 %v4374
    %v4663 = vunpack.c.l.b16 %v4375
    %v4664 = vunpack.c.h.b16 %v4375
    %v4665 = vunpack.c.l.b16 %v4376
    %v4666 = vunpack.c.h.b16 %v4376
    %v4667 = vunpack.c.l.b16 %v4377
    %v4668 = vunpack.c.h.b16 %v4377
    %v4669 = vunpack.c.l.b16 %v4378
    %v4670 = vunpack.c.h.b16 %v4378
    %v4671 = vunpack.c.l.b16 %v4379
    %v4672 = vunpack.c.h.b16 %v4379
    %v4673 = vunpack.c.l.b16 %v4380
    %v4674 = vunpack.c.h.b16 %v4380
    %v4675 = vunpack.c.l.b16 %v4381
    %v4676 = vunpack.c.h.b16 %v4381
    %v4677 = vunpack.c.l.b16 %v4382
    %v4678 = vunpack.c.h.b16 %v4382
    %v4679 = vunpack.c.l.b16 %v4383
    %v4680 = vunpack.c.h.b16 %v4383
    %v4681 = vunpack.c.l.b16 %v4384
    %v4682 = vunpack.c.h.b16 %v4384
    %v4683 = vunpack.c.l.b16 %v4385
    %v4684 = vunpack.c.h.b16 %v4385
    %v4685 = vunpack.c.l.b16 %v4386
    %v4686 = vunpack.c.h.b16 %v4386
    %v4687 = vunpack.c.l.b16 %v4387
    %v4688 = vunpack.c.h.b16 %v4387
    %v4689 = vunpack.c.l.b16 %v4388
    %v4690 = vunpack.c.h.b16 %v4388
    %v4691 = vunpack.c.l.b16 %v4389
    %v4692 = vunpack.c.h.b16 %v4389
    %v4693 = vunpack.c.l.b16 %v4390
    %v4694 = vunpack.c.h.b16 %v4390
    %v4695 = vunpack.c.l.b16 %v4391
    %v4696 = vunpack.c.h.b16 %v4391
    %v4697 = vunpack.c.l.b16 %v4392
    %v4698 = vunpack.c.h.b16 %v4392
    %v4699 = vunpack.c.l.b16 %v4393
    %v4700 = vunpack.c.h.b16 %v4393
    %v4701 = vunpack.c.l.b16 %v4394
    %v4702 = vunpack.c.h.b16 %v4394
    %v4703 = vunpack.c.l.b16 %v4395
    %v4704 = vunpack.c.h.b16 %v4395
    %v4705 = vunpack.c.l.b16 %v4396
    %v4706 = vunpack.c.h.b16 %v4396
    %v4707 = vunpack.c.l.b16 %v4397
    %v4708 = vunpack.c.h.b16 %v4397
    %v4709 = vunpack.c.l.b16 %v4398
    %v4710 = vunpack.c.h.b16 %v4398
    %v4711 = vunpack.c.l.b16 %v4399
    %v4712 = vunpack.c.h.b16 %v4399
    %v4713 = vunpack.c.l.b16 %v4400
    %v4714 = vunpack.c.h.b16 %v4400
    %v4715 = vunpack.c.l.b16 %v4401
    %v4716 = vunpack.c.h.b16 %v4401
    %v4717 = vunpack.c.l.b16 %v4402
    %v4718 = vunpack.c.h.b16 %v4402
    %v4719 = vunpack.c.l.b16 %v4403
    %v4720 = vunpack.c.h.b16 %v4403
    %v4721 = vunpack.c.l.b16 %v4404
    %v4722 = vunpack.c.h.b16 %v4404
    %v4723 = vunpack.c.l.b16 %v4405
    %v4724 = vunpack.c.h.b16 %v4405
    %v4725 = vunpack.c.l.b16 %v4406
    %v4726 = vunpack.c.h.b16 %v4406
    %v4727 = vunpack.c.l.b16 %v4407
    %v4728 = vunpack.c.h.b16 %v4407
    %v4729 = vunpack.c.l.b16 %v4408
    %v4730 = vunpack.c.h.b16 %v4408
    %v4731 = vunpack.c.l.b16 %v4409
    %v4732 = vunpack.c.h.b16 %v4409
    %v4733 = vunpack.c.l.b16 %v4410
    %v4734 = vunpack.c.h.b16 %v4410
    %v4735 = vunpack.c.l.b16 %v4411
    %v4736 = vunpack.c.h.b16 %v4411
    %v4737 = vunpack.c.l.b16 %v4412
    %v4738 = vunpack.c.h.b16 %v4412
    %v4739 = vunpack.c.l.b16 %v4413
    %v4740 = vunpack.c.h.b16 %v4413
    %v4741 = vunpack.c.l.b16 %v4414
    %v4742 = vunpack.c.h.b16 %v4414
    %v4743 = vunpack.c.l.b16 %v4415
    %v4744 = vunpack.c.h.b16 %v4415
    %v4745 = vunpack.c.l.b16 %v4416
    %v4746 = vunpack.c.h.b16 %v4416
    %v4747 = vunpack.c.l.b16 %v4417
    %v4748 = vunpack.c.h.b16 %v4417
    %v4749 = vunpack.c.l.b16 %v4418
    %v4750 = vunpack.c.h.b16 %v4418
    %v4751 = vunpack.c.l.b16 %v4419
    %v4752 = vunpack.c.h.b16 %v4419
    %v4753 = vunpack.c.l.b16 %v4420
    %v4754 = vunpack.c.h.b16 %v4420
    %v4755 = vunpack.c.l.b16 %v4421
    %v4756 = vunpack.c.h.b16 %v4421
    %v4757 = vunpack.c.l.b16 %v4422
    %v4758 = vunpack.c.h.b16 %v4422
    %v4759 = vunpack.c.l.b16 %v4423
    %v4760 = vunpack.c.h.b16 %v4423
    %v4761 = vunpack.c.l.b16 %v4424
    %v4762 = vunpack.c.h.b16 %v4424
    %v4763 = vunpack.c.l.b16 %v4425
    %v4764 = vunpack.c.h.b16 %v4425
    %v4765 = vunpack.c.l.b16 %v4426
    %v4766 = vunpack.c.h.b16 %v4426
    %v4767 = vunpack.c.l.b16 %v4427
    %v4768 = vunpack.c.h.b16 %v4427
    %v4769 = vunpack.c.l.b16 %v4428
    %v4770 = vunpack.c.h.b16 %v4428
    %v4771 = vunpack.c.l.b16 %v4429
    %v4772 = vunpack.c.h.b16 %v4429
    %v4773 = vunpack.c.l.b16 %v4430
    %v4774 = vunpack.c.h.b16 %v4430
    %v4775 = vunpack.c.l.b16 %v4431
    %v4776 = vunpack.c.h.b16 %v4431
    %v4777 = vunpack.c.l.b16 %v4432
    %v4778 = vunpack.c.h.b16 %v4432
    %v4779 = vunpack.c.l.b16 %v4433
    %v4780 = vunpack.c.h.b16 %v4433
    %v4781 = vunpack.c.l.b16 %v4434
    %v4782 = vunpack.c.h.b16 %v4434
    %v4783 = vunpack.c.l.b16 %v4435
    %v4784 = vunpack.c.h.b16 %v4435
    %v4785 = vunpack.c.l.b16 %v4436
    %v4786 = vunpack.c.h.b16 %v4436
    %v4787 = vunpack.c.l.b16 %v4437
    %v4788 = vunpack.c.h.b16 %v4437
    %v4789 = vunpack.c.l.b16 %v4438
    %v4790 = vunpack.c.h.b16 %v4438
    %v4791 = vunpack.c.l.b16 %v4439
    %v4792 = vunpack.c.h.b16 %v4439
    %v4793 = vunpack.c.l.b16 %v4440
    %v4794 = vunpack.c.h.b16 %v4440
    %v4795 = vunpack.c.l.b16 %v4441
    %v4796 = vunpack.c.h.b16 %v4441
    %v4797 = vunpack.c.l.b16 %v4442
    %v4798 = vunpack.c.h.b16 %v4442
    %v4799 = vunpack.c.l.b16 %v4443
    %v4800 = vunpack.c.h.b16 %v4443
    %v4801 = vunpack.c.l.b16 %v4444
    %v4802 = vunpack.c.h.b16 %v4444
    %v4803 = vunpack.c.l.b16 %v4445
    %v4804 = vunpack.c.h.b16 %v4445
    %v4805 = vunpack.c.l.b16 %v4446
    %v4806 = vunpack.c.h.b16 %v4446
    %v4807 = vunpack.c.l.b16 %v4447
    %v4808 = vunpack.c.h.b16 %v4447
    %v4809 = vunpack.c.l.b16 %v4448
    %v4810 = vunpack.c.h.b16 %v4448
    %v4811 = vunpack.c.l.b16 %v4449
    %v4812 = vunpack.c.h.b16 %v4449
    %v4813 = vunpack.c.l.b16 %v4450
    %v4814 = vunpack.c.h.b16 %v4450
    %v4815 = vunpack.c.l.b16 %v4451
    %v4816 = vunpack.c.h.b16 %v4451
    %v4817 = vunpack.c.l.b16 %v4452
    %v4818 = vunpack.c.h.b16 %v4452
    %v4819 = vunpack.c.l.b16 %v4453
    %v4820 = vunpack.c.h.b16 %v4453
    %v4821 = vunpack.c.l.b16 %v4454
    %v4822 = vunpack.c.h.b16 %v4454
    %v4823 = vunpack.c.l.b16 %v4455
    %v4824 = vunpack.c.h.b16 %v4455
    %v4825 = vunpack.c.l.b16 %v4456
    %v4826 = vunpack.c.h.b16 %v4456
    %v4827 = vunpack.c.l.b16 %v4457
    %v4828 = vunpack.c.h.b16 %v4457
    %v4829 = vunpack.c.l.b16 %v4458
    %v4830 = vunpack.c.h.b16 %v4458
    %v4831 = vunpack.c.l.b16 %v4459
    %v4832 = vunpack.c.h.b16 %v4459
    %v4833 = vunpack.c.l.b16 %v4460
    %v4834 = vunpack.c.h.b16 %v4460
    %v4835 = vunpack.c.l.b16 %v4461
    %v4836 = vunpack.c.h.b16 %v4461
    %v4837 = vunpack.c.l.b16 %v4462
    %v4838 = vunpack.c.h.b16 %v4462
    %v4839 = vunpack.c.l.b16 %v4463
    %v4840 = vunpack.c.h.b16 %v4463
    %v4841 = vunpack.c.l.b16 %v4464
    %v4842 = vunpack.c.h.b16 %v4464
    %v4843 = vunpack.c.l.b16 %v4465
    %v4844 = vunpack.c.h.b16 %v4465
    %v4845 = vunpack.c.l.b16 %v4466
    %v4846 = vunpack.c.h.b16 %v4466
    %v4847 = vunpack.c.l.b16 %v4467
    %v4848 = vunpack.c.h.b16 %v4467
    %v4849 = vunpack.c.l.b16 %v4468
    %v4850 = vunpack.c.h.b16 %v4468
    %v4851 = vunpack.c.l.b16 %v4469
    %v4852 = vunpack.c.h.b16 %v4469
    %v4853 = vunpack.c.l.b16 %v4470
    %v4854 = vunpack.c.h.b16 %v4470
    %v4855 = vpack.c.b16 %v4603, %v4599
    %v4856 = vpack.c.b16 %v4604, %v4600
    %v4857 = vpack.c.b16 %v4605, %v4601
    %v4858 = vpack.c.b16 %v4606, %v4602
    %v4859 = vpack.c.b16 %v4611, %v4607
    %v4860 = vpack.c.b16 %v4612, %v4608
    %v4861 = vpack.c.b16 %v4613, %v4609
    %v4862 = vpack.c.b16 %v4614, %v4610
    %v4863 = vpack.c.b16 %v4619, %v4615
    %v4864 = vpack.c.b16 %v4620, %v4616
    %v4865 = vpack.c.b16 %v4621, %v4617
    %v4866 = vpack.c.b16 %v4622, %v4618
    %v4867 = vpack.c.b16 %v4627, %v4623
    %v4868 = vpack.c.b16 %v4628, %v4624
    %v4869 = vpack.c.b16 %v4629, %v4625
    %v4870 = vpack.c.b16 %v4630, %v4626
    %v4871 = vpack.c.b16 %v4635, %v4631
    %v4872 = vpack.c.b16 %v4636, %v4632
    %v4873 = vpack.c.b16 %v4637, %v4633
    %v4874 = vpack.c.b16 %v4638, %v4634
    %v4875 = vpack.c.b16 %v4643, %v4639
    %v4876 = vpack.c.b16 %v4644, %v4640
    %v4877 = vpack.c.b16 %v4645, %v4641
    %v4878 = vpack.c.b16 %v4646, %v4642
    %v4879 = vpack.c.b16 %v4651, %v4647
    %v4880 = vpack.c.b16 %v4652, %v4648
    %v4881 = vpack.c.b16 %v4653, %v4649
    %v4882 = vpack.c.b16 %v4654, %v4650
    %v4883 = vpack.c.b16 %v4659, %v4655
    %v4884 = vpack.c.b16 %v4660, %v4656
    %v4885 = vpack.c.b16 %v4661, %v4657
    %v4886 = vpack.c.b16 %v4662, %v4658
    %v4887 = vpack.c.b16 %v4667, %v4663
    %v4888 = vpack.c.b16 %v4668, %v4664
    %v4889 = vpack.c.b16 %v4669, %v4665
    %v4890 = vpack.c.b16 %v4670, %v4666
    %v4891 = vpack.c.b16 %v4675, %v4671
    %v4892 = vpack.c.b16 %v4676, %v4672
    %v4893 = vpack.c.b16 %v4677, %v4673
    %v4894 = vpack.c.b16 %v4678, %v4674
    %v4895 = vpack.c.b16 %v4683, %v4679
    %v4896 = vpack.c.b16 %v4684, %v4680
    %v4897 = vpack.c.b16 %v4685, %v4681
    %v4898 = vpack.c.b16 %v4686, %v4682
    %v4899 = vpack.c.b16 %v4691, %v4687
    %v4900 = vpack.c.b16 %v4692, %v4688
    %v4901 = vpack.c.b16 %v4693, %v4689
    %v4902 = vpack.c.b16 %v4694, %v4690
    %v4903 = vpack.c.b16 %v4699, %v4695
    %v4904 = vpack.c.b16 %v4700, %v4696
    %v4905 = vpack.c.b16 %v4701, %v4697
    %v4906 = vpack.c.b16 %v4702, %v4698
    %v4907 = vpack.c.b16 %v4707, %v4703
    %v4908 = vpack.c.b16 %v4708, %v4704
    %v4909 = vpack.c.b16 %v4709, %v4705
    %v4910 = vpack.c.b16 %v4710, %v4706
    %v4911 = vpack.c.b16 %v4715, %v4711
    %v4912 = vpack.c.b16 %v4716, %v4712
    %v4913 = vpack.c.b16 %v4717, %v4713
    %v4914 = vpack.c.b16 %v4718, %v4714
    %v4915 = vpack.c.b16 %v4723, %v4719
    %v4916 = vpack.c.b16 %v4724, %v4720
    %v4917 = vpack.c.b16 %v4725, %v4721
    %v4918 = vpack.c.b16 %v4726, %v4722
    %v4919 = vpack.c.b16 %v4731, %v4727
    %v4920 = vpack.c.b16 %v4732, %v4728
    %v4921 = vpack.c.b16 %v4733, %v4729
    %v4922 = vpack.c.b16 %v4734, %v4730
    %v4923 = vpack.c.b16 %v4739, %v4735
    %v4924 = vpack.c.b16 %v4740, %v4736
    %v4925 = vpack.c.b16 %v4741, %v4737
    %v4926 = vpack.c.b16 %v4742, %v4738
    %v4927 = vpack.c.b16 %v4747, %v4743
    %v4928 = vpack.c.b16 %v4748, %v4744
    %v4929 = vpack.c.b16 %v4749, %v4745
    %v4930 = vpack.c.b16 %v4750, %v4746
    %v4931 = vpack.c.b16 %v4755, %v4751
    %v4932 = vpack.c.b16 %v4756, %v4752
    %v4933 = vpack.c.b16 %v4757, %v4753
    %v4934 = vpack.c.b16 %v4758, %v4754
    %v4935 = vpack.c.b16 %v4763, %v4759
    %v4936 = vpack.c.b16 %v4764, %v4760
    %v4937 = vpack.c.b16 %v4765, %v4761
    %v4938 = vpack.c.b16 %v4766, %v4762
    %v4939 = vpack.c.b16 %v4771, %v4767
    %v4940 = vpack.c.b16 %v4772, %v4768
    %v4941 = vpack.c.b16 %v4773, %v4769
    %v4942 = vpack.c.b16 %v4774, %v4770
    %v4943 = vpack.c.b16 %v4779, %v4775
    %v4944 = vpack.c.b16 %v4780, %v4776
    %v4945 = vpack.c.b16 %v4781, %v4777
    %v4946 = vpack.c.b16 %v4782, %v4778
    %v4947 = vpack.c.b16 %v4787, %v4783
    %v4948 = vpack.c.b16 %v4788, %v4784
    %v4949 = vpack.c.b16 %v4789, %v4785
    %v4950 = vpack.c.b16 %v4790, %v4786
    %v4951 = vpack.c.b16 %v4795, %v4791
    %v4952 = vpack.c.b16 %v4796, %v4792
    %v4953 = vpack.c.b16 %v4797, %v4793
    %v4954 = vpack.c.b16 %v4798, %v4794
    %v4955 = vpack.c.b16 %v4803, %v4799
    %v4956 = vpack.c.b16 %v4804, %v4800
    %v4957 = vpack.c.b16 %v4805, %v4801
    %v4958 = vpack.c.b16 %v4806, %v4802
    %v4959 = vpack.c.b16 %v4811, %v4807
    %v4960 = vpack.c.b16 %v4812, %v4808
    %v4961 = vpack.c.b16 %v4813, %v4809
    %v4962 = vpack.c.b16 %v4814, %v4810
    %v4963 = vpack.c.b16 %v4819, %v4815
    %v4964 = vpack.c.b16 %v4820, %v4816
    %v4965 = vpack.c.b16 %v4821, %v4817
    %v4966 = vpack.c.b16 %v4822, %v4818
    %v4967 = vpack.c.b16 %v4827, %v4823
    %v4968 = vpack.c.b16 %v4828, %v4824
    %v4969 = vpack.c.b16 %v4829, %v4825
    %v4970 = vpack.c.b16 %v4830, %v4826
    %v4971 = vpack.c.b16 %v4835, %v4831
    %v4972 = vpack.c.b16 %v4836, %v4832
    %v4973 = vpack.c.b16 %v4837, %v4833
    %v4974 = vpack.c.b16 %v4838, %v4834
    %v4975 = vpack.c.b16 %v4843, %v4839
    %v4976 = vpack.c.b16 %v4844, %v4840
    %v4977 = vpack.c.b16 %v4845, %v4841
    %v4978 = vpack.c.b16 %v4846, %v4842
    %v4979 = vpack.c.b16 %v4851, %v4847
    %v4980 = vpack.c.b16 %v4852, %v4848
    %v4981 = vpack.c.b16 %v4853, %v4849
    %v4982 = vpack.c.b16 %v4854, %v4850
    %5111 = vmatpush.bf16.msra.mxu0 %v4883
    %5112 = vmatpush.bf16.msra.mxu0 %v4879
    %5113 = vmatpush.bf16.msra.mxu0 %v4875
    %5114 = vmatpush.bf16.msra.mxu0 %v4871
    %5115 = vmatpush.bf16.msra.mxu0 %v4867
    %5116 = vmatpush.bf16.msra.mxu0 %v4863
    %5117 = vmatpush.bf16.msra.mxu0 %v4859
    %5118 = vmatpush.bf16.msra.mxu0 %v4855
    %5119 = vmatmul.bf16.gmra.mxu0 %v4339
    %v5120 = vpop.f32.mrf.mxu0
    %v5121 = vadd.f32 0.0, %v5120
    %v5122 = vpop.f32.mrf.mxu0
    %5123 = vdwg.mxu0
    %5124 = vmatpush.bf16.msra.mxu0 %v4915
    %5125 = vmatpush.bf16.msra.mxu0 %v4911
    %5126 = vmatpush.bf16.msra.mxu0 %v4907
    %5127 = vmatpush.bf16.msra.mxu0 %v4903
    %5128 = vmatpush.bf16.msra.mxu0 %v4899
    %5129 = vmatpush.bf16.msra.mxu0 %v4895
    %5130 = vmatpush.bf16.msra.mxu0 %v4891
    %5131 = vmatpush.bf16.msra.mxu0 %v4887
    %5132 = vmatmul.bf16.gmra.mxu0 %v4340
    %v5133 = vpop.f32.mrf.mxu0
    %v5134 = vadd.f32 %v5121, %v5133
    %v5135 = vpop.f32.mrf.mxu0
    %5136 = vdwg.mxu0
    %5137 = vmatpush.bf16.msra.mxu0 %v4947
    %5138 = vmatpush.bf16.msra.mxu0 %v4943
    %5139 = vmatpush.bf16.msra.mxu0 %v4939
    %5140 = vmatpush.bf16.msra.mxu0 %v4935
    %5141 = vmatpush.bf16.msra.mxu0 %v4931
    %5142 = vmatpush.bf16.msra.mxu0 %v4927
    %5143 = vmatpush.bf16.msra.mxu0 %v4923
    %5144 = vmatpush.bf16.msra.mxu0 %v4919
    %5145 = vmatmul.bf16.gmra.mxu0 %v4341
    %v5146 = vpop.f32.mrf.mxu0
    %v5147 = vadd.f32 %v5134, %v5146
    %v5148 = vpop.f32.mrf.mxu0
    %5149 = vdwg.mxu0
    %5150 = vmatpush.bf16.msra.mxu0 %v4979
    %5151 = vmatpush.bf16.msra.mxu0 %v4975
    %5152 = vmatpush.bf16.msra.mxu0 %v4971
    %5153 = vmatpush.bf16.msra.mxu0 %v4967
    %5154 = vmatpush.bf16.msra.mxu0 %v4963
    %5155 = vmatpush.bf16.msra.mxu0 %v4959
    %5156 = vmatpush.bf16.msra.mxu0 %v4955
    %5157 = vmatpush.bf16.msra.mxu0 %v4951
    %5158 = vmatmul.bf16.gmra.mxu0 %v4342
    %v5159 = vpop.f32.mrf.mxu0
    %v5160 = vadd.f32 %v5147, %v5159
    %v5161 = vpop.f32.mrf.mxu0
    %5162 = vdwg.mxu0
    %5163 = vmatpush.bf16.msra.mxu0 %v4884
    %5164 = vmatpush.bf16.msra.mxu0 %v4880
    %5165 = vmatpush.bf16.msra.mxu0 %v4876
    %5166 = vmatpush.bf16.msra.mxu0 %v4872
    %5167 = vmatpush.bf16.msra.mxu0 %v4868
    %5168 = vmatpush.bf16.msra.mxu0 %v4864
    %5169 = vmatpush.bf16.msra.mxu0 %v4860
    %5170 = vmatpush.bf16.msra.mxu0 %v4856
    %5171 = vmatmul.bf16.gmra.mxu0 %v4339
    %v5172 = vpop.f32.mrf.mxu0
    %v5173 = vadd.f32 0.0, %v5172
    %v5174 = vpop.f32.mrf.mxu0
    %5175 = vdwg.mxu0
    %5176 = vmatpush.bf16.msra.mxu0 %v4916
    %5177 = vmatpush.bf16.msra.mxu0 %v4912
    %5178 = vmatpush.bf16.msra.mxu0 %v4908
    %5179 = vmatpush.bf16.msra.mxu0 %v4904
    %5180 = vmatpush.bf16.msra.mxu0 %v4900
    %5181 = vmatpush.bf16.msra.mxu0 %v4896
    %5182 = vmatpush.bf16.msra.mxu0 %v4892
    %5183 = vmatpush.bf16.msra.mxu0 %v4888
    %5184 = vmatmul.bf16.gmra.mxu0 %v4340
    %v5185 = vpop.f32.mrf.mxu0
    %v5186 = vadd.f32 %v5173, %v5185
    %v5187 = vpop.f32.mrf.mxu0
    %5188 = vdwg.mxu0
    %5189 = vmatpush.bf16.msra.mxu0 %v4948
    %5190 = vmatpush.bf16.msra.mxu0 %v4944
    %5191 = vmatpush.bf16.msra.mxu0 %v4940
    %5192 = vmatpush.bf16.msra.mxu0 %v4936
    %5193 = vmatpush.bf16.msra.mxu0 %v4932
    %5194 = vmatpush.bf16.msra.mxu0 %v4928
    %5195 = vmatpush.bf16.msra.mxu0 %v4924
    %5196 = vmatpush.bf16.msra.mxu0 %v4920
    %5197 = vmatmul.bf16.gmra.mxu0 %v4341
    %v5198 = vpop.f32.mrf.mxu0
    %v5199 = vadd.f32 %v5186, %v5198
    %v5200 = vpop.f32.mrf.mxu0
    %5201 = vdwg.mxu0
    %5202 = vmatpush.bf16.msra.mxu0 %v4980
    %5203 = vmatpush.bf16.msra.mxu0 %v4976
    %5204 = vmatpush.bf16.msra.mxu0 %v4972
    %5205 = vmatpush.bf16.msra.mxu0 %v4968
    %5206 = vmatpush.bf16.msra.mxu0 %v4964
    %5207 = vmatpush.bf16.msra.mxu0 %v4960
    %5208 = vmatpush.bf16.msra.mxu0 %v4956
    %5209 = vmatpush.bf16.msra.mxu0 %v4952
    %5210 = vmatmul.bf16.gmra.mxu0 %v4342
    %v5211 = vpop.f32.mrf.mxu0
    %v5212 = vadd.f32 %v5199, %v5211
    %v5213 = vpop.f32.mrf.mxu0
    %5214 = vdwg.mxu0
    %5215 = vmatpush.bf16.msra.mxu0 %v4885
    %5216 = vmatpush.bf16.msra.mxu0 %v4881
    %5217 = vmatpush.bf16.msra.mxu0 %v4877
    %5218 = vmatpush.bf16.msra.mxu0 %v4873
    %5219 = vmatpush.bf16.msra.mxu0 %v4869
    %5220 = vmatpush.bf16.msra.mxu0 %v4865
    %5221 = vmatpush.bf16.msra.mxu0 %v4861
    %5222 = vmatpush.bf16.msra.mxu0 %v4857
    %5223 = vmatmul.bf16.gmra.mxu0 %v4339
    %v5224 = vpop.f32.mrf.mxu0
    %v5225 = vadd.f32 0.0, %v5224
    %v5226 = vpop.f32.mrf.mxu0
    %5227 = vdwg.mxu0
    %5228 = vmatpush.bf16.msra.mxu0 %v4917
    %5229 = vmatpush.bf16.msra.mxu0 %v4913
    %5230 = vmatpush.bf16.msra.mxu0 %v4909
    %5231 = vmatpush.bf16.msra.mxu0 %v4905
    %5232 = vmatpush.bf16.msra.mxu0 %v4901
    %5233 = vmatpush.bf16.msra.mxu0 %v4897
    %5234 = vmatpush.bf16.msra.mxu0 %v4893
    %5235 = vmatpush.bf16.msra.mxu0 %v4889
    %5236 = vmatmul.bf16.gmra.mxu0 %v4340
    %v5237 = vpop.f32.mrf.mxu0
    %v5238 = vadd.f32 %v5225, %v5237
    %v5239 = vpop.f32.mrf.mxu0
    %5240 = vdwg.mxu0
    %5241 = vmatpush.bf16.msra.mxu0 %v4949
    %5242 = vmatpush.bf16.msra.mxu0 %v4945
    %5243 = vmatpush.bf16.msra.mxu0 %v4941
    %5244 = vmatpush.bf16.msra.mxu0 %v4937
    %5245 = vmatpush.bf16.msra.mxu0 %v4933
    %5246 = vmatpush.bf16.msra.mxu0 %v4929
    %5247 = vmatpush.bf16.msra.mxu0 %v4925
    %5248 = vmatpush.bf16.msra.mxu0 %v4921
    %5249 = vmatmul.bf16.gmra.mxu0 %v4341
    %v5250 = vpop.f32.mrf.mxu0
    %v5251 = vadd.f32 %v5238, %v5250
    %v5252 = vpop.f32.mrf.mxu0
    %5253 = vdwg.mxu0
    %5254 = vmatpush.bf16.msra.mxu0 %v4981
    %5255 = vmatpush.bf16.msra.mxu0 %v4977
    %5256 = vmatpush.bf16.msra.mxu0 %v4973
    %5257 = vmatpush.bf16.msra.mxu0 %v4969
    %5258 = vmatpush.bf16.msra.mxu0 %v4965
    %5259 = vmatpush.bf16.msra.mxu0 %v4961
    %5260 = vmatpush.bf16.msra.mxu0 %v4957
    %5261 = vmatpush.bf16.msra.mxu0 %v4953
    %5262 = vmatmul.bf16.gmra.mxu0 %v4342
    %v5263 = vpop.f32.mrf.mxu0
    %v5264 = vadd.f32 %v5251, %v5263
    %v5265 = vpop.f32.mrf.mxu0
    %5266 = vdwg.mxu0
    %5267 = vmatpush.bf16.msra.mxu0 %v4886
    %5268 = vmatpush.bf16.msra.mxu0 %v4882
    %5269 = vmatpush.bf16.msra.mxu0 %v4878
    %5270 = vmatpush.bf16.msra.mxu0 %v4874
    %5271 = vmatpush.bf16.msra.mxu0 %v4870
    %5272 = vmatpush.bf16.msra.mxu0 %v4866
    %5273 = vmatpush.bf16.msra.mxu0 %v4862
    %5274 = vmatpush.bf16.msra.mxu0 %v4858
    %5275 = vmatmul.bf16.gmra.mxu0 %v4339
    %v5276 = vpop.f32.mrf.mxu0
    %v5277 = vadd.f32 0.0, %v5276
    %v5278 = vpop.f32.mrf.mxu0
    %5279 = vdwg.mxu0
    %5280 = vmatpush.bf16.msra.mxu0 %v4918
    %5281 = vmatpush.bf16.msra.mxu0 %v4914
    %5282 = vmatpush.bf16.msra.mxu0 %v4910
    %5283 = vmatpush.bf16.msra.mxu0 %v4906
    %5284 = vmatpush.bf16.msra.mxu0 %v4902
    %5285 = vmatpush.bf16.msra.mxu0 %v4898
    %5286 = vmatpush.bf16.msra.mxu0 %v4894
    %5287 = vmatpush.bf16.msra.mxu0 %v4890
    %5288 = vmatmul.bf16.gmra.mxu0 %v4340
    %v5289 = vpop.f32.mrf.mxu0
    %v5290 = vadd.f32 %v5277, %v5289
    %v5291 = vpop.f32.mrf.mxu0
    %5292 = vdwg.mxu0
    %5293 = vmatpush.bf16.msra.mxu0 %v4950
    %5294 = vmatpush.bf16.msra.mxu0 %v4946
    %5295 = vmatpush.bf16.msra.mxu0 %v4942
    %5296 = vmatpush.bf16.msra.mxu0 %v4938
    %5297 = vmatpush.bf16.msra.mxu0 %v4934
    %5298 = vmatpush.bf16.msra.mxu0 %v4930
    %5299 = vmatpush.bf16.msra.mxu0 %v4926
    %5300 = vmatpush.bf16.msra.mxu0 %v4922
    %5301 = vmatmul.bf16.gmra.mxu0 %v4341
    %v5302 = vpop.f32.mrf.mxu0
    %v5303 = vadd.f32 %v5290, %v5302
    %v5304 = vpop.f32.mrf.mxu0
    %5305 = vdwg.mxu0
    %5306 = vmatpush.bf16.msra.mxu0 %v4982
    %5307 = vmatpush.bf16.msra.mxu0 %v4978
    %5308 = vmatpush.bf16.msra.mxu0 %v4974
    %5309 = vmatpush.bf16.msra.mxu0 %v4970
    %5310 = vmatpush.bf16.msra.mxu0 %v4966
    %5311 = vmatpush.bf16.msra.mxu0 %v4962
    %5312 = vmatpush.bf16.msra.mxu0 %v4958
    %5313 = vmatpush.bf16.msra.mxu0 %v4954
    %5314 = vmatmul.bf16.gmra.mxu0 %v4342
    %v5315 = vpop.f32.mrf.mxu0
    %v5316 = vadd.f32 %v5303, %v5315
    %v5317 = vpop.f32.mrf.mxu0
    %5318 = vdwg.mxu0
    %v5319 = vrot.slane %v5160, 4
    %v5320 = vadd.f32 %v5160, %v5319
    %v5321 = vrot.slane %v5320, 2
    %v5322 = vadd.f32 %v5320, %v5321
    %v5323 = vrot.slane %v5322, 1
    %v5324 = vadd.f32 %v5322, %v5323
    %v5325 = vrot.slane %v5212, 4
    %v5326 = vadd.f32 %v5212, %v5325
    %v5327 = vrot.slane %v5326, 2
    %v5328 = vadd.f32 %v5326, %v5327
    %v5329 = vrot.slane %v5328, 1
    %v5330 = vadd.f32 %v5328, %v5329
    %v5331 = vrot.slane %v5264, 4
    %v5332 = vadd.f32 %v5264, %v5331
    %v5333 = vrot.slane %v5332, 2
    %v5334 = vadd.f32 %v5332, %v5333
    %v5335 = vrot.slane %v5334, 1
    %v5336 = vadd.f32 %v5334, %v5335
    %v5337 = vrot.slane %v5316, 4
    %v5338 = vadd.f32 %v5316, %v5337
    %v5339 = vrot.slane %v5338, 2
    %v5340 = vadd.f32 %v5338, %v5339
    %v5341 = vrot.slane %v5340, 1
    %v5342 = vadd.f32 %v5340, %v5341
    %v5343 = vmul.f32 %v5324, 0.125
    %v5344 = vmul.f32 %v5330, 0.125
    %v5345 = vmul.f32 %v5336, 0.125
    %v5346 = vmul.f32 %v5342, 0.125
    %v5347 = vmul.f32 %v5160, %v5160
    %v5348 = vmul.f32 %v5212, %v5212
    %v5349 = vmul.f32 %v5264, %v5264
    %v5350 = vmul.f32 %v5316, %v5316
    %v5351 = vrot.slane %v5347, 4
    %v5352 = vadd.f32 %v5347, %v5351
    %v5353 = vrot.slane %v5352, 2
    %v5354 = vadd.f32 %v5352, %v5353
    %v5355 = vrot.slane %v5354, 1
    %v5356 = vadd.f32 %v5354, %v5355
    %v5357 = vrot.slane %v5348, 4
    %v5358 = vadd.f32 %v5348, %v5357
    %v5359 = vrot.slane %v5358, 2
    %v5360 = vadd.f32 %v5358, %v5359
    %v5361 = vrot.slane %v5360, 1
    %v5362 = vadd.f32 %v5360, %v5361
    %v5363 = vrot.slane %v5349, 4
    %v5364 = vadd.f32 %v5349, %v5363
    %v5365 = vrot.slane %v5364, 2
    %v5366 = vadd.f32 %v5364, %v5365
    %v5367 = vrot.slane %v5366, 1
    %v5368 = vadd.f32 %v5366, %v5367
    %v5369 = vrot.slane %v5350, 4
    %v5370 = vadd.f32 %v5350, %v5369
    %v5371 = vrot.slane %v5370, 2
    %v5372 = vadd.f32 %v5370, %v5371
    %v5373 = vrot.slane %v5372, 1
    %v5374 = vadd.f32 %v5372, %v5373
    %v5375 = vmul.f32 %v5356, 0.125
    %v5376 = vmul.f32 %v5362, 0.125
    %v5377 = vmul.f32 %v5368, 0.125
    %v5378 = vmul.f32 %v5374, 0.125
    %v5379 = vmul.f32 %v5343, %v5343
    %v5380 = vmul.f32 %v5344, %v5344
    %v5381 = vmul.f32 %v5345, %v5345
    %v5382 = vmul.f32 %v5346, %v5346
    %v5383 = vsub.f32 %v5375, %v5379
    %v5384 = vsub.f32 %v5376, %v5380
    %v5385 = vsub.f32 %v5377, %v5381
    %v5386 = vsub.f32 %v5378, %v5382
    %v5387 = vld [vmem:[%s11] sm:$0xf]
    %v5388 = vadd.f32 %v5383, 1e-05
    %v5389 = vadd.f32 %v5384, 1e-05
    %v5390 = vadd.f32 %v5385, 1e-05
    %v5391 = vadd.f32 %v5386, 1e-05
    %v5392 = vrsqrt.pop %v5388
    %v5393 = vmul.f32 %v5392, %v5388
    %v5394 = vmul.f32 %v5393, %v5392
    %v5395 = vmul.f32 0.5, %v5394
    %v5396 = vsub.f32 1.5, %v5395
    %v5397 = vmul.f32 %v5392, %v5396
    %vm5398 = vweird.f32 %v5388
    %vm5399 = vweird.f32 %v5392
    %vm5400 = vmor %vm5398, %vm5399
    %v5401 = vsel %vm5400, %v5392, %v5397
    %v5402 = vrsqrt.pop %v5389
    %v5403 = vmul.f32 %v5402, %v5389
    %v5404 = vmul.f32 %v5403, %v5402
    %v5405 = vmul.f32 0.5, %v5404
    %v5406 = vsub.f32 1.5, %v5405
    %v5407 = vmul.f32 %v5402, %v5406
    %vm5408 = vweird.f32 %v5389
    %vm5409 = vweird.f32 %v5402
    %vm5410 = vmor %vm5408, %vm5409
    %v5411 = vsel %vm5410, %v5402, %v5407
    %v5412 = vrsqrt.pop %v5390
    %v5413 = vmul.f32 %v5412, %v5390
    %v5414 = vmul.f32 %v5413, %v5412
    %v5415 = vmul.f32 0.5, %v5414
    %v5416 = vsub.f32 1.5, %v5415
    %v5417 = vmul.f32 %v5412, %v5416
    %vm5418 = vweird.f32 %v5390
    %vm5419 = vweird.f32 %v5412
    %vm5420 = vmor %vm5418, %vm5419
    %v5421 = vsel %vm5420, %v5412, %v5417
    %v5422 = vrsqrt.pop %v5391
    %v5423 = vmul.f32 %v5422, %v5391
    %v5424 = vmul.f32 %v5423, %v5422
    %v5425 = vmul.f32 0.5, %v5424
    %v5426 = vsub.f32 1.5, %v5425
    %v5427 = vmul.f32 %v5422, %v5426
    %vm5428 = vweird.f32 %v5391
    %vm5429 = vweird.f32 %v5422
    %vm5430 = vmor %vm5428, %vm5429
    %v5431 = vsel %vm5430, %v5422, %v5427
    %v5436 = vrot.slane %v5411, 7
    %v5437 = vrot.slane %v5421, 6
    %v5438 = vrot.slane %v5431, 5
    %v5439 = vsel %vm1980, %v5401, %v5436
    %v5440 = vsel %vm1982, %v5437, %v5438
    %v5441 = vsel %vm1984, %v5439, %v5440
    %v5443 = vmul.f32 %v5387, %v5441
    %v5444 = vld [vmem:[%s12] sm:$0xf]
    %v5446 = vperm.slane %v5443, 0
    %v5447 = vperm.slane %v5443, 1
    %v5448 = vperm.slane %v5443, 2
    %v5449 = vperm.slane %v5443, 3
    %v5454 = vmul.f32 %v5343, %v5446
    %v5455 = vmul.f32 %v5344, %v5447
    %v5456 = vmul.f32 %v5345, %v5448
    %v5457 = vmul.f32 %v5346, %v5449
    %v5462 = vrot.slane %v5455, 7
    %v5463 = vrot.slane %v5456, 6
    %v5464 = vrot.slane %v5457, 5
    %v5465 = vsel %vm1980, %v5454, %v5462
    %v5466 = vsel %vm1982, %v5463, %v5464
    %v5467 = vsel %vm1984, %v5465, %v5466
    %v5469 = vsub.f32 %v5444, %v5467
    %v5470 = vmul.f32 %v5160, %v5446
    %v5471 = vmul.f32 %v5212, %v5447
    %v5472 = vmul.f32 %v5264, %v5448
    %v5473 = vmul.f32 %v5316, %v5449
    %v5475 = vperm.slane %v5469, 0
    %v5476 = vperm.slane %v5469, 1
    %v5477 = vperm.slane %v5469, 2
    %v5478 = vperm.slane %v5469, 3
    %v5483 = vadd.f32 %v5470, %v5475
    %v5484 = vadd.f32 %v5471, %v5476
    %v5485 = vadd.f32 %v5472, %v5477
    %v5486 = vadd.f32 %v5473, %v5478
    %v5487 = vmax.f32 %v5483, 0.0
    %v5488 = vmax.f32 %v5484, 0.0
    %v5489 = vmax.f32 %v5485, 0.0
    %v5490 = vmax.f32 %v5486, 0.0
    %v5491 = vpack.c.bf16 %v5487, %v5487
    %v5492 = vpack.c.bf16 %v5488, %v5488
    %v5493 = vpack.c.bf16 %v5489, %v5489
    %v5494 = vpack.c.bf16 %v5490, %v5490
    %v5495 = vld [vmem:[#allocation8] sm:$0xff]
    %v5496 = vld [vmem:[#allocation8 + $0x8] sm:$0xff]
    %v5497 = vld [vmem:[#allocation8 + $0x10] sm:$0xff]
    %v5498 = vld [vmem:[#allocation8 + $0x18] sm:$0xff]
    %v5499 = vld [vmem:[#allocation8 + $0x20] sm:$0xff]
    %v5500 = vld [vmem:[#allocation8 + $0x28] sm:$0xff]
    %v5501 = vld [vmem:[#allocation8 + $0x30] sm:$0xff]
    %v5502 = vld [vmem:[#allocation8 + $0x38] sm:$0xff]
    %v5503 = vld [vmem:[#allocation8 + $0x40] sm:$0xff]
    %v5504 = vld [vmem:[#allocation8 + $0x48] sm:$0xff]
    %v5505 = vld [vmem:[#allocation8 + $0x50] sm:$0xff]
    %v5506 = vld [vmem:[#allocation8 + $0x58] sm:$0xff]
    %v5507 = vld [vmem:[#allocation8 + $0x60] sm:$0xff]
    %v5508 = vld [vmem:[#allocation8 + $0x68] sm:$0xff]
    %v5509 = vld [vmem:[#allocation8 + $0x70] sm:$0xff]
    %v5510 = vld [vmem:[#allocation8 + $0x78] sm:$0xff]
    %v5511 = vld [vmem:[#allocation8 + $0x80] sm:$0xff]
    %v5512 = vld [vmem:[#allocation8 + $0x88] sm:$0xff]
    %v5513 = vld [vmem:[#allocation8 + $0x90] sm:$0xff]
    %v5514 = vld [vmem:[#allocation8 + $0x98] sm:$0xff]
    %v5515 = vld [vmem:[#allocation8 + $0xa0] sm:$0xff]
    %v5516 = vld [vmem:[#allocation8 + $0xa8] sm:$0xff]
    %v5517 = vld [vmem:[#allocation8 + $0xb0] sm:$0xff]
    %v5518 = vld [vmem:[#allocation8 + $0xb8] sm:$0xff]
    %v5519 = vld [vmem:[#allocation8 + $0xc0] sm:$0xff]
    %v5520 = vld [vmem:[#allocation8 + $0xc8] sm:$0xff]
    %v5521 = vld [vmem:[#allocation8 + $0xd0] sm:$0xff]
    %v5522 = vld [vmem:[#allocation8 + $0xd8] sm:$0xff]
    %v5523 = vld [vmem:[#allocation8 + $0xe0] sm:$0xff]
    %v5524 = vld [vmem:[#allocation8 + $0xe8] sm:$0xff]
    %v5525 = vld [vmem:[#allocation8 + $0xf0] sm:$0xff]
    %v5526 = vld [vmem:[#allocation8 + $0xf8] sm:$0xff]
    %v5527 = vld [vmem:[#allocation8 + $0x100] sm:$0xff]
    %v5528 = vld [vmem:[#allocation8 + $0x108] sm:$0xff]
    %v5529 = vld [vmem:[#allocation8 + $0x110] sm:$0xff]
    %v5530 = vld [vmem:[#allocation8 + $0x118] sm:$0xff]
    %v5531 = vld [vmem:[#allocation8 + $0x120] sm:$0xff]
    %v5532 = vld [vmem:[#allocation8 + $0x128] sm:$0xff]
    %v5533 = vld [vmem:[#allocation8 + $0x130] sm:$0xff]
    %v5534 = vld [vmem:[#allocation8 + $0x138] sm:$0xff]
    %v5535 = vld [vmem:[#allocation8 + $0x140] sm:$0xff]
    %v5536 = vld [vmem:[#allocation8 + $0x148] sm:$0xff]
    %v5537 = vld [vmem:[#allocation8 + $0x150] sm:$0xff]
    %v5538 = vld [vmem:[#allocation8 + $0x158] sm:$0xff]
    %v5539 = vld [vmem:[#allocation8 + $0x160] sm:$0xff]
    %v5540 = vld [vmem:[#allocation8 + $0x168] sm:$0xff]
    %v5541 = vld [vmem:[#allocation8 + $0x170] sm:$0xff]
    %v5542 = vld [vmem:[#allocation8 + $0x178] sm:$0xff]
    %v5543 = vld [vmem:[#allocation8 + $0x180] sm:$0xff]
    %v5544 = vld [vmem:[#allocation8 + $0x188] sm:$0xff]
    %v5545 = vld [vmem:[#allocation8 + $0x190] sm:$0xff]
    %v5546 = vld [vmem:[#allocation8 + $0x198] sm:$0xff]
    %v5547 = vld [vmem:[#allocation8 + $0x1a0] sm:$0xff]
    %v5548 = vld [vmem:[#allocation8 + $0x1a8] sm:$0xff]
    %v5549 = vld [vmem:[#allocation8 + $0x1b0] sm:$0xff]
    %v5550 = vld [vmem:[#allocation8 + $0x1b8] sm:$0xff]
    %v5551 = vld [vmem:[#allocation8 + $0x1c0] sm:$0xff]
    %v5552 = vld [vmem:[#allocation8 + $0x1c8] sm:$0xff]
    %v5553 = vld [vmem:[#allocation8 + $0x1d0] sm:$0xff]
    %v5554 = vld [vmem:[#allocation8 + $0x1d8] sm:$0xff]
    %v5555 = vld [vmem:[#allocation8 + $0x1e0] sm:$0xff]
    %v5556 = vld [vmem:[#allocation8 + $0x1e8] sm:$0xff]
    %v5557 = vld [vmem:[#allocation8 + $0x1f0] sm:$0xff]
    %v5558 = vld [vmem:[#allocation8 + $0x1f8] sm:$0xff]
    %v5559 = vld [vmem:[#allocation8 + $0x200] sm:$0xff]
    %v5560 = vld [vmem:[#allocation8 + $0x208] sm:$0xff]
    %v5561 = vld [vmem:[#allocation8 + $0x210] sm:$0xff]
    %v5562 = vld [vmem:[#allocation8 + $0x218] sm:$0xff]
    %v5563 = vld [vmem:[#allocation8 + $0x220] sm:$0xff]
    %v5564 = vld [vmem:[#allocation8 + $0x228] sm:$0xff]
    %v5565 = vld [vmem:[#allocation8 + $0x230] sm:$0xff]
    %v5566 = vld [vmem:[#allocation8 + $0x238] sm:$0xff]
    %v5567 = vld [vmem:[#allocation8 + $0x240] sm:$0xff]
    %v5568 = vld [vmem:[#allocation8 + $0x248] sm:$0xff]
    %v5569 = vld [vmem:[#allocation8 + $0x250] sm:$0xff]
    %v5570 = vld [vmem:[#allocation8 + $0x258] sm:$0xff]
    %v5571 = vld [vmem:[#allocation8 + $0x260] sm:$0xff]
    %v5572 = vld [vmem:[#allocation8 + $0x268] sm:$0xff]
    %v5573 = vld [vmem:[#allocation8 + $0x270] sm:$0xff]
    %v5574 = vld [vmem:[#allocation8 + $0x278] sm:$0xff]
    %v5575 = vld [vmem:[#allocation8 + $0x280] sm:$0xff]
    %v5576 = vld [vmem:[#allocation8 + $0x288] sm:$0xff]
    %v5577 = vld [vmem:[#allocation8 + $0x290] sm:$0xff]
    %v5578 = vld [vmem:[#allocation8 + $0x298] sm:$0xff]
    %v5579 = vld [vmem:[#allocation8 + $0x2a0] sm:$0xff]
    %v5580 = vld [vmem:[#allocation8 + $0x2a8] sm:$0xff]
    %v5581 = vld [vmem:[#allocation8 + $0x2b0] sm:$0xff]
    %v5582 = vld [vmem:[#allocation8 + $0x2b8] sm:$0xff]
    %v5583 = vld [vmem:[#allocation8 + $0x2c0] sm:$0xff]
    %v5584 = vld [vmem:[#allocation8 + $0x2c8] sm:$0xff]
    %v5585 = vld [vmem:[#allocation8 + $0x2d0] sm:$0xff]
    %v5586 = vld [vmem:[#allocation8 + $0x2d8] sm:$0xff]
    %v5587 = vld [vmem:[#allocation8 + $0x2e0] sm:$0xff]
    %v5588 = vld [vmem:[#allocation8 + $0x2e8] sm:$0xff]
    %v5589 = vld [vmem:[#allocation8 + $0x2f0] sm:$0xff]
    %v5590 = vld [vmem:[#allocation8 + $0x2f8] sm:$0xff]
    %v5591 = vld [vmem:[#allocation8 + $0x300] sm:$0xff]
    %v5592 = vld [vmem:[#allocation8 + $0x308] sm:$0xff]
    %v5593 = vld [vmem:[#allocation8 + $0x310] sm:$0xff]
    %v5594 = vld [vmem:[#allocation8 + $0x318] sm:$0xff]
    %v5595 = vld [vmem:[#allocation8 + $0x320] sm:$0xff]
    %v5596 = vld [vmem:[#allocation8 + $0x328] sm:$0xff]
    %v5597 = vld [vmem:[#allocation8 + $0x330] sm:$0xff]
    %v5598 = vld [vmem:[#allocation8 + $0x338] sm:$0xff]
    %v5599 = vld [vmem:[#allocation8 + $0x340] sm:$0xff]
    %v5600 = vld [vmem:[#allocation8 + $0x348] sm:$0xff]
    %v5601 = vld [vmem:[#allocation8 + $0x350] sm:$0xff]
    %v5602 = vld [vmem:[#allocation8 + $0x358] sm:$0xff]
    %v5603 = vld [vmem:[#allocation8 + $0x360] sm:$0xff]
    %v5604 = vld [vmem:[#allocation8 + $0x368] sm:$0xff]
    %v5605 = vld [vmem:[#allocation8 + $0x370] sm:$0xff]
    %v5606 = vld [vmem:[#allocation8 + $0x378] sm:$0xff]
    %v5607 = vld [vmem:[#allocation8 + $0x380] sm:$0xff]
    %v5608 = vld [vmem:[#allocation8 + $0x388] sm:$0xff]
    %v5609 = vld [vmem:[#allocation8 + $0x390] sm:$0xff]
    %v5610 = vld [vmem:[#allocation8 + $0x398] sm:$0xff]
    %v5611 = vld [vmem:[#allocation8 + $0x3a0] sm:$0xff]
    %v5612 = vld [vmem:[#allocation8 + $0x3a8] sm:$0xff]
    %v5613 = vld [vmem:[#allocation8 + $0x3b0] sm:$0xff]
    %v5614 = vld [vmem:[#allocation8 + $0x3b8] sm:$0xff]
    %v5615 = vld [vmem:[#allocation8 + $0x3c0] sm:$0xff]
    %v5616 = vld [vmem:[#allocation8 + $0x3c8] sm:$0xff]
    %v5617 = vld [vmem:[#allocation8 + $0x3d0] sm:$0xff]
    %v5618 = vld [vmem:[#allocation8 + $0x3d8] sm:$0xff]
    %v5619 = vld [vmem:[#allocation8 + $0x3e0] sm:$0xff]
    %v5620 = vld [vmem:[#allocation8 + $0x3e8] sm:$0xff]
    %v5621 = vld [vmem:[#allocation8 + $0x3f0] sm:$0xff]
    %v5622 = vld [vmem:[#allocation8 + $0x3f8] sm:$0xff]
    %v5751 = vunpack.c.l.b16 %v5495
    %v5752 = vunpack.c.h.b16 %v5495
    %v5753 = vunpack.c.l.b16 %v5496
    %v5754 = vunpack.c.h.b16 %v5496
    %v5755 = vunpack.c.l.b16 %v5497
    %v5756 = vunpack.c.h.b16 %v5497
    %v5757 = vunpack.c.l.b16 %v5498
    %v5758 = vunpack.c.h.b16 %v5498
    %v5759 = vunpack.c.l.b16 %v5499
    %v5760 = vunpack.c.h.b16 %v5499
    %v5761 = vunpack.c.l.b16 %v5500
    %v5762 = vunpack.c.h.b16 %v5500
    %v5763 = vunpack.c.l.b16 %v5501
    %v5764 = vunpack.c.h.b16 %v5501
    %v5765 = vunpack.c.l.b16 %v5502
    %v5766 = vunpack.c.h.b16 %v5502
    %v5767 = vunpack.c.l.b16 %v5503
    %v5768 = vunpack.c.h.b16 %v5503
    %v5769 = vunpack.c.l.b16 %v5504
    %v5770 = vunpack.c.h.b16 %v5504
    %v5771 = vunpack.c.l.b16 %v5505
    %v5772 = vunpack.c.h.b16 %v5505
    %v5773 = vunpack.c.l.b16 %v5506
    %v5774 = vunpack.c.h.b16 %v5506
    %v5775 = vunpack.c.l.b16 %v5507
    %v5776 = vunpack.c.h.b16 %v5507
    %v5777 = vunpack.c.l.b16 %v5508
    %v5778 = vunpack.c.h.b16 %v5508
    %v5779 = vunpack.c.l.b16 %v5509
    %v5780 = vunpack.c.h.b16 %v5509
    %v5781 = vunpack.c.l.b16 %v5510
    %v5782 = vunpack.c.h.b16 %v5510
    %v5783 = vunpack.c.l.b16 %v5511
    %v5784 = vunpack.c.h.b16 %v5511
    %v5785 = vunpack.c.l.b16 %v5512
    %v5786 = vunpack.c.h.b16 %v5512
    %v5787 = vunpack.c.l.b16 %v5513
    %v5788 = vunpack.c.h.b16 %v5513
    %v5789 = vunpack.c.l.b16 %v5514
    %v5790 = vunpack.c.h.b16 %v5514
    %v5791 = vunpack.c.l.b16 %v5515
    %v5792 = vunpack.c.h.b16 %v5515
    %v5793 = vunpack.c.l.b16 %v5516
    %v5794 = vunpack.c.h.b16 %v5516
    %v5795 = vunpack.c.l.b16 %v5517
    %v5796 = vunpack.c.h.b16 %v5517
    %v5797 = vunpack.c.l.b16 %v5518
    %v5798 = vunpack.c.h.b16 %v5518
    %v5799 = vunpack.c.l.b16 %v5519
    %v5800 = vunpack.c.h.b16 %v5519
    %v5801 = vunpack.c.l.b16 %v5520
    %v5802 = vunpack.c.h.b16 %v5520
    %v5803 = vunpack.c.l.b16 %v5521
    %v5804 = vunpack.c.h.b16 %v5521
    %v5805 = vunpack.c.l.b16 %v5522
    %v5806 = vunpack.c.h.b16 %v5522
    %v5807 = vunpack.c.l.b16 %v5523
    %v5808 = vunpack.c.h.b16 %v5523
    %v5809 = vunpack.c.l.b16 %v5524
    %v5810 = vunpack.c.h.b16 %v5524
    %v5811 = vunpack.c.l.b16 %v5525
    %v5812 = vunpack.c.h.b16 %v5525
    %v5813 = vunpack.c.l.b16 %v5526
    %v5814 = vunpack.c.h.b16 %v5526
    %v5815 = vunpack.c.l.b16 %v5527
    %v5816 = vunpack.c.h.b16 %v5527
    %v5817 = vunpack.c.l.b16 %v5528
    %v5818 = vunpack.c.h.b16 %v5528
    %v5819 = vunpack.c.l.b16 %v5529
    %v5820 = vunpack.c.h.b16 %v5529
    %v5821 = vunpack.c.l.b16 %v5530
    %v5822 = vunpack.c.h.b16 %v5530
    %v5823 = vunpack.c.l.b16 %v5531
    %v5824 = vunpack.c.h.b16 %v5531
    %v5825 = vunpack.c.l.b16 %v5532
    %v5826 = vunpack.c.h.b16 %v5532
    %v5827 = vunpack.c.l.b16 %v5533
    %v5828 = vunpack.c.h.b16 %v5533
    %v5829 = vunpack.c.l.b16 %v5534
    %v5830 = vunpack.c.h.b16 %v5534
    %v5831 = vunpack.c.l.b16 %v5535
    %v5832 = vunpack.c.h.b16 %v5535
    %v5833 = vunpack.c.l.b16 %v5536
    %v5834 = vunpack.c.h.b16 %v5536
    %v5835 = vunpack.c.l.b16 %v5537
    %v5836 = vunpack.c.h.b16 %v5537
    %v5837 = vunpack.c.l.b16 %v5538
    %v5838 = vunpack.c.h.b16 %v5538
    %v5839 = vunpack.c.l.b16 %v5539
    %v5840 = vunpack.c.h.b16 %v5539
    %v5841 = vunpack.c.l.b16 %v5540
    %v5842 = vunpack.c.h.b16 %v5540
    %v5843 = vunpack.c.l.b16 %v5541
    %v5844 = vunpack.c.h.b16 %v5541
    %v5845 = vunpack.c.l.b16 %v5542
    %v5846 = vunpack.c.h.b16 %v5542
    %v5847 = vunpack.c.l.b16 %v5543
    %v5848 = vunpack.c.h.b16 %v5543
    %v5849 = vunpack.c.l.b16 %v5544
    %v5850 = vunpack.c.h.b16 %v5544
    %v5851 = vunpack.c.l.b16 %v5545
    %v5852 = vunpack.c.h.b16 %v5545
    %v5853 = vunpack.c.l.b16 %v5546
    %v5854 = vunpack.c.h.b16 %v5546
    %v5855 = vunpack.c.l.b16 %v5547
    %v5856 = vunpack.c.h.b16 %v5547
    %v5857 = vunpack.c.l.b16 %v5548
    %v5858 = vunpack.c.h.b16 %v5548
    %v5859 = vunpack.c.l.b16 %v5549
    %v5860 = vunpack.c.h.b16 %v5549
    %v5861 = vunpack.c.l.b16 %v5550
    %v5862 = vunpack.c.h.b16 %v5550
    %v5863 = vunpack.c.l.b16 %v5551
    %v5864 = vunpack.c.h.b16 %v5551
    %v5865 = vunpack.c.l.b16 %v5552
    %v5866 = vunpack.c.h.b16 %v5552
    %v5867 = vunpack.c.l.b16 %v5553
    %v5868 = vunpack.c.h.b16 %v5553
    %v5869 = vunpack.c.l.b16 %v5554
    %v5870 = vunpack.c.h.b16 %v5554
    %v5871 = vunpack.c.l.b16 %v5555
    %v5872 = vunpack.c.h.b16 %v5555
    %v5873 = vunpack.c.l.b16 %v5556
    %v5874 = vunpack.c.h.b16 %v5556
    %v5875 = vunpack.c.l.b16 %v5557
    %v5876 = vunpack.c.h.b16 %v5557
    %v5877 = vunpack.c.l.b16 %v5558
    %v5878 = vunpack.c.h.b16 %v5558
    %v5879 = vunpack.c.l.b16 %v5559
    %v5880 = vunpack.c.h.b16 %v5559
    %v5881 = vunpack.c.l.b16 %v5560
    %v5882 = vunpack.c.h.b16 %v5560
    %v5883 = vunpack.c.l.b16 %v5561
    %v5884 = vunpack.c.h.b16 %v5561
    %v5885 = vunpack.c.l.b16 %v5562
    %v5886 = vunpack.c.h.b16 %v5562
    %v5887 = vunpack.c.l.b16 %v5563
    %v5888 = vunpack.c.h.b16 %v5563
    %v5889 = vunpack.c.l.b16 %v5564
    %v5890 = vunpack.c.h.b16 %v5564
    %v5891 = vunpack.c.l.b16 %v5565
    %v5892 = vunpack.c.h.b16 %v5565
    %v5893 = vunpack.c.l.b16 %v5566
    %v5894 = vunpack.c.h.b16 %v5566
    %v5895 = vunpack.c.l.b16 %v5567
    %v5896 = vunpack.c.h.b16 %v5567
    %v5897 = vunpack.c.l.b16 %v5568
    %v5898 = vunpack.c.h.b16 %v5568
    %v5899 = vunpack.c.l.b16 %v5569
    %v5900 = vunpack.c.h.b16 %v5569
    %v5901 = vunpack.c.l.b16 %v5570
    %v5902 = vunpack.c.h.b16 %v5570
    %v5903 = vunpack.c.l.b16 %v5571
    %v5904 = vunpack.c.h.b16 %v5571
    %v5905 = vunpack.c.l.b16 %v5572
    %v5906 = vunpack.c.h.b16 %v5572
    %v5907 = vunpack.c.l.b16 %v5573
    %v5908 = vunpack.c.h.b16 %v5573
    %v5909 = vunpack.c.l.b16 %v5574
    %v5910 = vunpack.c.h.b16 %v5574
    %v5911 = vunpack.c.l.b16 %v5575
    %v5912 = vunpack.c.h.b16 %v5575
    %v5913 = vunpack.c.l.b16 %v5576
    %v5914 = vunpack.c.h.b16 %v5576
    %v5915 = vunpack.c.l.b16 %v5577
    %v5916 = vunpack.c.h.b16 %v5577
    %v5917 = vunpack.c.l.b16 %v5578
    %v5918 = vunpack.c.h.b16 %v5578
    %v5919 = vunpack.c.l.b16 %v5579
    %v5920 = vunpack.c.h.b16 %v5579
    %v5921 = vunpack.c.l.b16 %v5580
    %v5922 = vunpack.c.h.b16 %v5580
    %v5923 = vunpack.c.l.b16 %v5581
    %v5924 = vunpack.c.h.b16 %v5581
    %v5925 = vunpack.c.l.b16 %v5582
    %v5926 = vunpack.c.h.b16 %v5582
    %v5927 = vunpack.c.l.b16 %v5583
    %v5928 = vunpack.c.h.b16 %v5583
    %v5929 = vunpack.c.l.b16 %v5584
    %v5930 = vunpack.c.h.b16 %v5584
    %v5931 = vunpack.c.l.b16 %v5585
    %v5932 = vunpack.c.h.b16 %v5585
    %v5933 = vunpack.c.l.b16 %v5586
    %v5934 = vunpack.c.h.b16 %v5586
    %v5935 = vunpack.c.l.b16 %v5587
    %v5936 = vunpack.c.h.b16 %v5587
    %v5937 = vunpack.c.l.b16 %v5588
    %v5938 = vunpack.c.h.b16 %v5588
    %v5939 = vunpack.c.l.b16 %v5589
    %v5940 = vunpack.c.h.b16 %v5589
    %v5941 = vunpack.c.l.b16 %v5590
    %v5942 = vunpack.c.h.b16 %v5590
    %v5943 = vunpack.c.l.b16 %v5591
    %v5944 = vunpack.c.h.b16 %v5591
    %v5945 = vunpack.c.l.b16 %v5592
    %v5946 = vunpack.c.h.b16 %v5592
    %v5947 = vunpack.c.l.b16 %v5593
    %v5948 = vunpack.c.h.b16 %v5593
    %v5949 = vunpack.c.l.b16 %v5594
    %v5950 = vunpack.c.h.b16 %v5594
    %v5951 = vunpack.c.l.b16 %v5595
    %v5952 = vunpack.c.h.b16 %v5595
    %v5953 = vunpack.c.l.b16 %v5596
    %v5954 = vunpack.c.h.b16 %v5596
    %v5955 = vunpack.c.l.b16 %v5597
    %v5956 = vunpack.c.h.b16 %v5597
    %v5957 = vunpack.c.l.b16 %v5598
    %v5958 = vunpack.c.h.b16 %v5598
    %v5959 = vunpack.c.l.b16 %v5599
    %v5960 = vunpack.c.h.b16 %v5599
    %v5961 = vunpack.c.l.b16 %v5600
    %v5962 = vunpack.c.h.b16 %v5600
    %v5963 = vunpack.c.l.b16 %v5601
    %v5964 = vunpack.c.h.b16 %v5601
    %v5965 = vunpack.c.l.b16 %v5602
    %v5966 = vunpack.c.h.b16 %v5602
    %v5967 = vunpack.c.l.b16 %v5603
    %v5968 = vunpack.c.h.b16 %v5603
    %v5969 = vunpack.c.l.b16 %v5604
    %v5970 = vunpack.c.h.b16 %v5604
    %v5971 = vunpack.c.l.b16 %v5605
    %v5972 = vunpack.c.h.b16 %v5605
    %v5973 = vunpack.c.l.b16 %v5606
    %v5974 = vunpack.c.h.b16 %v5606
    %v5975 = vunpack.c.l.b16 %v5607
    %v5976 = vunpack.c.h.b16 %v5607
    %v5977 = vunpack.c.l.b16 %v5608
    %v5978 = vunpack.c.h.b16 %v5608
    %v5979 = vunpack.c.l.b16 %v5609
    %v5980 = vunpack.c.h.b16 %v5609
    %v5981 = vunpack.c.l.b16 %v5610
    %v5982 = vunpack.c.h.b16 %v5610
    %v5983 = vunpack.c.l.b16 %v5611
    %v5984 = vunpack.c.h.b16 %v5611
    %v5985 = vunpack.c.l.b16 %v5612
    %v5986 = vunpack.c.h.b16 %v5612
    %v5987 = vunpack.c.l.b16 %v5613
    %v5988 = vunpack.c.h.b16 %v5613
    %v5989 = vunpack.c.l.b16 %v5614
    %v5990 = vunpack.c.h.b16 %v5614
    %v5991 = vunpack.c.l.b16 %v5615
    %v5992 = vunpack.c.h.b16 %v5615
    %v5993 = vunpack.c.l.b16 %v5616
    %v5994 = vunpack.c.h.b16 %v5616
    %v5995 = vunpack.c.l.b16 %v5617
    %v5996 = vunpack.c.h.b16 %v5617
    %v5997 = vunpack.c.l.b16 %v5618
    %v5998 = vunpack.c.h.b16 %v5618
    %v5999 = vunpack.c.l.b16 %v5619
    %v6000 = vunpack.c.h.b16 %v5619
    %v6001 = vunpack.c.l.b16 %v5620
    %v6002 = vunpack.c.h.b16 %v5620
    %v6003 = vunpack.c.l.b16 %v5621
    %v6004 = vunpack.c.h.b16 %v5621
    %v6005 = vunpack.c.l.b16 %v5622
    %v6006 = vunpack.c.h.b16 %v5622
    %v6007 = vpack.c.b16 %v5755, %v5751
    %v6008 = vpack.c.b16 %v5756, %v5752
    %v6009 = vpack.c.b16 %v5757, %v5753
    %v6010 = vpack.c.b16 %v5758, %v5754
    %v6011 = vpack.c.b16 %v5763, %v5759
    %v6012 = vpack.c.b16 %v5764, %v5760
    %v6013 = vpack.c.b16 %v5765, %v5761
    %v6014 = vpack.c.b16 %v5766, %v5762
    %v6015 = vpack.c.b16 %v5771, %v5767
    %v6016 = vpack.c.b16 %v5772, %v5768
    %v6017 = vpack.c.b16 %v5773, %v5769
    %v6018 = vpack.c.b16 %v5774, %v5770
    %v6019 = vpack.c.b16 %v5779, %v5775
    %v6020 = vpack.c.b16 %v5780, %v5776
    %v6021 = vpack.c.b16 %v5781, %v5777
    %v6022 = vpack.c.b16 %v5782, %v5778
    %v6023 = vpack.c.b16 %v5787, %v5783
    %v6024 = vpack.c.b16 %v5788, %v5784
    %v6025 = vpack.c.b16 %v5789, %v5785
    %v6026 = vpack.c.b16 %v5790, %v5786
    %v6027 = vpack.c.b16 %v5795, %v5791
    %v6028 = vpack.c.b16 %v5796, %v5792
    %v6029 = vpack.c.b16 %v5797, %v5793
    %v6030 = vpack.c.b16 %v5798, %v5794
    %v6031 = vpack.c.b16 %v5803, %v5799
    %v6032 = vpack.c.b16 %v5804, %v5800
    %v6033 = vpack.c.b16 %v5805, %v5801
    %v6034 = vpack.c.b16 %v5806, %v5802
    %v6035 = vpack.c.b16 %v5811, %v5807
    %v6036 = vpack.c.b16 %v5812, %v5808
    %v6037 = vpack.c.b16 %v5813, %v5809
    %v6038 = vpack.c.b16 %v5814, %v5810
    %v6039 = vpack.c.b16 %v5819, %v5815
    %v6040 = vpack.c.b16 %v5820, %v5816
    %v6041 = vpack.c.b16 %v5821, %v5817
    %v6042 = vpack.c.b16 %v5822, %v5818
    %v6043 = vpack.c.b16 %v5827, %v5823
    %v6044 = vpack.c.b16 %v5828, %v5824
    %v6045 = vpack.c.b16 %v5829, %v5825
    %v6046 = vpack.c.b16 %v5830, %v5826
    %v6047 = vpack.c.b16 %v5835, %v5831
    %v6048 = vpack.c.b16 %v5836, %v5832
    %v6049 = vpack.c.b16 %v5837, %v5833
    %v6050 = vpack.c.b16 %v5838, %v5834
    %v6051 = vpack.c.b16 %v5843, %v5839
    %v6052 = vpack.c.b16 %v5844, %v5840
    %v6053 = vpack.c.b16 %v5845, %v5841
    %v6054 = vpack.c.b16 %v5846, %v5842
    %v6055 = vpack.c.b16 %v5851, %v5847
    %v6056 = vpack.c.b16 %v5852, %v5848
    %v6057 = vpack.c.b16 %v5853, %v5849
    %v6058 = vpack.c.b16 %v5854, %v5850
    %v6059 = vpack.c.b16 %v5859, %v5855
    %v6060 = vpack.c.b16 %v5860, %v5856
    %v6061 = vpack.c.b16 %v5861, %v5857
    %v6062 = vpack.c.b16 %v5862, %v5858
    %v6063 = vpack.c.b16 %v5867, %v5863
    %v6064 = vpack.c.b16 %v5868, %v5864
    %v6065 = vpack.c.b16 %v5869, %v5865
    %v6066 = vpack.c.b16 %v5870, %v5866
    %v6067 = vpack.c.b16 %v5875, %v5871
    %v6068 = vpack.c.b16 %v5876, %v5872
    %v6069 = vpack.c.b16 %v5877, %v5873
    %v6070 = vpack.c.b16 %v5878, %v5874
    %v6071 = vpack.c.b16 %v5883, %v5879
    %v6072 = vpack.c.b16 %v5884, %v5880
    %v6073 = vpack.c.b16 %v5885, %v5881
    %v6074 = vpack.c.b16 %v5886, %v5882
    %v6075 = vpack.c.b16 %v5891, %v5887
    %v6076 = vpack.c.b16 %v5892, %v5888
    %v6077 = vpack.c.b16 %v5893, %v5889
    %v6078 = vpack.c.b16 %v5894, %v5890
    %v6079 = vpack.c.b16 %v5899, %v5895
    %v6080 = vpack.c.b16 %v5900, %v5896
    %v6081 = vpack.c.b16 %v5901, %v5897
    %v6082 = vpack.c.b16 %v5902, %v5898
    %v6083 = vpack.c.b16 %v5907, %v5903
    %v6084 = vpack.c.b16 %v5908, %v5904
    %v6085 = vpack.c.b16 %v5909, %v5905
    %v6086 = vpack.c.b16 %v5910, %v5906
    %v6087 = vpack.c.b16 %v5915, %v5911
    %v6088 = vpack.c.b16 %v5916, %v5912
    %v6089 = vpack.c.b16 %v5917, %v5913
    %v6090 = vpack.c.b16 %v5918, %v5914
    %v6091 = vpack.c.b16 %v5923, %v5919
    %v6092 = vpack.c.b16 %v5924, %v5920
    %v6093 = vpack.c.b16 %v5925, %v5921
    %v6094 = vpack.c.b16 %v5926, %v5922
    %v6095 = vpack.c.b16 %v5931, %v5927
    %v6096 = vpack.c.b16 %v5932, %v5928
    %v6097 = vpack.c.b16 %v5933, %v5929
    %v6098 = vpack.c.b16 %v5934, %v5930
    %v6099 = vpack.c.b16 %v5939, %v5935
    %v6100 = vpack.c.b16 %v5940, %v5936
    %v6101 = vpack.c.b16 %v5941, %v5937
    %v6102 = vpack.c.b16 %v5942, %v5938
    %v6103 = vpack.c.b16 %v5947, %v5943
    %v6104 = vpack.c.b16 %v5948, %v5944
    %v6105 = vpack.c.b16 %v5949, %v5945
    %v6106 = vpack.c.b16 %v5950, %v5946
    %v6107 = vpack.c.b16 %v5955, %v5951
    %v6108 = vpack.c.b16 %v5956, %v5952
    %v6109 = vpack.c.b16 %v5957, %v5953
    %v6110 = vpack.c.b16 %v5958, %v5954
    %v6111 = vpack.c.b16 %v5963, %v5959
    %v6112 = vpack.c.b16 %v5964, %v5960
    %v6113 = vpack.c.b16 %v5965, %v5961
    %v6114 = vpack.c.b16 %v5966, %v5962
    %v6115 = vpack.c.b16 %v5971, %v5967
    %v6116 = vpack.c.b16 %v5972, %v5968
    %v6117 = vpack.c.b16 %v5973, %v5969
    %v6118 = vpack.c.b16 %v5974, %v5970
    %v6119 = vpack.c.b16 %v5979, %v5975
    %v6120 = vpack.c.b16 %v5980, %v5976
    %v6121 = vpack.c.b16 %v5981, %v5977
    %v6122 = vpack.c.b16 %v5982, %v5978
    %v6123 = vpack.c.b16 %v5987, %v5983
    %v6124 = vpack.c.b16 %v5988, %v5984
    %v6125 = vpack.c.b16 %v5989, %v5985
    %v6126 = vpack.c.b16 %v5990, %v5986
    %v6127 = vpack.c.b16 %v5995, %v5991
    %v6128 = vpack.c.b16 %v5996, %v5992
    %v6129 = vpack.c.b16 %v5997, %v5993
    %v6130 = vpack.c.b16 %v5998, %v5994
    %v6131 = vpack.c.b16 %v6003, %v5999
    %v6132 = vpack.c.b16 %v6004, %v6000
    %v6133 = vpack.c.b16 %v6005, %v6001
    %v6134 = vpack.c.b16 %v6006, %v6002
    %6263 = vmatpush.bf16.msra.mxu0 %v6035
    %6264 = vmatpush.bf16.msra.mxu0 %v6031
    %6265 = vmatpush.bf16.msra.mxu0 %v6027
    %6266 = vmatpush.bf16.msra.mxu0 %v6023
    %6267 = vmatpush.bf16.msra.mxu0 %v6019
    %6268 = vmatpush.bf16.msra.mxu0 %v6015
    %6269 = vmatpush.bf16.msra.mxu0 %v6011
    %6270 = vmatpush.bf16.msra.mxu0 %v6007
    %6271 = vmatmul.bf16.gmra.mxu0 %v5491
    %v6272 = vpop.f32.mrf.mxu0
    %v6273 = vadd.f32 0.0, %v6272
    %v6274 = vpop.f32.mrf.mxu0
    %6275 = vdwg.mxu0
    %6276 = vmatpush.bf16.msra.mxu0 %v6067
    %6277 = vmatpush.bf16.msra.mxu0 %v6063
    %6278 = vmatpush.bf16.msra.mxu0 %v6059
    %6279 = vmatpush.bf16.msra.mxu0 %v6055
    %6280 = vmatpush.bf16.msra.mxu0 %v6051
    %6281 = vmatpush.bf16.msra.mxu0 %v6047
    %6282 = vmatpush.bf16.msra.mxu0 %v6043
    %6283 = vmatpush.bf16.msra.mxu0 %v6039
    %6284 = vmatmul.bf16.gmra.mxu0 %v5492
    %v6285 = vpop.f32.mrf.mxu0
    %v6286 = vadd.f32 %v6273, %v6285
    %v6287 = vpop.f32.mrf.mxu0
    %6288 = vdwg.mxu0
    %6289 = vmatpush.bf16.msra.mxu0 %v6099
    %6290 = vmatpush.bf16.msra.mxu0 %v6095
    %6291 = vmatpush.bf16.msra.mxu0 %v6091
    %6292 = vmatpush.bf16.msra.mxu0 %v6087
    %6293 = vmatpush.bf16.msra.mxu0 %v6083
    %6294 = vmatpush.bf16.msra.mxu0 %v6079
    %6295 = vmatpush.bf16.msra.mxu0 %v6075
    %6296 = vmatpush.bf16.msra.mxu0 %v6071
    %6297 = vmatmul.bf16.gmra.mxu0 %v5493
    %v6298 = vpop.f32.mrf.mxu0
    %v6299 = vadd.f32 %v6286, %v6298
    %v6300 = vpop.f32.mrf.mxu0
    %6301 = vdwg.mxu0
    %6302 = vmatpush.bf16.msra.mxu0 %v6131
    %6303 = vmatpush.bf16.msra.mxu0 %v6127
    %6304 = vmatpush.bf16.msra.mxu0 %v6123
    %6305 = vmatpush.bf16.msra.mxu0 %v6119
    %6306 = vmatpush.bf16.msra.mxu0 %v6115
    %6307 = vmatpush.bf16.msra.mxu0 %v6111
    %6308 = vmatpush.bf16.msra.mxu0 %v6107
    %6309 = vmatpush.bf16.msra.mxu0 %v6103
    %6310 = vmatmul.bf16.gmra.mxu0 %v5494
    %v6311 = vpop.f32.mrf.mxu0
    %v6312 = vadd.f32 %v6299, %v6311
    %v6313 = vpop.f32.mrf.mxu0
    %6314 = vdwg.mxu0
    %6315 = vmatpush.bf16.msra.mxu0 %v6036
    %6316 = vmatpush.bf16.msra.mxu0 %v6032
    %6317 = vmatpush.bf16.msra.mxu0 %v6028
    %6318 = vmatpush.bf16.msra.mxu0 %v6024
    %6319 = vmatpush.bf16.msra.mxu0 %v6020
    %6320 = vmatpush.bf16.msra.mxu0 %v6016
    %6321 = vmatpush.bf16.msra.mxu0 %v6012
    %6322 = vmatpush.bf16.msra.mxu0 %v6008
    %6323 = vmatmul.bf16.gmra.mxu0 %v5491
    %v6324 = vpop.f32.mrf.mxu0
    %v6325 = vadd.f32 0.0, %v6324
    %v6326 = vpop.f32.mrf.mxu0
    %6327 = vdwg.mxu0
    %6328 = vmatpush.bf16.msra.mxu0 %v6068
    %6329 = vmatpush.bf16.msra.mxu0 %v6064
    %6330 = vmatpush.bf16.msra.mxu0 %v6060
    %6331 = vmatpush.bf16.msra.mxu0 %v6056
    %6332 = vmatpush.bf16.msra.mxu0 %v6052
    %6333 = vmatpush.bf16.msra.mxu0 %v6048
    %6334 = vmatpush.bf16.msra.mxu0 %v6044
    %6335 = vmatpush.bf16.msra.mxu0 %v6040
    %6336 = vmatmul.bf16.gmra.mxu0 %v5492
    %v6337 = vpop.f32.mrf.mxu0
    %v6338 = vadd.f32 %v6325, %v6337
    %v6339 = vpop.f32.mrf.mxu0
    %6340 = vdwg.mxu0
    %6341 = vmatpush.bf16.msra.mxu0 %v6100
    %6342 = vmatpush.bf16.msra.mxu0 %v6096
    %6343 = vmatpush.bf16.msra.mxu0 %v6092
    %6344 = vmatpush.bf16.msra.mxu0 %v6088
    %6345 = vmatpush.bf16.msra.mxu0 %v6084
    %6346 = vmatpush.bf16.msra.mxu0 %v6080
    %6347 = vmatpush.bf16.msra.mxu0 %v6076
    %6348 = vmatpush.bf16.msra.mxu0 %v6072
    %6349 = vmatmul.bf16.gmra.mxu0 %v5493
    %v6350 = vpop.f32.mrf.mxu0
    %v6351 = vadd.f32 %v6338, %v6350
    %v6352 = vpop.f32.mrf.mxu0
    %6353 = vdwg.mxu0
    %6354 = vmatpush.bf16.msra.mxu0 %v6132
    %6355 = vmatpush.bf16.msra.mxu0 %v6128
    %6356 = vmatpush.bf16.msra.mxu0 %v6124
    %6357 = vmatpush.bf16.msra.mxu0 %v6120
    %6358 = vmatpush.bf16.msra.mxu0 %v6116
    %6359 = vmatpush.bf16.msra.mxu0 %v6112
    %6360 = vmatpush.bf16.msra.mxu0 %v6108
    %6361 = vmatpush.bf16.msra.mxu0 %v6104
    %6362 = vmatmul.bf16.gmra.mxu0 %v5494
    %v6363 = vpop.f32.mrf.mxu0
    %v6364 = vadd.f32 %v6351, %v6363
    %v6365 = vpop.f32.mrf.mxu0
    %6366 = vdwg.mxu0
    %6367 = vmatpush.bf16.msra.mxu0 %v6037
    %6368 = vmatpush.bf16.msra.mxu0 %v6033
    %6369 = vmatpush.bf16.msra.mxu0 %v6029
    %6370 = vmatpush.bf16.msra.mxu0 %v6025
    %6371 = vmatpush.bf16.msra.mxu0 %v6021
    %6372 = vmatpush.bf16.msra.mxu0 %v6017
    %6373 = vmatpush.bf16.msra.mxu0 %v6013
    %6374 = vmatpush.bf16.msra.mxu0 %v6009
    %6375 = vmatmul.bf16.gmra.mxu0 %v5491
    %v6376 = vpop.f32.mrf.mxu0
    %v6377 = vadd.f32 0.0, %v6376
    %v6378 = vpop.f32.mrf.mxu0
    %6379 = vdwg.mxu0
    %6380 = vmatpush.bf16.msra.mxu0 %v6069
    %6381 = vmatpush.bf16.msra.mxu0 %v6065
    %6382 = vmatpush.bf16.msra.mxu0 %v6061
    %6383 = vmatpush.bf16.msra.mxu0 %v6057
    %6384 = vmatpush.bf16.msra.mxu0 %v6053
    %6385 = vmatpush.bf16.msra.mxu0 %v6049
    %6386 = vmatpush.bf16.msra.mxu0 %v6045
    %6387 = vmatpush.bf16.msra.mxu0 %v6041
    %6388 = vmatmul.bf16.gmra.mxu0 %v5492
    %v6389 = vpop.f32.mrf.mxu0
    %v6390 = vadd.f32 %v6377, %v6389
    %v6391 = vpop.f32.mrf.mxu0
    %6392 = vdwg.mxu0
    %6393 = vmatpush.bf16.msra.mxu0 %v6101
    %6394 = vmatpush.bf16.msra.mxu0 %v6097
    %6395 = vmatpush.bf16.msra.mxu0 %v6093
    %6396 = vmatpush.bf16.msra.mxu0 %v6089
    %6397 = vmatpush.bf16.msra.mxu0 %v6085
    %6398 = vmatpush.bf16.msra.mxu0 %v6081
    %6399 = vmatpush.bf16.msra.mxu0 %v6077
    %6400 = vmatpush.bf16.msra.mxu0 %v6073
    %6401 = vmatmul.bf16.gmra.mxu0 %v5493
    %v6402 = vpop.f32.mrf.mxu0
    %v6403 = vadd.f32 %v6390, %v6402
    %v6404 = vpop.f32.mrf.mxu0
    %6405 = vdwg.mxu0
    %6406 = vmatpush.bf16.msra.mxu0 %v6133
    %6407 = vmatpush.bf16.msra.mxu0 %v6129
    %6408 = vmatpush.bf16.msra.mxu0 %v6125
    %6409 = vmatpush.bf16.msra.mxu0 %v6121
    %6410 = vmatpush.bf16.msra.mxu0 %v6117
    %6411 = vmatpush.bf16.msra.mxu0 %v6113
    %6412 = vmatpush.bf16.msra.mxu0 %v6109
    %6413 = vmatpush.bf16.msra.mxu0 %v6105
    %6414 = vmatmul.bf16.gmra.mxu0 %v5494
    %v6415 = vpop.f32.mrf.mxu0
    %v6416 = vadd.f32 %v6403, %v6415
    %v6417 = vpop.f32.mrf.mxu0
    %6418 = vdwg.mxu0
    %6419 = vmatpush.bf16.msra.mxu0 %v6038
    %6420 = vmatpush.bf16.msra.mxu0 %v6034
    %6421 = vmatpush.bf16.msra.mxu0 %v6030
    %6422 = vmatpush.bf16.msra.mxu0 %v6026
    %6423 = vmatpush.bf16.msra.mxu0 %v6022
    %6424 = vmatpush.bf16.msra.mxu0 %v6018
    %6425 = vmatpush.bf16.msra.mxu0 %v6014
    %6426 = vmatpush.bf16.msra.mxu0 %v6010
    %6427 = vmatmul.bf16.gmra.mxu0 %v5491
    %v6428 = vpop.f32.mrf.mxu0
    %v6429 = vadd.f32 0.0, %v6428
    %v6430 = vpop.f32.mrf.mxu0
    %6431 = vdwg.mxu0
    %6432 = vmatpush.bf16.msra.mxu0 %v6070
    %6433 = vmatpush.bf16.msra.mxu0 %v6066
    %6434 = vmatpush.bf16.msra.mxu0 %v6062
    %6435 = vmatpush.bf16.msra.mxu0 %v6058
    %6436 = vmatpush.bf16.msra.mxu0 %v6054
    %6437 = vmatpush.bf16.msra.mxu0 %v6050
    %6438 = vmatpush.bf16.msra.mxu0 %v6046
    %6439 = vmatpush.bf16.msra.mxu0 %v6042
    %6440 = vmatmul.bf16.gmra.mxu0 %v5492
    %v6441 = vpop.f32.mrf.mxu0
    %v6442 = vadd.f32 %v6429, %v6441
    %v6443 = vpop.f32.mrf.mxu0
    %6444 = vdwg.mxu0
    %6445 = vmatpush.bf16.msra.mxu0 %v6102
    %6446 = vmatpush.bf16.msra.mxu0 %v6098
    %6447 = vmatpush.bf16.msra.mxu0 %v6094
    %6448 = vmatpush.bf16.msra.mxu0 %v6090
    %6449 = vmatpush.bf16.msra.mxu0 %v6086
    %6450 = vmatpush.bf16.msra.mxu0 %v6082
    %6451 = vmatpush.bf16.msra.mxu0 %v6078
    %6452 = vmatpush.bf16.msra.mxu0 %v6074
    %6453 = vmatmul.bf16.gmra.mxu0 %v5493
    %v6454 = vpop.f32.mrf.mxu0
    %v6455 = vadd.f32 %v6442, %v6454
    %v6456 = vpop.f32.mrf.mxu0
    %6457 = vdwg.mxu0
    %6458 = vmatpush.bf16.msra.mxu0 %v6134
    %6459 = vmatpush.bf16.msra.mxu0 %v6130
    %6460 = vmatpush.bf16.msra.mxu0 %v6126
    %6461 = vmatpush.bf16.msra.mxu0 %v6122
    %6462 = vmatpush.bf16.msra.mxu0 %v6118
    %6463 = vmatpush.bf16.msra.mxu0 %v6114
    %6464 = vmatpush.bf16.msra.mxu0 %v6110
    %6465 = vmatpush.bf16.msra.mxu0 %v6106
    %6466 = vmatmul.bf16.gmra.mxu0 %v5494
    %v6467 = vpop.f32.mrf.mxu0
    %v6468 = vadd.f32 %v6455, %v6467
    %v6469 = vpop.f32.mrf.mxu0
    %6470 = vdwg.mxu0
    %v6471 = vrot.slane %v6312, 4
    %v6472 = vadd.f32 %v6312, %v6471
    %v6473 = vrot.slane %v6472, 2
    %v6474 = vadd.f32 %v6472, %v6473
    %v6475 = vrot.slane %v6474, 1
    %v6476 = vadd.f32 %v6474, %v6475
    %v6477 = vrot.slane %v6364, 4
    %v6478 = vadd.f32 %v6364, %v6477
    %v6479 = vrot.slane %v6478, 2
    %v6480 = vadd.f32 %v6478, %v6479
    %v6481 = vrot.slane %v6480, 1
    %v6482 = vadd.f32 %v6480, %v6481
    %v6483 = vrot.slane %v6416, 4
    %v6484 = vadd.f32 %v6416, %v6483
    %v6485 = vrot.slane %v6484, 2
    %v6486 = vadd.f32 %v6484, %v6485
    %v6487 = vrot.slane %v6486, 1
    %v6488 = vadd.f32 %v6486, %v6487
    %v6489 = vrot.slane %v6468, 4
    %v6490 = vadd.f32 %v6468, %v6489
    %v6491 = vrot.slane %v6490, 2
    %v6492 = vadd.f32 %v6490, %v6491
    %v6493 = vrot.slane %v6492, 1
    %v6494 = vadd.f32 %v6492, %v6493
    %v6495 = vmul.f32 %v6476, 0.125
    %v6496 = vmul.f32 %v6482, 0.125
    %v6497 = vmul.f32 %v6488, 0.125
    %v6498 = vmul.f32 %v6494, 0.125
    %v6499 = vmul.f32 %v6312, %v6312
    %v6500 = vmul.f32 %v6364, %v6364
    %v6501 = vmul.f32 %v6416, %v6416
    %v6502 = vmul.f32 %v6468, %v6468
    %v6503 = vrot.slane %v6499, 4
    %v6504 = vadd.f32 %v6499, %v6503
    %v6505 = vrot.slane %v6504, 2
    %v6506 = vadd.f32 %v6504, %v6505
    %v6507 = vrot.slane %v6506, 1
    %v6508 = vadd.f32 %v6506, %v6507
    %v6509 = vrot.slane %v6500, 4
    %v6510 = vadd.f32 %v6500, %v6509
    %v6511 = vrot.slane %v6510, 2
    %v6512 = vadd.f32 %v6510, %v6511
    %v6513 = vrot.slane %v6512, 1
    %v6514 = vadd.f32 %v6512, %v6513
    %v6515 = vrot.slane %v6501, 4
    %v6516 = vadd.f32 %v6501, %v6515
    %v6517 = vrot.slane %v6516, 2
    %v6518 = vadd.f32 %v6516, %v6517
    %v6519 = vrot.slane %v6518, 1
    %v6520 = vadd.f32 %v6518, %v6519
    %v6521 = vrot.slane %v6502, 4
    %v6522 = vadd.f32 %v6502, %v6521
    %v6523 = vrot.slane %v6522, 2
    %v6524 = vadd.f32 %v6522, %v6523
    %v6525 = vrot.slane %v6524, 1
    %v6526 = vadd.f32 %v6524, %v6525
    %v6527 = vmul.f32 %v6508, 0.125
    %v6528 = vmul.f32 %v6514, 0.125
    %v6529 = vmul.f32 %v6520, 0.125
    %v6530 = vmul.f32 %v6526, 0.125
    %v6531 = vmul.f32 %v6495, %v6495
    %v6532 = vmul.f32 %v6496, %v6496
    %v6533 = vmul.f32 %v6497, %v6497
    %v6534 = vmul.f32 %v6498, %v6498
    %v6535 = vsub.f32 %v6527, %v6531
    %v6536 = vsub.f32 %v6528, %v6532
    %v6537 = vsub.f32 %v6529, %v6533
    %v6538 = vsub.f32 %v6530, %v6534
    %v6539 = vld [vmem:[%s14] sm:$0xf]
    %v6540 = vadd.f32 %v6535, 1e-05
    %v6541 = vadd.f32 %v6536, 1e-05
    %v6542 = vadd.f32 %v6537, 1e-05
    %v6543 = vadd.f32 %v6538, 1e-05
    %v6544 = vrsqrt.pop %v6540
    %v6545 = vmul.f32 %v6544, %v6540
    %v6546 = vmul.f32 %v6545, %v6544
    %v6547 = vmul.f32 0.5, %v6546
    %v6548 = vsub.f32 1.5, %v6547
    %v6549 = vmul.f32 %v6544, %v6548
    %vm6550 = vweird.f32 %v6540
    %vm6551 = vweird.f32 %v6544
    %vm6552 = vmor %vm6550, %vm6551
    %v6553 = vsel %vm6552, %v6544, %v6549
    %v6554 = vrsqrt.pop %v6541
    %v6555 = vmul.f32 %v6554, %v6541
    %v6556 = vmul.f32 %v6555, %v6554
    %v6557 = vmul.f32 0.5, %v6556
    %v6558 = vsub.f32 1.5, %v6557
    %v6559 = vmul.f32 %v6554, %v6558
    %vm6560 = vweird.f32 %v6541
    %vm6561 = vweird.f32 %v6554
    %vm6562 = vmor %vm6560, %vm6561
    %v6563 = vsel %vm6562, %v6554, %v6559
    %v6564 = vrsqrt.pop %v6542
    %v6565 = vmul.f32 %v6564, %v6542
    %v6566 = vmul.f32 %v6565, %v6564
    %v6567 = vmul.f32 0.5, %v6566
    %v6568 = vsub.f32 1.5, %v6567
    %v6569 = vmul.f32 %v6564, %v6568
    %vm6570 = vweird.f32 %v6542
    %vm6571 = vweird.f32 %v6564
    %vm6572 = vmor %vm6570, %vm6571
    %v6573 = vsel %vm6572, %v6564, %v6569
    %v6574 = vrsqrt.pop %v6543
    %v6575 = vmul.f32 %v6574, %v6543
    %v6576 = vmul.f32 %v6575, %v6574
    %v6577 = vmul.f32 0.5, %v6576
    %v6578 = vsub.f32 1.5, %v6577
    %v6579 = vmul.f32 %v6574, %v6578
    %vm6580 = vweird.f32 %v6543
    %vm6581 = vweird.f32 %v6574
    %vm6582 = vmor %vm6580, %vm6581
    %v6583 = vsel %vm6582, %v6574, %v6579
    %v6588 = vrot.slane %v6563, 7
    %v6589 = vrot.slane %v6573, 6
    %v6590 = vrot.slane %v6583, 5
    %v6591 = vsel %vm1980, %v6553, %v6588
    %v6592 = vsel %vm1982, %v6589, %v6590
    %v6593 = vsel %vm1984, %v6591, %v6592
    %v6595 = vmul.f32 %v6539, %v6593
    %v6596 = vld [vmem:[%s15] sm:$0xf]
    %v6598 = vperm.slane %v6595, 0
    %v6599 = vperm.slane %v6595, 1
    %v6600 = vperm.slane %v6595, 2
    %v6601 = vperm.slane %v6595, 3
    %v6606 = vmul.f32 %v6495, %v6598
    %v6607 = vmul.f32 %v6496, %v6599
    %v6608 = vmul.f32 %v6497, %v6600
    %v6609 = vmul.f32 %v6498, %v6601
    %v6614 = vrot.slane %v6607, 7
    %v6615 = vrot.slane %v6608, 6
    %v6616 = vrot.slane %v6609, 5
    %v6617 = vsel %vm1980, %v6606, %v6614
    %v6618 = vsel %vm1982, %v6615, %v6616
    %v6619 = vsel %vm1984, %v6617, %v6618
    %v6621 = vsub.f32 %v6596, %v6619
    %v6622 = vmul.f32 %v6312, %v6598
    %v6623 = vmul.f32 %v6364, %v6599
    %v6624 = vmul.f32 %v6416, %v6600
    %v6625 = vmul.f32 %v6468, %v6601
    %v6627 = vperm.slane %v6621, 0
    %v6628 = vperm.slane %v6621, 1
    %v6629 = vperm.slane %v6621, 2
    %v6630 = vperm.slane %v6621, 3
    %v6635 = vadd.f32 %v6622, %v6627
    %v6636 = vadd.f32 %v6623, %v6628
    %v6637 = vadd.f32 %v6624, %v6629
    %v6638 = vadd.f32 %v6625, %v6630
    %v6639 = vmax.f32 %v6635, 0.0
    %v6640 = vmax.f32 %v6636, 0.0
    %v6641 = vmax.f32 %v6637, 0.0
    %v6642 = vmax.f32 %v6638, 0.0
    %v6643 = vpack.c.bf16 %v6639, %v6639
    %v6644 = vpack.c.bf16 %v6640, %v6640
    %v6645 = vpack.c.bf16 %v6641, %v6641
    %v6646 = vpack.c.bf16 %v6642, %v6642
    %v6647 = vld [vmem:[%s16] sm:$0xf]
    %v6648 = vld [vmem:[%s16 + $0x4] sm:$0xf]
    %v6649 = vld [vmem:[%s16 + $0x8] sm:$0xf]
    %v6650 = vld [vmem:[%s16 + $0xc] sm:$0xf]
    %v6651 = vld [vmem:[%s16 + $0x10] sm:$0xf]
    %v6652 = vld [vmem:[%s16 + $0x14] sm:$0xf]
    %v6653 = vld [vmem:[%s16 + $0x18] sm:$0xf]
    %v6654 = vld [vmem:[%s16 + $0x1c] sm:$0xf]
    %v6655 = vld [vmem:[%s16 + $0x20] sm:$0xf]
    %v6656 = vld [vmem:[%s16 + $0x24] sm:$0xf]
    %v6657 = vld [vmem:[%s16 + $0x28] sm:$0xf]
    %v6658 = vld [vmem:[%s16 + $0x2c] sm:$0xf]
    %v6659 = vld [vmem:[%s16 + $0x30] sm:$0xf]
    %v6660 = vld [vmem:[%s16 + $0x34] sm:$0xf]
    %v6661 = vld [vmem:[%s16 + $0x38] sm:$0xf]
    %v6662 = vld [vmem:[%s16 + $0x3c] sm:$0xf]
    %v6663 = vld [vmem:[%s16 + $0x40] sm:$0xf]
    %v6664 = vld [vmem:[%s16 + $0x44] sm:$0xf]
    %v6665 = vld [vmem:[%s16 + $0x48] sm:$0xf]
    %v6666 = vld [vmem:[%s16 + $0x4c] sm:$0xf]
    %v6667 = vld [vmem:[%s16 + $0x50] sm:$0xf]
    %v6668 = vld [vmem:[%s16 + $0x54] sm:$0xf]
    %v6669 = vld [vmem:[%s16 + $0x58] sm:$0xf]
    %v6670 = vld [vmem:[%s16 + $0x5c] sm:$0xf]
    %v6671 = vld [vmem:[%s16 + $0x60] sm:$0xf]
    %v6672 = vld [vmem:[%s16 + $0x64] sm:$0xf]
    %v6673 = vld [vmem:[%s16 + $0x68] sm:$0xf]
    %v6674 = vld [vmem:[%s16 + $0x6c] sm:$0xf]
    %v6675 = vld [vmem:[%s16 + $0x70] sm:$0xf]
    %v6676 = vld [vmem:[%s16 + $0x74] sm:$0xf]
    %v6677 = vld [vmem:[%s16 + $0x78] sm:$0xf]
    %v6678 = vld [vmem:[%s16 + $0x7c] sm:$0xf]
    %v6679 = vld [vmem:[%s16 + $0x80] sm:$0xf]
    %v6680 = vld [vmem:[%s16 + $0x84] sm:$0xf]
    %v6681 = vld [vmem:[%s16 + $0x88] sm:$0xf]
    %v6682 = vld [vmem:[%s16 + $0x8c] sm:$0xf]
    %v6683 = vld [vmem:[%s16 + $0x90] sm:$0xf]
    %v6684 = vld [vmem:[%s16 + $0x94] sm:$0xf]
    %v6685 = vld [vmem:[%s16 + $0x98] sm:$0xf]
    %v6686 = vld [vmem:[%s16 + $0x9c] sm:$0xf]
    %v6687 = vld [vmem:[%s16 + $0xa0] sm:$0xf]
    %v6688 = vld [vmem:[%s16 + $0xa4] sm:$0xf]
    %v6689 = vld [vmem:[%s16 + $0xa8] sm:$0xf]
    %v6690 = vld [vmem:[%s16 + $0xac] sm:$0xf]
    %v6691 = vld [vmem:[%s16 + $0xb0] sm:$0xf]
    %v6692 = vld [vmem:[%s16 + $0xb4] sm:$0xf]
    %v6693 = vld [vmem:[%s16 + $0xb8] sm:$0xf]
    %v6694 = vld [vmem:[%s16 + $0xbc] sm:$0xf]
    %v6695 = vld [vmem:[%s16 + $0xc0] sm:$0xf]
    %v6696 = vld [vmem:[%s16 + $0xc4] sm:$0xf]
    %v6697 = vld [vmem:[%s16 + $0xc8] sm:$0xf]
    %v6698 = vld [vmem:[%s16 + $0xcc] sm:$0xf]
    %v6699 = vld [vmem:[%s16 + $0xd0] sm:$0xf]
    %v6700 = vld [vmem:[%s16 + $0xd4] sm:$0xf]
    %v6701 = vld [vmem:[%s16 + $0xd8] sm:$0xf]
    %v6702 = vld [vmem:[%s16 + $0xdc] sm:$0xf]
    %v6703 = vld [vmem:[%s16 + $0xe0] sm:$0xf]
    %v6704 = vld [vmem:[%s16 + $0xe4] sm:$0xf]
    %v6705 = vld [vmem:[%s16 + $0xe8] sm:$0xf]
    %v6706 = vld [vmem:[%s16 + $0xec] sm:$0xf]
    %v6707 = vld [vmem:[%s16 + $0xf0] sm:$0xf]
    %v6708 = vld [vmem:[%s16 + $0xf4] sm:$0xf]
    %v6709 = vld [vmem:[%s16 + $0xf8] sm:$0xf]
    %v6710 = vld [vmem:[%s16 + $0xfc] sm:$0xf]
    %v6711 = vld [vmem:[%s17] sm:$0x1]
    %v6713 = vperm.slane %v6711, 0
    %v6779 = vunpack.c.l.b16 %v6647
    %v6780 = vunpack.c.l.b16 %v6648
    %v6781 = vunpack.c.l.b16 %v6649
    %v6782 = vunpack.c.l.b16 %v6650
    %v6783 = vunpack.c.l.b16 %v6651
    %v6784 = vunpack.c.l.b16 %v6652
    %v6785 = vunpack.c.l.b16 %v6653
    %v6786 = vunpack.c.l.b16 %v6654
    %v6787 = vunpack.c.l.b16 %v6655
    %v6788 = vunpack.c.l.b16 %v6656
    %v6789 = vunpack.c.l.b16 %v6657
    %v6790 = vunpack.c.l.b16 %v6658
    %v6791 = vunpack.c.l.b16 %v6659
    %v6792 = vunpack.c.l.b16 %v6660
    %v6793 = vunpack.c.l.b16 %v6661
    %v6794 = vunpack.c.l.b16 %v6662
    %v6795 = vunpack.c.l.b16 %v6663
    %v6796 = vunpack.c.l.b16 %v6664
    %v6797 = vunpack.c.l.b16 %v6665
    %v6798 = vunpack.c.l.b16 %v6666
    %v6799 = vunpack.c.l.b16 %v6667
    %v6800 = vunpack.c.l.b16 %v6668
    %v6801 = vunpack.c.l.b16 %v6669
    %v6802 = vunpack.c.l.b16 %v6670
    %v6803 = vunpack.c.l.b16 %v6671
    %v6804 = vunpack.c.l.b16 %v6672
    %v6805 = vunpack.c.l.b16 %v6673
    %v6806 = vunpack.c.l.b16 %v6674
    %v6807 = vunpack.c.l.b16 %v6675
    %v6808 = vunpack.c.l.b16 %v6676
    %v6809 = vunpack.c.l.b16 %v6677
    %v6810 = vunpack.c.l.b16 %v6678
    %v6811 = vunpack.c.l.b16 %v6679
    %v6812 = vunpack.c.l.b16 %v6680
    %v6813 = vunpack.c.l.b16 %v6681
    %v6814 = vunpack.c.l.b16 %v6682
    %v6815 = vunpack.c.l.b16 %v6683
    %v6816 = vunpack.c.l.b16 %v6684
    %v6817 = vunpack.c.l.b16 %v6685
    %v6818 = vunpack.c.l.b16 %v6686
    %v6819 = vunpack.c.l.b16 %v6687
    %v6820 = vunpack.c.l.b16 %v6688
    %v6821 = vunpack.c.l.b16 %v6689
    %v6822 = vunpack.c.l.b16 %v6690
    %v6823 = vunpack.c.l.b16 %v6691
    %v6824 = vunpack.c.l.b16 %v6692
    %v6825 = vunpack.c.l.b16 %v6693
    %v6826 = vunpack.c.l.b16 %v6694
    %v6827 = vunpack.c.l.b16 %v6695
    %v6828 = vunpack.c.l.b16 %v6696
    %v6829 = vunpack.c.l.b16 %v6697
    %v6830 = vunpack.c.l.b16 %v6698
    %v6831 = vunpack.c.l.b16 %v6699
    %v6832 = vunpack.c.l.b16 %v6700
    %v6833 = vunpack.c.l.b16 %v6701
    %v6834 = vunpack.c.l.b16 %v6702
    %v6835 = vunpack.c.l.b16 %v6703
    %v6836 = vunpack.c.l.b16 %v6704
    %v6837 = vunpack.c.l.b16 %v6705
    %v6838 = vunpack.c.l.b16 %v6706
    %v6839 = vunpack.c.l.b16 %v6707
    %v6840 = vunpack.c.l.b16 %v6708
    %v6841 = vunpack.c.l.b16 %v6709
    %v6842 = vunpack.c.l.b16 %v6710
    %v6843 = vpack.c.b16 %v6780, %v6779
    %v6844 = vpack.c.b16 %v6782, %v6781
    %v6845 = vpack.c.b16 %v6784, %v6783
    %v6846 = vpack.c.b16 %v6786, %v6785
    %v6847 = vpack.c.b16 %v6788, %v6787
    %v6848 = vpack.c.b16 %v6790, %v6789
    %v6849 = vpack.c.b16 %v6792, %v6791
    %v6850 = vpack.c.b16 %v6794, %v6793
    %v6851 = vpack.c.b16 %v6796, %v6795
    %v6852 = vpack.c.b16 %v6798, %v6797
    %v6853 = vpack.c.b16 %v6800, %v6799
    %v6854 = vpack.c.b16 %v6802, %v6801
    %v6855 = vpack.c.b16 %v6804, %v6803
    %v6856 = vpack.c.b16 %v6806, %v6805
    %v6857 = vpack.c.b16 %v6808, %v6807
    %v6858 = vpack.c.b16 %v6810, %v6809
    %v6859 = vpack.c.b16 %v6812, %v6811
    %v6860 = vpack.c.b16 %v6814, %v6813
    %v6861 = vpack.c.b16 %v6816, %v6815
    %v6862 = vpack.c.b16 %v6818, %v6817
    %v6863 = vpack.c.b16 %v6820, %v6819
    %v6864 = vpack.c.b16 %v6822, %v6821
    %v6865 = vpack.c.b16 %v6824, %v6823
    %v6866 = vpack.c.b16 %v6826, %v6825
    %v6867 = vpack.c.b16 %v6828, %v6827
    %v6868 = vpack.c.b16 %v6830, %v6829
    %v6869 = vpack.c.b16 %v6832, %v6831
    %v6870 = vpack.c.b16 %v6834, %v6833
    %v6871 = vpack.c.b16 %v6836, %v6835
    %v6872 = vpack.c.b16 %v6838, %v6837
    %v6873 = vpack.c.b16 %v6840, %v6839
    %v6874 = vpack.c.b16 %v6842, %v6841
    %6907 = vmatpush.bf16.msra.mxu0 %v6850
    %6908 = vmatpush.bf16.msra.mxu0 %v6849
    %6909 = vmatpush.bf16.msra.mxu0 %v6848
    %6910 = vmatpush.bf16.msra.mxu0 %v6847
    %6911 = vmatpush.bf16.msra.mxu0 %v6846
    %6912 = vmatpush.bf16.msra.mxu0 %v6845
    %6913 = vmatpush.bf16.msra.mxu0 %v6844
    %6914 = vmatpush.bf16.msra.mxu0 %v6843
    %6915 = vmatmul.bf16.gmra.mxu0 %v6643
    %v6916 = vpop.f32.mrf.mxu0
    %v6917 = vadd.f32 %v6713, %v6916
    %v6918 = vpop.f32.mrf.mxu0
    %6919 = vdwg.mxu0
    %6920 = vmatpush.bf16.msra.mxu0 %v6858
    %6921 = vmatpush.bf16.msra.mxu0 %v6857
    %6922 = vmatpush.bf16.msra.mxu0 %v6856
    %6923 = vmatpush.bf16.msra.mxu0 %v6855
    %6924 = vmatpush.bf16.msra.mxu0 %v6854
    %6925 = vmatpush.bf16.msra.mxu0 %v6853
    %6926 = vmatpush.bf16.msra.mxu0 %v6852
    %6927 = vmatpush.bf16.msra.mxu0 %v6851
    %6928 = vmatmul.bf16.gmra.mxu0 %v6644
    %v6929 = vpop.f32.mrf.mxu0
    %v6930 = vadd.f32 %v6917, %v6929
    %v6931 = vpop.f32.mrf.mxu0
    %6932 = vdwg.mxu0
    %6933 = vmatpush.bf16.msra.mxu0 %v6866
    %6934 = vmatpush.bf16.msra.mxu0 %v6865
    %6935 = vmatpush.bf16.msra.mxu0 %v6864
    %6936 = vmatpush.bf16.msra.mxu0 %v6863
    %6937 = vmatpush.bf16.msra.mxu0 %v6862
    %6938 = vmatpush.bf16.msra.mxu0 %v6861
    %6939 = vmatpush.bf16.msra.mxu0 %v6860
    %6940 = vmatpush.bf16.msra.mxu0 %v6859
    %6941 = vmatmul.bf16.gmra.mxu0 %v6645
    %v6942 = vpop.f32.mrf.mxu0
    %v6943 = vadd.f32 %v6930, %v6942
    %v6944 = vpop.f32.mrf.mxu0
    %6945 = vdwg.mxu0
    %6946 = vmatpush.bf16.msra.mxu0 %v6874
    %6947 = vmatpush.bf16.msra.mxu0 %v6873
    %6948 = vmatpush.bf16.msra.mxu0 %v6872
    %6949 = vmatpush.bf16.msra.mxu0 %v6871
    %6950 = vmatpush.bf16.msra.mxu0 %v6870
    %6951 = vmatpush.bf16.msra.mxu0 %v6869
    %6952 = vmatpush.bf16.msra.mxu0 %v6868
    %6953 = vmatpush.bf16.msra.mxu0 %v6867
    %6954 = vmatmul.bf16.gmra.mxu0 %v6646
    %v6955 = vpop.f32.mrf.mxu0
    %v6956 = vadd.f32 %v6943, %v6955
    %v6957 = vpop.f32.mrf.mxu0
    %6958 = vdwg.mxu0
    %6959 = vmax.xlane.f32.xlu0 %v6956
    %v6960 = vpop.xlane.xlu0 %6959
    %v6961 = vsub.f32 %v6956, %v6960
    %v6962 = vmul.f32 %v6961, 1.442695
    %v6963 = vpow.pop %v6962
    %6964 = vadd.xlane.f32.xlu0 %v6963
    %v6965 = vpop.xlane.xlu0 %6964
    %v6966 = vrcp.pop %v6965
    %v6967 = vmul.f32 %v6965, %v6966
    %v6968 = vsub.f32 1.0, %v6967
    %v6969 = vmul.f32 %v6966, %v6968
    %v6970 = vadd.f32 %v6966, %v6969
    %vm6971 = vweird.f32 %v6965
    %vm6972 = vweird.f32 %v6966
    %vm6973 = vmor %vm6971, %vm6972
    %v6974 = vsel %vm6973, %v6966, %v6970
    %v6975 = vand.u32 2147483647, %v6965
    %vm6976 = vcmp.eq.f32.partialorder %v6975, 8.507059e+37
    %v6977 = vand.u32 %v6965, 2147483648
    %v6978 = vor.u32 1.1754944e-38, %v6977
    %v6979 = vsel %vm6976, %v6978, %v6974
    %v6980 = vmul.f32 %v6963, %v6979
    %6981 = vst [vmem:[#allocation10] sm:$0xff] %v6980
    // Predicated region
    $region90: #{net_f1_forward.1} parent=1 // pred_check
      _
    $region91: #{net_f1_forward.1} parent=1 // pred_check_branch
      %6983 = sbr.rel (0) target = $region93
    $region92: #{net_f1_forward.1} parent=1 // pred_region
      %6985 = vsyncadd [#allocation4], 0
      %s6987 = sshll.u32 [#allocation10], 4
      %s6988 = int_to_ptr.vmem [resolvable:$true] %s6987
      %s6989 = sshll.u32 %s18, 4
      %s6990 = int_to_ptr.hbm [resolvable:$true] %s6989
      %6992 = dma.vmem_to_hbm [thread:$0]  %s6988, 128, %s6990, [#allocation4]
    $region93: #{net_f1_forward.1} parent=1 // pred_fallthru
      _
    // Predicated region
    $region94: #{net_f1_forward.1} parent=1 // pred_check
      _
    $region95: #{net_f1_forward.1} parent=1 // pred_check_branch
      %6994 = sbr.rel (0) target = $region97
    $region96: #{net_f1_forward.1} parent=1 // pred_region
      %6996 = dma.done [#allocation4], 128
    $region97: #{net_f1_forward.1} parent=1 // pred_fallthru
      _
    %6997 = vsyncpa [#allocation3], 1
    %6998 = vsyncpa [#allocation6], 1
    %6999 = vsyncpa [#allocation9], 1
    %7000 = vsyncpa [#allocation4], 1

</llo_original>
